<compile_context>
chip_gen: v7x
topology: tpu7x:2x2x1
jax: 0.10.0
libtpu: 0.0.40
codegen_flags: <defaults>
</compile_context>

<pallas_src>
import math
import numpy as np
import jax
import jax.numpy as jnp
from jax.experimental import pallas as pl
from jax.experimental.pallas import tpu as pltpu

_LANE = 128


# ----------------------------------------------------------------------------
# Positional encoding (faithful port of PositionalEncoding2d) -- pure glue.
# ----------------------------------------------------------------------------
def positional_encoding_2d(d_model, height, width):
    if d_model % 4 != 0:
        raise ValueError("d_model must be divisible by 4")
    height, width = int(height), int(width)
    pe = np.zeros((d_model, height, width), dtype=np.float32)
    dm2 = d_model // 2
    div_term = np.exp(np.arange(0.0, dm2, 2) * -(math.log(10000.0) / dm2))
    pos_w = np.arange(0.0, width)[:, None]
    pos_h = np.arange(0.0, height)[:, None]
    pe[0:dm2:2, :, :] = np.sin(pos_w * div_term).T[:, None, :]
    pe[1:dm2:2, :, :] = np.cos(pos_w * div_term).T[:, None, :]
    pe[dm2::2, :, :] = np.sin(pos_h * div_term).T[:, :, None]
    pe[dm2 + 1::2, :, :] = np.cos(pos_h * div_term).T[:, :, None]
    return pe.reshape(1, d_model, height, width)


# ----------------------------------------------------------------------------
# Fused axial attention: one image per grid step, both passes in VMEM.
#   x        : (B, C, H, W)  f32  (NCHW, matching the PyTorch module)
#   pe_flat  : (2, H*W, C)   positional encoding per pass (flattened tokens)
#   w_pad    : (2, C, 3*128) merged QKV weight per pass; q at lanes 0..C-1,
#                            k at 128..128+C-1, v at 256..256+C-1, zeros else.
# ----------------------------------------------------------------------------
def local_utrans_axial_attention(x, pe_flat, w_pad):
    B, C, H, W = x.shape
    HW = H * W
    assert C % 8 == 0 and C <= _LANE, "QKV lane-slot packing assumes C <= 128"
    assert HW % _LANE == 0, "token dim sized for lane-dense (unmasked) I/O"
    assert (H & (H - 1)) == 0 and (W & (W - 1)) == 0, \
        "bit-op axial masks need power-of-two H, W"
    scale = 1.0 / math.sqrt(C)          # scaled_dot_product's 1/sqrt(d_k)

    def kernel(x_ref, pe_ref, w_ref, out_ref):
        xi = x_ref[0]                   # (C, HW)  lane-dense load
        tok = xi.T                      # (HW, C)  in-kernel 2D transpose (XLU)

        # Token-pair masks encoding the axial structure (token t = h*W + w).
        ti = jax.lax.broadcasted_iota(jnp.int32, (HW, HW), 0)
        tj = jax.lax.broadcasted_iota(jnp.int32, (HW, HW), 1)
        d = ti ^ tj
        same_w = (d & (W - 1)) == 0     # pass 1: same column -> attend along H
        same_h = (d & ~(W - 1)) == 0    # pass 2: same row    -> attend along W

        def axial_pass(t, p, mask):
            y = t + pe_ref[p]                                               # (HW, C)
            # Merged QKV projection: single MXU matmul, lane-slot padded RHS.
            qkv = jnp.dot(y, w_ref[p], preferred_element_type=jnp.float32)  # (HW, 384)
            q = qkv[:, 0:_LANE]               # zero-padded beyond C, so the
            k = qkv[:, _LANE:2 * _LANE]       # 128-deep contraction == C-deep
            v = qkv[:, 2 * _LANE:2 * _LANE + C]
            # Full (HW, HW) energy; the mask restores the axial grouping exactly.
            e = jax.lax.dot_general(q, k, (((1,), (1,)), ((), ())),
                                    preferred_element_type=jnp.float32) * scale
            e = jnp.where(mask, e, -1e30)
            e = e - jnp.max(e, axis=-1, keepdims=True)
            ex = jnp.exp(e)                                                 # masked -> exactly 0
            denom = jnp.sum(ex, axis=-1, keepdims=True)
            r = pl.reciprocal(denom, approx=True)                           # EUP vrcp
            r = r * (2.0 - denom * r)                                       # 1 Newton step -> f32 accurate
            att = ex * r
            return jnp.dot(att, v, preferred_element_type=jnp.float32)      # (HW, C)

        t1 = axial_pass(tok, 0, same_w)       # attend along H
        t2 = axial_pass(t1, 1, same_h)        # attend along W (VMEM-resident input)
        out_ref[0] = t2.T.astype(out_ref.dtype)   # (C, HW) lane-dense store

    flops = B * 2 * (2 * HW * C * 3 * _LANE        # merged QKV projection
                     + 2 * HW * HW * _LANE         # masked energy (padded depth)
                     + 2 * HW * HW * C)            # att @ v
    transcendentals = B * 2 * HW * HW
    bytes_accessed = 4 * (2 * B * C * HW + 2 * HW * C + 2 * C * 3 * _LANE)

    x_flat = x.reshape(B, C, HW)                   # free row-major reshape
    out = pl.pallas_call(
        kernel,
        out_shape=jax.ShapeDtypeStruct((B, C, HW), jnp.float32),
        grid=(B,),
        in_specs=[
            pl.BlockSpec((1, C, HW), lambda b: (b, 0, 0)),
            pl.BlockSpec((2, HW, C), lambda b: (0, 0, 0)),
            pl.BlockSpec((2, C, 3 * _LANE), lambda b: (0, 0, 0)),
        ],
        out_specs=pl.BlockSpec((1, C, HW), lambda b: (b, 0, 0)),
        compiler_params=pltpu.CompilerParams(
            dimension_semantics=("parallel",),
            vmem_limit_bytes=32 * 1024 * 1024,
        ),
        cost_estimate=pl.CostEstimate(flops=flops,
                                      transcendentals=transcendentals,
                                      bytes_accessed=bytes_accessed),
    )(x_flat, pe_flat, w_pad)
    return out.reshape(B, C, H, W)                 # free reshape back to NCHW


# ----------------------------------------------------------------------------
# Pure-JAX axial reference (correctness checking only).
# ----------------------------------------------------------------------------
def _ref_axial(x_seq, pe, wq, wk, wv):
    y = x_seq + pe[None]
    q = jnp.einsum("nlc,dc->nld", y, wq)
    k = jnp.einsum("nlc,dc->nld", y, wk)
    v = jnp.einsum("nlc,dc->nld", y, wv)
    e = jnp.einsum("nic,njc->nij", q, k) / math.sqrt(y.shape[-1])
    att = jax.nn.softmax(e, axis=-1)
    return jnp.einsum("nij,njc->nic", att, v)


def _ref_forward(x, raw):
    B, C, H, W = x.shape
    x1 = jnp.transpose(x, (0, 3, 2, 1)).reshape(B * W, H, C)
    o1 = _ref_axial(x1, raw["pe_h"], raw["wq1"], raw["wk1"], raw["wv1"])
    x2 = jnp.transpose(o1.reshape(B, W, H, C), (0, 2, 1, 3)).reshape(B * H, W, C)
    o2 = _ref_axial(x2, raw["pe_w"], raw["wq2"], raw["wk2"], raw["wv2"])
    return jnp.transpose(o2.reshape(B, H, W, C), (0, 3, 1, 2))


# ----------------------------------------------------------------------------
# Deterministic parameter construction (matches module __init__ shapes).
# ----------------------------------------------------------------------------
def make_params(in_dim, h, w, seed=0):
    key = jax.random.PRNGKey(seed)
    keys = jax.random.split(key, 6)
    bound = 1.0 / math.sqrt(in_dim)    # nn.Conv2d default init scale

    def conv_w(k):
        # nn.Conv2d(in_dim, in_dim, 1, bias=False): (C_out, C_in)
        return jax.random.uniform(k, (in_dim, in_dim), jnp.float32, -bound, bound)

    wq1, wk1, wv1, wq2, wk2, wv2 = (conv_w(k) for k in keys)

    pe_h = jnp.asarray(positional_encoding_2d(in_dim, h, 1)[0, :, :, 0].T)   # (H, C)
    pe_w = jnp.asarray(positional_encoding_2d(in_dim, 1, w)[0, :, 0, :].T)   # (W, C)

    hw = h * w
    # Flattened-token positional encodings (token t = h*W + w).
    pe1 = jnp.broadcast_to(pe_h[:, None, :], (h, w, in_dim)).reshape(hw, in_dim)
    pe2 = jnp.broadcast_to(pe_w[None, :, :], (h, w, in_dim)).reshape(hw, in_dim)
    pe_flat = jnp.stack([pe1, pe2], axis=0)                                  # (2, HW, C)

    def pad_qkv(wq, wk, wv):
        wp = np.zeros((in_dim, 3 * _LANE), np.float32)
        wp[:, 0:in_dim] = np.asarray(wq).T
        wp[:, _LANE:_LANE + in_dim] = np.asarray(wk).T
        wp[:, 2 * _LANE:2 * _LANE + in_dim] = np.asarray(wv).T
        return wp

    w_pad = jnp.asarray(np.stack([pad_qkv(wq1, wk1, wv1),
                                  pad_qkv(wq2, wk2, wv2)], axis=0))          # (2, C, 384)

    raw = dict(pe_h=pe_h, pe_w=pe_w,
               wq1=wq1, wk1=wk1, wv1=wv1, wq2=wq2, wk2=wk2, wv2=wv2)
    return dict(pe_flat=pe_flat, w_pad=w_pad, raw=raw)


if __name__ == "__main__":
    # 16x16 patch at C=16 channels (d_model divisible by 4, as the module requires).
    B, C, H, W = 2, 16, 16, 16
    x = jax.random.normal(jax.random.PRNGKey(0), (B, C, H, W), jnp.float32)

    params = make_params(C, H, W, seed=0)

    fwd = jax.jit(local_utrans_axial_attention)
    out = fwd(x, params["pe_flat"], params["w_pad"])
    out = jax.block_until_ready(out)

    out_ref = _ref_forward(x, params["raw"])
    np.testing.assert_allclose(np.asarray(out), np.asarray(out_ref),
                               rtol=2e-5, atol=2e-5)
    assert out.shape == (B, C, H, W)

    print("KERNEL_OK")
</pallas_src>

<mosaic_0001>
module attributes {stable_mosaic.version = 11 : i64} {
  func.func @kernel(%arg0: i32, %arg1: memref<1x16x256xf32, #tpu.memory_space<vmem>>, %arg2: memref<2x256x16xf32, #tpu.memory_space<vmem>>, %arg3: memref<2x16x384xf32, #tpu.memory_space<vmem>>, %arg4: memref<1x16x256xf32, #tpu.memory_space<vmem>>) attributes {dimension_semantics = [#tpu.dimension_semantics<parallel>], iteration_bounds = array<i64: 2>, scalar_prefetch = 0 : i64, scratch_operands = 0 : i64, tpu.core_type = #tpu.core_type<tc>, window_params = [{transform_indices = @transform_0, window_bounds = array<i64: 1, 16, 256>}, {pipeline_mode = #tpu.pipeline_mode<synchronous>, transform_indices = @transform_1, window_bounds = array<i64: 2, 256, 16>}, {pipeline_mode = #tpu.pipeline_mode<synchronous>, transform_indices = @transform_2, window_bounds = array<i64: 2, 16, 384>}, {transform_indices = @transform_3, window_bounds = array<i64: 1, 16, 256>}]} {
    %c0 = arith.constant 0 : index
    %c0_0 = arith.constant 0 : index
    %c0_1 = arith.constant 0 : index
    %0 = vector.load %arg1[%c0, %c0_0, %c0_1] : memref<1x16x256xf32, #tpu.memory_space<vmem>>, vector<1x16x256xf32>
    %1 = vector.shape_cast %0 : vector<1x16x256xf32> to vector<16x256xf32>
    %2 = tpu.transpose %1, [1, 0] : vector<16x256xf32> -> vector<256x16xf32>
    %3 = tpu.iota {dimensions = array<i32: 0>} : vector<256x256xi32>
    %4 = tpu.iota {dimensions = array<i32: 1>} : vector<256x256xi32>
    %5 = arith.xori %3, %4 : vector<256x256xi32>
    %c15_i32 = arith.constant 15 : i32
    %6 = vector.broadcast %c15_i32 : i32 to vector<256x256xi32>
    %7 = arith.andi %5, %6 : vector<256x256xi32>
    %c0_i32 = arith.constant 0 : i32
    %8 = vector.broadcast %c0_i32 : i32 to vector<256x256xi32>
    %9 = arith.cmpi eq, %7, %8 : vector<256x256xi32>
    %c-16_i32 = arith.constant -16 : i32
    %10 = vector.broadcast %c-16_i32 : i32 to vector<256x256xi32>
    %11 = arith.andi %5, %10 : vector<256x256xi32>
    %c0_i32_2 = arith.constant 0 : i32
    %12 = vector.broadcast %c0_i32_2 : i32 to vector<256x256xi32>
    %13 = arith.cmpi eq, %11, %12 : vector<256x256xi32>
    %c0_3 = arith.constant 0 : index
    %c0_4 = arith.constant 0 : index
    %c0_5 = arith.constant 0 : index
    %14 = vector.load %arg2[%c0_3, %c0_4, %c0_5] : memref<2x256x16xf32, #tpu.memory_space<vmem>>, vector<1x256x16xf32>
    %15 = vector.shape_cast %14 : vector<1x256x16xf32> to vector<256x16xf32>
    %16 = arith.addf %2, %15 : vector<256x16xf32>
    %c0_6 = arith.constant 0 : index
    %c0_7 = arith.constant 0 : index
    %c0_8 = arith.constant 0 : index
    %17 = vector.load %arg3[%c0_6, %c0_7, %c0_8] : memref<2x16x384xf32, #tpu.memory_space<vmem>>, vector<1x16x384xf32>
    %18 = vector.shape_cast %17 : vector<1x16x384xf32> to vector<16x384xf32>
    %cst = arith.constant dense<0.000000e+00> : vector<256x384xf32>
    %19 = tpu.matmul %16, %18, %cst {dimension_numbers = #tpu.dot_dimension_numbers<[1], [0], [0], [1], [0, 0, 1, 1], [], []>} : vector<256x16xf32>, vector<16x384xf32>, vector<256x384xf32> -> vector<256x384xf32>
    %20 = vector.extract_strided_slice %19 {offsets = [0, 0], sizes = [256, 128], strides = [1, 1]} : vector<256x384xf32> to vector<256x128xf32>
    %21 = vector.extract_strided_slice %19 {offsets = [0, 128], sizes = [256, 128], strides = [1, 1]} : vector<256x384xf32> to vector<256x128xf32>
    %22 = vector.extract_strided_slice %19 {offsets = [0, 256], sizes = [256, 16], strides = [1, 1]} : vector<256x384xf32> to vector<256x16xf32>
    %cst_9 = arith.constant dense<0.000000e+00> : vector<256x256xf32>
    %23 = tpu.matmul %20, %21, %cst_9 {dimension_numbers = #tpu.dot_dimension_numbers<[1], [1], [0], [0], [0, 0, 1, 0], [], []>} : vector<256x128xf32>, vector<256x128xf32>, vector<256x256xf32> -> vector<256x256xf32>
    %cst_10 = arith.constant 2.500000e-01 : f32
    %24 = vector.broadcast %cst_10 : f32 to vector<256x256xf32>
    %25 = arith.mulf %23, %24 : vector<256x256xf32>
    %cst_11 = arith.constant -1.000000e+30 : f32
    %26 = vector.broadcast %cst_11 : f32 to vector<256x256xf32>
    %27 = arith.select %9, %25, %26 : vector<256x256xi1>, vector<256x256xf32>
    %cst_12 = arith.constant dense<0xFF800000> : vector<256xf32>
    %28 = vector.multi_reduction <maximumf>, %27, %cst_12 [1] : vector<256x256xf32> to vector<256xf32>
    %29 = vector.shape_cast %28 : vector<256xf32> to vector<256x1xf32>
    %30 = vector.broadcast %29 : vector<256x1xf32> to vector<256x256xf32>
    %31 = arith.subf %27, %30 : vector<256x256xf32>
    %32 = math.exp %31 : vector<256x256xf32>
    %cst_13 = arith.constant dense<0.000000e+00> : vector<256xf32>
    %33 = vector.multi_reduction <add>, %32, %cst_13 [1] : vector<256x256xf32> to vector<256xf32>
    %34 = vector.shape_cast %33 : vector<256xf32> to vector<256x1xf32>
    %35 = tpu.reciprocal %34 {approx = true} : vector<256x1xf32> -> vector<256x1xf32>
    %36 = arith.mulf %34, %35 : vector<256x1xf32>
    %cst_14 = arith.constant 2.000000e+00 : f32
    %37 = vector.broadcast %cst_14 : f32 to vector<256x1xf32>
    %38 = arith.subf %37, %36 : vector<256x1xf32>
    %39 = arith.mulf %35, %38 : vector<256x1xf32>
    %40 = vector.broadcast %39 : vector<256x1xf32> to vector<256x256xf32>
    %41 = arith.mulf %32, %40 : vector<256x256xf32>
    %cst_15 = arith.constant dense<0.000000e+00> : vector<256x16xf32>
    %42 = tpu.matmul %41, %22, %cst_15 {dimension_numbers = #tpu.dot_dimension_numbers<[1], [0], [0], [1], [0, 0, 1, 1], [], []>} : vector<256x256xf32>, vector<256x16xf32>, vector<256x16xf32> -> vector<256x16xf32>
    %c1 = arith.constant 1 : index
    %c0_16 = arith.constant 0 : index
    %c0_17 = arith.constant 0 : index
    %43 = vector.load %arg2[%c1, %c0_16, %c0_17] : memref<2x256x16xf32, #tpu.memory_space<vmem>>, vector<1x256x16xf32>
    %44 = vector.shape_cast %43 : vector<1x256x16xf32> to vector<256x16xf32>
    %45 = arith.addf %42, %44 : vector<256x16xf32>
    %c1_18 = arith.constant 1 : index
    %c0_19 = arith.constant 0 : index
    %c0_20 = arith.constant 0 : index
    %46 = vector.load %arg3[%c1_18, %c0_19, %c0_20] : memref<2x16x384xf32, #tpu.memory_space<vmem>>, vector<1x16x384xf32>
    %47 = vector.shape_cast %46 : vector<1x16x384xf32> to vector<16x384xf32>
    %cst_21 = arith.constant dense<0.000000e+00> : vector<256x384xf32>
    %48 = tpu.matmul %45, %47, %cst_21 {dimension_numbers = #tpu.dot_dimension_numbers<[1], [0], [0], [1], [0, 0, 1, 1], [], []>} : vector<256x16xf32>, vector<16x384xf32>, vector<256x384xf32> -> vector<256x384xf32>
    %49 = vector.extract_strided_slice %48 {offsets = [0, 0], sizes = [256, 128], strides = [1, 1]} : vector<256x384xf32> to vector<256x128xf32>
    %50 = vector.extract_strided_slice %48 {offsets = [0, 128], sizes = [256, 128], strides = [1, 1]} : vector<256x384xf32> to vector<256x128xf32>
    %51 = vector.extract_strided_slice %48 {offsets = [0, 256], sizes = [256, 16], strides = [1, 1]} : vector<256x384xf32> to vector<256x16xf32>
    %cst_22 = arith.constant dense<0.000000e+00> : vector<256x256xf32>
    %52 = tpu.matmul %49, %50, %cst_22 {dimension_numbers = #tpu.dot_dimension_numbers<[1], [1], [0], [0], [0, 0, 1, 0], [], []>} : vector<256x128xf32>, vector<256x128xf32>, vector<256x256xf32> -> vector<256x256xf32>
    %cst_23 = arith.constant 2.500000e-01 : f32
    %53 = vector.broadcast %cst_23 : f32 to vector<256x256xf32>
    %54 = arith.mulf %52, %53 : vector<256x256xf32>
    %cst_24 = arith.constant -1.000000e+30 : f32
    %55 = vector.broadcast %cst_24 : f32 to vector<256x256xf32>
    %56 = arith.select %13, %54, %55 : vector<256x256xi1>, vector<256x256xf32>
    %cst_25 = arith.constant dense<0xFF800000> : vector<256xf32>
    %57 = vector.multi_reduction <maximumf>, %56, %cst_25 [1] : vector<256x256xf32> to vector<256xf32>
    %58 = vector.shape_cast %57 : vector<256xf32> to vector<256x1xf32>
    %59 = vector.broadcast %58 : vector<256x1xf32> to vector<256x256xf32>
    %60 = arith.subf %56, %59 : vector<256x256xf32>
    %61 = math.exp %60 : vector<256x256xf32>
    %cst_26 = arith.constant dense<0.000000e+00> : vector<256xf32>
    %62 = vector.multi_reduction <add>, %61, %cst_26 [1] : vector<256x256xf32> to vector<256xf32>
    %63 = vector.shape_cast %62 : vector<256xf32> to vector<256x1xf32>
    %64 = tpu.reciprocal %63 {approx = true} : vector<256x1xf32> -> vector<256x1xf32>
    %65 = arith.mulf %63, %64 : vector<256x1xf32>
    %cst_27 = arith.constant 2.000000e+00 : f32
    %66 = vector.broadcast %cst_27 : f32 to vector<256x1xf32>
    %67 = arith.subf %66, %65 : vector<256x1xf32>
    %68 = arith.mulf %64, %67 : vector<256x1xf32>
    %69 = vector.broadcast %68 : vector<256x1xf32> to vector<256x256xf32>
    %70 = arith.mulf %61, %69 : vector<256x256xf32>
    %cst_28 = arith.constant dense<0.000000e+00> : vector<256x16xf32>
    %71 = tpu.matmul %70, %51, %cst_28 {dimension_numbers = #tpu.dot_dimension_numbers<[1], [0], [0], [1], [0, 0, 1, 1], [], []>} : vector<256x256xf32>, vector<256x16xf32>, vector<256x16xf32> -> vector<256x16xf32>
    %72 = tpu.transpose %71, [1, 0] : vector<256x16xf32> -> vector<16x256xf32>
    %c0_29 = arith.constant 0 : index
    %c0_30 = arith.constant 0 : index
    %c0_31 = arith.constant 0 : index
    %73 = vector.load %arg4[%c0_29, %c0_30, %c0_31] : memref<1x16x256xf32, #tpu.memory_space<vmem>>, vector<1x16x256xf32>
    %74 = vector.shape_cast %73 : vector<1x16x256xf32> to vector<16x256xf32>
    %75 = vector.shape_cast %72 : vector<16x256xf32> to vector<1x16x256xf32>
    tpu.vector_store %arg4[%c0_29, %c0_30, %c0_31], %75 {strides = array<i32>} : memref<1x16x256xf32, #tpu.memory_space<vmem>>, vector<1x16x256xf32>,
    return
  }
  func.func @transform_0(%arg0: i32) -> (i32, i32, i32) {
    %c0_i32 = arith.constant 0 : i32
    %c0_i32_0 = arith.constant 0 : i32
    %c0_i32_1 = arith.constant 0 : i32
    return %arg0, %c0_i32, %c0_i32_0 : i32, i32, i32
  }
  func.func @transform_1(%arg0: i32) -> (i32, i32, i32) {
    %c0_i32 = arith.constant 0 : i32
    %c0_i32_0 = arith.constant 0 : i32
    %c0_i32_1 = arith.constant 0 : i32
    %c0_i32_2 = arith.constant 0 : i32
    return %c0_i32, %c0_i32_0, %c0_i32_1 : i32, i32, i32
  }
  func.func @transform_2(%arg0: i32) -> (i32, i32, i32) {
    %c0_i32 = arith.constant 0 : i32
    %c0_i32_0 = arith.constant 0 : i32
    %c0_i32_1 = arith.constant 0 : i32
    %c0_i32_2 = arith.constant 0 : i32
    return %c0_i32, %c0_i32_0, %c0_i32_1 : i32, i32, i32
  }
  func.func @transform_3(%arg0: i32) -> (i32, i32, i32) {
    %c0_i32 = arith.constant 0 : i32
    %c0_i32_0 = arith.constant 0 : i32
    %c0_i32_1 = arith.constant 0 : i32
    return %arg0, %c0_i32, %c0_i32_0 : i32, i32, i32
  }
}

</mosaic_0001>

<llo_original>
// kernel: local_utrans_axial_attention.1
$region0: #{local_utrans_axial_attention.1}
  #allocation0 [shape = 'u32[]', space=smem, size = 0x4, offset = 0x4, fixed_abs, tag = 'smem constant byte address 0x4 - core index']
  #allocation1 [shape = 'u32[144,128]{1,0:T(1,128)}', space=vmem, size = 0x12000, scoped, tag = 'internal scratch']
  %s0 = inlined_call_operand.vmem [shape: f32[2,16,256], index: 0, kind: input, shape index: {}]
  %s1 = inlined_call_operand.vmem [shape: f32[2,256,16], index: 1, kind: input, shape index: {}]
  %s2 = inlined_call_operand.vmem [shape: f32[2,16,384], index: 2, kind: input, shape index: {}]
  %s3 = inlined_call_operand.vmem [shape: f32[2,16,256], index: 3, kind: output, shape index: {}]
  %s4 = sld [smem:[#allocation0]]
  $region45: #{local_utrans_axial_attention.1} parent=0
    _
  %s6 = ssub.s32 1, %s4
  %s7 = scalar_select 0, %s6, %s4
  loop: start=0, step=1, limit=4
  $region2: #{local_utrans_axial_attention.1} parent=0 // loop_pre_header
    _
  $region3: #{local_utrans_axial_attention.1} parent=0 // loop_header
    %s9 = sphi 0, %s13
    %p10 = scmp.ge.s32.totalorder %s9, 4
    %s19 = sphi 0, %s21
    %s22 = sphi 0, %s19
    %s23 = sphi 0, %s22
    %s39 = sphi 0, %s23
    %s43 = sphi 0, %s43
    %s45 = sphi 0, %s43
    %s46 = sphi 0, %s45
    %s60 = sphi 0, %s46
    %s64 = sphi 0, %s64
    %s66 = sphi 0, %s64
    %s67 = sphi 0, %s66
    %s81 = sphi 0, %s67
    %s87 = sphi 0, %s89
    %s90 = sphi 0, %s87
    %s91 = sphi 0, %s90
    %s107 = sphi 0, %s91
  $region4: #{local_utrans_axial_attention.1} parent=0 // loop_header_branch
    %12 = sbr.rel (%p10) target = $region8
  $region5: #{local_utrans_axial_attention.1} parent=0 // loop_body
    %s14 = ssub.s32 %s9, 1
    %s15 = ssub.s32 %s9, 2
    %s16 = sadd.s32 %s9, 1
    %s17 = ssub.s32 %s9, %s16
    %p18 = scmp.eq.s32.totalorder %s17, 0
    %s20 = sadd.s32 %s19, 1
    %s21 = scalar_select %p18, %s19, %s20
    %p24 = pneg %p18
    %p25 = scmp.eq.s32.totalorder %s9, 1
    %p26 = por %p24, %p25
    %p27 = scmp.ne.s32.totalorder %s19, %s22
    %p28 = scmp.eq.s32.totalorder %s9, 0
    %p29 = por %p27, %p28
    %p30 = scmp.ne.s32.totalorder %s19, %s22
    %p31 = scmp.eq.s32.totalorder %s14, 1
    %p32 = por %p30, %p31
    %p33 = scmp.ne.s32.totalorder %s22, %s23
    %p34 = scmp.eq.s32.totalorder %s14, 0
    %p35 = por %p33, %p34
    %p36 = scmp.ne.s32.totalorder %s22, %s23
    %p37 = scmp.eq.s32.totalorder %s15, 1
    %p38 = por %p36, %p37
    %p40 = scmp.ne.s32.totalorder %s23, %s39
    %p41 = scmp.eq.s32.totalorder %s15, 0
    %p42 = por %p40, %p41
    %s44 = sadd.s32 %s43, 1
    %p47 = scmp.eq.s32.totalorder %s9, 1
    %p48 = scmp.ne.s32.totalorder %s43, %s45
    %p49 = scmp.eq.s32.totalorder %s9, 0
    %p50 = por %p48, %p49
    %p51 = scmp.ne.s32.totalorder %s43, %s45
    %p52 = scmp.eq.s32.totalorder %s14, 1
    %p53 = por %p51, %p52
    %p54 = scmp.ne.s32.totalorder %s45, %s46
    %p55 = scmp.eq.s32.totalorder %s14, 0
    %p56 = por %p54, %p55
    %p57 = scmp.ne.s32.totalorder %s45, %s46
    %p58 = scmp.eq.s32.totalorder %s15, 1
    %p59 = por %p57, %p58
    %p61 = scmp.ne.s32.totalorder %s46, %s60
    %p62 = scmp.eq.s32.totalorder %s15, 0
    %p63 = por %p61, %p62
    %s65 = sadd.s32 %s64, 1
    %p68 = scmp.eq.s32.totalorder %s9, 1
    %p69 = scmp.ne.s32.totalorder %s64, %s66
    %p70 = scmp.eq.s32.totalorder %s9, 0
    %p71 = por %p69, %p70
    %p72 = scmp.ne.s32.totalorder %s64, %s66
    %p73 = scmp.eq.s32.totalorder %s14, 1
    %p74 = por %p72, %p73
    %p75 = scmp.ne.s32.totalorder %s66, %s67
    %p76 = scmp.eq.s32.totalorder %s14, 0
    %p77 = por %p75, %p76
    %p78 = scmp.ne.s32.totalorder %s66, %s67
    %p79 = scmp.eq.s32.totalorder %s15, 1
    %p80 = por %p78, %p79
    %p82 = scmp.ne.s32.totalorder %s67, %s81
    %p83 = scmp.eq.s32.totalorder %s15, 0
    %p84 = por %p82, %p83
    %s85 = ssub.s32 %s9, %s16
    %p86 = scmp.eq.s32.totalorder %s85, 0
    %s88 = sadd.s32 %s87, 1
    %s89 = scalar_select %p86, %s87, %s88
    %p92 = pneg %p86
    %p93 = scmp.eq.s32.totalorder %s9, 1
    %p94 = por %p92, %p93
    %p95 = scmp.ne.s32.totalorder %s87, %s90
    %p96 = scmp.eq.s32.totalorder %s9, 0
    %p97 = por %p95, %p96
    %p98 = scmp.ne.s32.totalorder %s87, %s90
    %p99 = scmp.eq.s32.totalorder %s14, 1
    %p100 = por %p98, %p99
    %p101 = scmp.ne.s32.totalorder %s90, %s91
    %p102 = scmp.eq.s32.totalorder %s14, 0
    %p103 = por %p101, %p102
    %p104 = scmp.ne.s32.totalorder %s90, %s91
    %p105 = scmp.eq.s32.totalorder %s15, 1
    %p106 = por %p104, %p105
    %p108 = scmp.ne.s32.totalorder %s91, %s107
    %p109 = scmp.eq.s32.totalorder %s15, 0
    %p110 = por %p108, %p109
    %p111 = scmp.le.s32.totalorder 1, %s9
    %p112 = scmp.lt.s32.totalorder %s9, 3
    %p113 = pnand %p111, %p112
    %p114 = pneg %p113
    // Predicated region
    $region9: #{local_utrans_axial_attention.1} parent=5 // pred_check
      _
    $region10: #{local_utrans_axial_attention.1} parent=5 // pred_check_branch
      %116 = sbr.rel (%p113) target = $region12
    $region11: #{local_utrans_axial_attention.1} parent=5 // pred_region
      %s117 = ssub.s32 %s9, 1
      // Predicated region
      $region13: #{local_utrans_axial_attention.1} parent=11 // pred_check
        %p118 = pneg %p56
      $region14: #{local_utrans_axial_attention.1} parent=11 // pred_check_branch
        %120 = sbr.rel (%p118) target = $region16
      $region15: #{local_utrans_axial_attention.1} parent=11 // pred_region
        _
      $region16: #{local_utrans_axial_attention.1} parent=11 // pred_fallthru
        _
      // Predicated region
      $region17: #{local_utrans_axial_attention.1} parent=11 // pred_check
        %p121 = pneg %p77
      $region18: #{local_utrans_axial_attention.1} parent=11 // pred_check_branch
        %123 = sbr.rel (%p121) target = $region20
      $region19: #{local_utrans_axial_attention.1} parent=11 // pred_region
        _
      $region20: #{local_utrans_axial_attention.1} parent=11 // pred_fallthru
        _
    $region12: #{local_utrans_axial_attention.1} parent=5 // pred_fallthru
      _
    %p124 = scmp.lt.s32.totalorder %s9, 2
    // Predicated region
    $region21: #{local_utrans_axial_attention.1} parent=5 // pred_check
      %p125 = pneg %p124
    $region22: #{local_utrans_axial_attention.1} parent=5 // pred_check_branch
      %127 = sbr.rel (%p125) target = $region24
    $region23: #{local_utrans_axial_attention.1} parent=5 // pred_region
      // Predicated region
      $region25: #{local_utrans_axial_attention.1} parent=23 // pred_check
        %p128 = pneg %p29
      $region26: #{local_utrans_axial_attention.1} parent=23 // pred_check_branch
        %130 = sbr.rel (%p128) target = $region28
      $region27: #{local_utrans_axial_attention.1} parent=23 // pred_region
        %p131 = scmp.lt.s32.totalorder %s9, 1
        %s132 = scalar_select %p131, %s9, 1
        %s133 = smul.addr %s132, 4
        %s134 = smul.addr %s133, 8
        %s135 = scalar_lea.vmem %s0, %s134
      $region28: #{local_utrans_axial_attention.1} parent=23 // pred_fallthru
        _
    $region24: #{local_utrans_axial_attention.1} parent=5 // pred_fallthru
      _
    %p136 = scmp.le.s32.totalorder 1, %s9
    %p137 = scmp.lt.s32.totalorder %s9, 3
    %p138 = pnand %p136, %p137
    %p139 = pneg %p138
    // Predicated region
    $region29: #{local_utrans_axial_attention.1} parent=5 // pred_check
      _
    $region30: #{local_utrans_axial_attention.1} parent=5 // pred_check_branch
      %141 = sbr.rel (%p138) target = $region32
    $region31: #{local_utrans_axial_attention.1} parent=5 // pred_region
      %s142 = ssub.s32 %s9, 1
      %p143 = scmp.lt.s32.totalorder %s14, 1
      %s144 = scalar_select %p143, %s14, 1
      %s145 = smul.addr %s144, 4
      %s146 = smul.addr %s145, 8
      %s147 = scalar_lea.vmem %s0, %s146
      %p148 = pneg %p35
      %p149 = pneg %p32
      %p150 = pneg %p56
      %p151 = pneg %p53
      %p152 = pneg %p77
      %p153 = pneg %p74
      %p154 = pneg %p103
      %p155 = pneg %p100
      %p156 = scmp.lt.s32.totalorder %s14, 1
      %s157 = scalar_select %p156, %s14, 1
      %s158 = smul.addr %s157, 4
      %s159 = smul.addr %s158, 8
      %s160 = scalar_lea.vmem %s3, %s159
      %p161 = scmp.lt.s32.totalorder %s14, 1
      %s162 = scalar_select %p161, %s14, 1
      %s163 = smul.addr %s162, 4
      %s164 = smul.addr %s163, 8
      %s165 = scalar_lea.vmem %s0, %s164
      %p166 = scmp.lt.s32.totalorder %s14, 1
      %s167 = scalar_select %p166, %s14, 1
      %s168 = smul.addr %s167, 4
      %s169 = smul.addr %s168, 8
      %s170 = scalar_lea.vmem %s3, %s169
      %v171 = vld [vmem:[%s165] sm:$0xff]
      %v172 = vld [vmem:[%s165 + $0x8] sm:$0xff]
      %v173 = vld [vmem:[%s165 + $0x10] sm:$0xff]
      %v174 = vld [vmem:[%s165 + $0x18] sm:$0xff]
      %175 = vxpose.xlu0.b32.start [1/16] %v171, 128
      %176 = vxpose.xlu0.b32.cont [2/16] %v173, 128
      %177 = vxpose.xlu0.b32.cont [3/16] 0.0, 128
      %178 = vxpose.xlu0.b32.cont [4/16] 0.0, 128
      %179 = vxpose.xlu0.b32.cont [5/16] 0.0, 128
      %180 = vxpose.xlu0.b32.cont [6/16] 0.0, 128
      %181 = vxpose.xlu0.b32.cont [7/16] 0.0, 128
      %182 = vxpose.xlu0.b32.cont [8/16] 0.0, 128
      %183 = vxpose.xlu0.b32.cont [9/16] 0.0, 128
      %184 = vxpose.xlu0.b32.cont [10/16] 0.0, 128
      %185 = vxpose.xlu0.b32.cont [11/16] 0.0, 128
      %186 = vxpose.xlu0.b32.cont [12/16] 0.0, 128
      %187 = vxpose.xlu0.b32.cont [13/16] 0.0, 128
      %188 = vxpose.xlu0.b32.cont [14/16] 0.0, 128
      %189 = vxpose.xlu0.b32.cont [15/16] 0.0, 128
      %190 = vxpose.xlu0.b32.end [16/16] 0.0, 128
      %v191 = vpop.trf.xlu0
      %v192 = vpop.trf.xlu0
      %v193 = vpop.trf.xlu0
      %v194 = vpop.trf.xlu0
      %v195 = vpop.trf.xlu0
      %v196 = vpop.trf.xlu0
      %v197 = vpop.trf.xlu0
      %v198 = vpop.trf.xlu0
      %v199 = vpop.trf.xlu0
      %v200 = vpop.trf.xlu0
      %v201 = vpop.trf.xlu0
      %v202 = vpop.trf.xlu0
      %v203 = vpop.trf.xlu0
      %v204 = vpop.trf.xlu0
      %v205 = vpop.trf.xlu0
      %v206 = vpop.trf.xlu0
      %207 = vxpose.xlu0.b32.start [1/16] %v172, 128
      %208 = vxpose.xlu0.b32.cont [2/16] %v174, 128
      %209 = vxpose.xlu0.b32.cont [3/16] 0.0, 128
      %210 = vxpose.xlu0.b32.cont [4/16] 0.0, 128
      %211 = vxpose.xlu0.b32.cont [5/16] 0.0, 128
      %212 = vxpose.xlu0.b32.cont [6/16] 0.0, 128
      %213 = vxpose.xlu0.b32.cont [7/16] 0.0, 128
      %214 = vxpose.xlu0.b32.cont [8/16] 0.0, 128
      %215 = vxpose.xlu0.b32.cont [9/16] 0.0, 128
      %216 = vxpose.xlu0.b32.cont [10/16] 0.0, 128
      %217 = vxpose.xlu0.b32.cont [11/16] 0.0, 128
      %218 = vxpose.xlu0.b32.cont [12/16] 0.0, 128
      %219 = vxpose.xlu0.b32.cont [13/16] 0.0, 128
      %220 = vxpose.xlu0.b32.cont [14/16] 0.0, 128
      %221 = vxpose.xlu0.b32.cont [15/16] 0.0, 128
      %222 = vxpose.xlu0.b32.end [16/16] 0.0, 128
      %v223 = vpop.trf.xlu0
      %v224 = vpop.trf.xlu0
      %v225 = vpop.trf.xlu0
      %v226 = vpop.trf.xlu0
      %v227 = vpop.trf.xlu0
      %v228 = vpop.trf.xlu0
      %v229 = vpop.trf.xlu0
      %v230 = vpop.trf.xlu0
      %v231 = vpop.trf.xlu0
      %v232 = vpop.trf.xlu0
      %v233 = vpop.trf.xlu0
      %v234 = vpop.trf.xlu0
      %v235 = vpop.trf.xlu0
      %v236 = vpop.trf.xlu0
      %v237 = vpop.trf.xlu0
      %v238 = vpop.trf.xlu0
      %v239 = vlaneseq
      %v240 = vshrl.u32 %v239, 7
      %v241 = vadd.s32 %v240, 8
      %v242 = vadd.s32 %v240, 16
      %v243 = vadd.s32 %v240, 24
      %v244 = vadd.s32 %v240, 32
      %v245 = vadd.s32 %v240, 40
      %v246 = vadd.s32 %v240, 48
      %v247 = vadd.s32 %v240, 56
      %v248 = vadd.s32 %v240, 64
      %v249 = vadd.s32 %v240, 72
      %v250 = vadd.s32 %v240, 80
      %v251 = vadd.s32 %v240, 88
      %v252 = vadd.s32 %v240, 96
      %v253 = vadd.s32 %v240, 104
      %v254 = vadd.s32 %v240, 112
      %v255 = vadd.s32 %v240, 120
      %v256 = vadd.s32 %v240, 128
      %v257 = vadd.s32 %v240, 136
      %v258 = vadd.s32 %v240, 144
      %v259 = vadd.s32 %v240, 152
      %v260 = vadd.s32 %v240, 160
      %v261 = vadd.s32 %v240, 168
      %v262 = vadd.s32 %v240, 176
      %v263 = vadd.s32 %v240, 184
      %v264 = vadd.s32 %v240, 192
      %v265 = vadd.s32 %v240, 200
      %v266 = vadd.s32 %v240, 208
      %v267 = vadd.s32 %v240, 216
      %v268 = vadd.s32 %v240, 224
      %v269 = vadd.s32 %v240, 232
      %v270 = vadd.s32 %v240, 240
      %v271 = vadd.s32 %v240, 248
      %v272 = vlaneseq
      %v273 = vand.u32 %v272, 127
      %v274 = vadd.s32 %v273, 128
      %v275 = vxor.u32 %v240, %v273
      %v276 = vxor.u32 %v240, %v274
      %v277 = vxor.u32 %v241, %v273
      %v278 = vxor.u32 %v241, %v274
      %v279 = vxor.u32 %v242, %v273
      %v280 = vxor.u32 %v242, %v274
      %v281 = vxor.u32 %v243, %v273
      %v282 = vxor.u32 %v243, %v274
      %v283 = vxor.u32 %v244, %v273
      %v284 = vxor.u32 %v244, %v274
      %v285 = vxor.u32 %v245, %v273
      %v286 = vxor.u32 %v245, %v274
      %v287 = vxor.u32 %v246, %v273
      %v288 = vxor.u32 %v246, %v274
      %v289 = vxor.u32 %v247, %v273
      %v290 = vxor.u32 %v247, %v274
      %v291 = vxor.u32 %v248, %v273
      %v292 = vxor.u32 %v248, %v274
      %v293 = vxor.u32 %v249, %v273
      %v294 = vxor.u32 %v249, %v274
      %v295 = vxor.u32 %v250, %v273
      %v296 = vxor.u32 %v250, %v274
      %v297 = vxor.u32 %v251, %v273
      %v298 = vxor.u32 %v251, %v274
      %v299 = vxor.u32 %v252, %v273
      %v300 = vxor.u32 %v252, %v274
      %v301 = vxor.u32 %v253, %v273
      %v302 = vxor.u32 %v253, %v274
      %v303 = vxor.u32 %v254, %v273
      %v304 = vxor.u32 %v254, %v274
      %v305 = vxor.u32 %v255, %v273
      %v306 = vxor.u32 %v255, %v274
      %v307 = vxor.u32 %v256, %v273
      %v308 = vxor.u32 %v256, %v274
      %v309 = vxor.u32 %v257, %v273
      %v310 = vxor.u32 %v257, %v274
      %v311 = vxor.u32 %v258, %v273
      %v312 = vxor.u32 %v258, %v274
      %v313 = vxor.u32 %v259, %v273
      %v314 = vxor.u32 %v259, %v274
      %v315 = vxor.u32 %v260, %v273
      %v316 = vxor.u32 %v260, %v274
      %v317 = vxor.u32 %v261, %v273
      %v318 = vxor.u32 %v261, %v274
      %v319 = vxor.u32 %v262, %v273
      %v320 = vxor.u32 %v262, %v274
      %v321 = vxor.u32 %v263, %v273
      %v322 = vxor.u32 %v263, %v274
      %v323 = vxor.u32 %v264, %v273
      %v324 = vxor.u32 %v264, %v274
      %v325 = vxor.u32 %v265, %v273
      %v326 = vxor.u32 %v265, %v274
      %v327 = vxor.u32 %v266, %v273
      %v328 = vxor.u32 %v266, %v274
      %v329 = vxor.u32 %v267, %v273
      %v330 = vxor.u32 %v267, %v274
      %v331 = vxor.u32 %v268, %v273
      %v332 = vxor.u32 %v268, %v274
      %v333 = vxor.u32 %v269, %v273
      %v334 = vxor.u32 %v269, %v274
      %v335 = vxor.u32 %v270, %v273
      %v336 = vxor.u32 %v270, %v274
      %v337 = vxor.u32 %v271, %v273
      %v338 = vxor.u32 %v271, %v274
      %v339 = vand.u32 %v275, 15
      %v340 = vand.u32 %v276, 15
      %v341 = vand.u32 %v277, 15
      %v342 = vand.u32 %v278, 15
      %v343 = vand.u32 %v279, 15
      %v344 = vand.u32 %v280, 15
      %v345 = vand.u32 %v281, 15
      %v346 = vand.u32 %v282, 15
      %v347 = vand.u32 %v283, 15
      %v348 = vand.u32 %v284, 15
      %v349 = vand.u32 %v285, 15
      %v350 = vand.u32 %v286, 15
      %v351 = vand.u32 %v287, 15
      %v352 = vand.u32 %v288, 15
      %v353 = vand.u32 %v289, 15
      %v354 = vand.u32 %v290, 15
      %v355 = vand.u32 %v291, 15
      %v356 = vand.u32 %v292, 15
      %v357 = vand.u32 %v293, 15
      %v358 = vand.u32 %v294, 15
      %v359 = vand.u32 %v295, 15
      %v360 = vand.u32 %v296, 15
      %v361 = vand.u32 %v297, 15
      %v362 = vand.u32 %v298, 15
      %v363 = vand.u32 %v299, 15
      %v364 = vand.u32 %v300, 15
      %v365 = vand.u32 %v301, 15
      %v366 = vand.u32 %v302, 15
      %v367 = vand.u32 %v303, 15
      %v368 = vand.u32 %v304, 15
      %v369 = vand.u32 %v305, 15
      %v370 = vand.u32 %v306, 15
      %v371 = vand.u32 %v307, 15
      %v372 = vand.u32 %v308, 15
      %v373 = vand.u32 %v309, 15
      %v374 = vand.u32 %v310, 15
      %v375 = vand.u32 %v311, 15
      %v376 = vand.u32 %v312, 15
      %v377 = vand.u32 %v313, 15
      %v378 = vand.u32 %v314, 15
      %v379 = vand.u32 %v315, 15
      %v380 = vand.u32 %v316, 15
      %v381 = vand.u32 %v317, 15
      %v382 = vand.u32 %v318, 15
      %v383 = vand.u32 %v319, 15
      %v384 = vand.u32 %v320, 15
      %v385 = vand.u32 %v321, 15
      %v386 = vand.u32 %v322, 15
      %v387 = vand.u32 %v323, 15
      %v388 = vand.u32 %v324, 15
      %v389 = vand.u32 %v325, 15
      %v390 = vand.u32 %v326, 15
      %v391 = vand.u32 %v327, 15
      %v392 = vand.u32 %v328, 15
      %v393 = vand.u32 %v329, 15
      %v394 = vand.u32 %v330, 15
      %v395 = vand.u32 %v331, 15
      %v396 = vand.u32 %v332, 15
      %v397 = vand.u32 %v333, 15
      %v398 = vand.u32 %v334, 15
      %v399 = vand.u32 %v335, 15
      %v400 = vand.u32 %v336, 15
      %v401 = vand.u32 %v337, 15
      %v402 = vand.u32 %v338, 15
      %vm403 = vcmp.eq.s32.totalorder %v339, 0
      %vm404 = vcmp.eq.s32.totalorder %v340, 0
      %vm405 = vcmp.eq.s32.totalorder %v341, 0
      %vm406 = vcmp.eq.s32.totalorder %v342, 0
      %vm407 = vcmp.eq.s32.totalorder %v343, 0
      %vm408 = vcmp.eq.s32.totalorder %v344, 0
      %vm409 = vcmp.eq.s32.totalorder %v345, 0
      %vm410 = vcmp.eq.s32.totalorder %v346, 0
      %vm411 = vcmp.eq.s32.totalorder %v347, 0
      %vm412 = vcmp.eq.s32.totalorder %v348, 0
      %vm413 = vcmp.eq.s32.totalorder %v349, 0
      %vm414 = vcmp.eq.s32.totalorder %v350, 0
      %vm415 = vcmp.eq.s32.totalorder %v351, 0
      %vm416 = vcmp.eq.s32.totalorder %v352, 0
      %vm417 = vcmp.eq.s32.totalorder %v353, 0
      %vm418 = vcmp.eq.s32.totalorder %v354, 0
      %vm419 = vcmp.eq.s32.totalorder %v355, 0
      %vm420 = vcmp.eq.s32.totalorder %v356, 0
      %vm421 = vcmp.eq.s32.totalorder %v357, 0
      %vm422 = vcmp.eq.s32.totalorder %v358, 0
      %vm423 = vcmp.eq.s32.totalorder %v359, 0
      %vm424 = vcmp.eq.s32.totalorder %v360, 0
      %vm425 = vcmp.eq.s32.totalorder %v361, 0
      %vm426 = vcmp.eq.s32.totalorder %v362, 0
      %vm427 = vcmp.eq.s32.totalorder %v363, 0
      %vm428 = vcmp.eq.s32.totalorder %v364, 0
      %vm429 = vcmp.eq.s32.totalorder %v365, 0
      %vm430 = vcmp.eq.s32.totalorder %v366, 0
      %vm431 = vcmp.eq.s32.totalorder %v367, 0
      %vm432 = vcmp.eq.s32.totalorder %v368, 0
      %vm433 = vcmp.eq.s32.totalorder %v369, 0
      %vm434 = vcmp.eq.s32.totalorder %v370, 0
      %vm435 = vcmp.eq.s32.totalorder %v371, 0
      %vm436 = vcmp.eq.s32.totalorder %v372, 0
      %vm437 = vcmp.eq.s32.totalorder %v373, 0
      %vm438 = vcmp.eq.s32.totalorder %v374, 0
      %vm439 = vcmp.eq.s32.totalorder %v375, 0
      %vm440 = vcmp.eq.s32.totalorder %v376, 0
      %vm441 = vcmp.eq.s32.totalorder %v377, 0
      %vm442 = vcmp.eq.s32.totalorder %v378, 0
      %vm443 = vcmp.eq.s32.totalorder %v379, 0
      %vm444 = vcmp.eq.s32.totalorder %v380, 0
      %vm445 = vcmp.eq.s32.totalorder %v381, 0
      %vm446 = vcmp.eq.s32.totalorder %v382, 0
      %vm447 = vcmp.eq.s32.totalorder %v383, 0
      %vm448 = vcmp.eq.s32.totalorder %v384, 0
      %vm449 = vcmp.eq.s32.totalorder %v385, 0
      %vm450 = vcmp.eq.s32.totalorder %v386, 0
      %vm451 = vcmp.eq.s32.totalorder %v387, 0
      %vm452 = vcmp.eq.s32.totalorder %v388, 0
      %vm453 = vcmp.eq.s32.totalorder %v389, 0
      %vm454 = vcmp.eq.s32.totalorder %v390, 0
      %vm455 = vcmp.eq.s32.totalorder %v391, 0
      %vm456 = vcmp.eq.s32.totalorder %v392, 0
      %vm457 = vcmp.eq.s32.totalorder %v393, 0
      %vm458 = vcmp.eq.s32.totalorder %v394, 0
      %vm459 = vcmp.eq.s32.totalorder %v395, 0
      %vm460 = vcmp.eq.s32.totalorder %v396, 0
      %vm461 = vcmp.eq.s32.totalorder %v397, 0
      %vm462 = vcmp.eq.s32.totalorder %v398, 0
      %vm463 = vcmp.eq.s32.totalorder %v399, 0
      %vm464 = vcmp.eq.s32.totalorder %v400, 0
      %vm465 = vcmp.eq.s32.totalorder %v401, 0
      %vm466 = vcmp.eq.s32.totalorder %v402, 0
      %v467 = vand.u32 %v275, 4294967280
      %v468 = vand.u32 %v276, 4294967280
      %v469 = vand.u32 %v277, 4294967280
      %v470 = vand.u32 %v278, 4294967280
      %v471 = vand.u32 %v279, 4294967280
      %v472 = vand.u32 %v280, 4294967280
      %v473 = vand.u32 %v281, 4294967280
      %v474 = vand.u32 %v282, 4294967280
      %v475 = vand.u32 %v283, 4294967280
      %v476 = vand.u32 %v284, 4294967280
      %v477 = vand.u32 %v285, 4294967280
      %v478 = vand.u32 %v286, 4294967280
      %v479 = vand.u32 %v287, 4294967280
      %v480 = vand.u32 %v288, 4294967280
      %v481 = vand.u32 %v289, 4294967280
      %v482 = vand.u32 %v290, 4294967280
      %v483 = vand.u32 %v291, 4294967280
      %v484 = vand.u32 %v292, 4294967280
      %v485 = vand.u32 %v293, 4294967280
      %v486 = vand.u32 %v294, 4294967280
      %v487 = vand.u32 %v295, 4294967280
      %v488 = vand.u32 %v296, 4294967280
      %v489 = vand.u32 %v297, 4294967280
      %v490 = vand.u32 %v298, 4294967280
      %v491 = vand.u32 %v299, 4294967280
      %v492 = vand.u32 %v300, 4294967280
      %v493 = vand.u32 %v301, 4294967280
      %v494 = vand.u32 %v302, 4294967280
      %v495 = vand.u32 %v303, 4294967280
      %v496 = vand.u32 %v304, 4294967280
      %v497 = vand.u32 %v305, 4294967280
      %v498 = vand.u32 %v306, 4294967280
      %v499 = vand.u32 %v307, 4294967280
      %v500 = vand.u32 %v308, 4294967280
      %v501 = vand.u32 %v309, 4294967280
      %v502 = vand.u32 %v310, 4294967280
      %v503 = vand.u32 %v311, 4294967280
      %v504 = vand.u32 %v312, 4294967280
      %v505 = vand.u32 %v313, 4294967280
      %v506 = vand.u32 %v314, 4294967280
      %v507 = vand.u32 %v315, 4294967280
      %v508 = vand.u32 %v316, 4294967280
      %v509 = vand.u32 %v317, 4294967280
      %v510 = vand.u32 %v318, 4294967280
      %v511 = vand.u32 %v319, 4294967280
      %v512 = vand.u32 %v320, 4294967280
      %v513 = vand.u32 %v321, 4294967280
      %v514 = vand.u32 %v322, 4294967280
      %v515 = vand.u32 %v323, 4294967280
      %v516 = vand.u32 %v324, 4294967280
      %v517 = vand.u32 %v325, 4294967280
      %v518 = vand.u32 %v326, 4294967280
      %v519 = vand.u32 %v327, 4294967280
      %v520 = vand.u32 %v328, 4294967280
      %v521 = vand.u32 %v329, 4294967280
      %v522 = vand.u32 %v330, 4294967280
      %v523 = vand.u32 %v331, 4294967280
      %v524 = vand.u32 %v332, 4294967280
      %v525 = vand.u32 %v333, 4294967280
      %v526 = vand.u32 %v334, 4294967280
      %v527 = vand.u32 %v335, 4294967280
      %v528 = vand.u32 %v336, 4294967280
      %v529 = vand.u32 %v337, 4294967280
      %v530 = vand.u32 %v338, 4294967280
      %vm531 = vcmp.eq.s32.totalorder %v467, 0
      %vm532 = vcmp.eq.s32.totalorder %v468, 0
      %vm533 = vcmp.eq.s32.totalorder %v469, 0
      %vm534 = vcmp.eq.s32.totalorder %v470, 0
      %vm535 = vcmp.eq.s32.totalorder %v471, 0
      %vm536 = vcmp.eq.s32.totalorder %v472, 0
      %vm537 = vcmp.eq.s32.totalorder %v473, 0
      %vm538 = vcmp.eq.s32.totalorder %v474, 0
      %vm539 = vcmp.eq.s32.totalorder %v475, 0
      %vm540 = vcmp.eq.s32.totalorder %v476, 0
      %vm541 = vcmp.eq.s32.totalorder %v477, 0
      %vm542 = vcmp.eq.s32.totalorder %v478, 0
      %vm543 = vcmp.eq.s32.totalorder %v479, 0
      %vm544 = vcmp.eq.s32.totalorder %v480, 0
      %vm545 = vcmp.eq.s32.totalorder %v481, 0
      %vm546 = vcmp.eq.s32.totalorder %v482, 0
      %vm547 = vcmp.eq.s32.totalorder %v483, 0
      %vm548 = vcmp.eq.s32.totalorder %v484, 0
      %vm549 = vcmp.eq.s32.totalorder %v485, 0
      %vm550 = vcmp.eq.s32.totalorder %v486, 0
      %vm551 = vcmp.eq.s32.totalorder %v487, 0
      %vm552 = vcmp.eq.s32.totalorder %v488, 0
      %vm553 = vcmp.eq.s32.totalorder %v489, 0
      %vm554 = vcmp.eq.s32.totalorder %v490, 0
      %vm555 = vcmp.eq.s32.totalorder %v491, 0
      %vm556 = vcmp.eq.s32.totalorder %v492, 0
      %vm557 = vcmp.eq.s32.totalorder %v493, 0
      %vm558 = vcmp.eq.s32.totalorder %v494, 0
      %vm559 = vcmp.eq.s32.totalorder %v495, 0
      %vm560 = vcmp.eq.s32.totalorder %v496, 0
      %vm561 = vcmp.eq.s32.totalorder %v497, 0
      %vm562 = vcmp.eq.s32.totalorder %v498, 0
      %vm563 = vcmp.eq.s32.totalorder %v499, 0
      %vm564 = vcmp.eq.s32.totalorder %v500, 0
      %vm565 = vcmp.eq.s32.totalorder %v501, 0
      %vm566 = vcmp.eq.s32.totalorder %v502, 0
      %vm567 = vcmp.eq.s32.totalorder %v503, 0
      %vm568 = vcmp.eq.s32.totalorder %v504, 0
      %vm569 = vcmp.eq.s32.totalorder %v505, 0
      %vm570 = vcmp.eq.s32.totalorder %v506, 0
      %vm571 = vcmp.eq.s32.totalorder %v507, 0
      %vm572 = vcmp.eq.s32.totalorder %v508, 0
      %vm573 = vcmp.eq.s32.totalorder %v509, 0
      %vm574 = vcmp.eq.s32.totalorder %v510, 0
      %vm575 = vcmp.eq.s32.totalorder %v511, 0
      %vm576 = vcmp.eq.s32.totalorder %v512, 0
      %vm577 = vcmp.eq.s32.totalorder %v513, 0
      %vm578 = vcmp.eq.s32.totalorder %v514, 0
      %vm579 = vcmp.eq.s32.totalorder %v515, 0
      %vm580 = vcmp.eq.s32.totalorder %v516, 0
      %vm581 = vcmp.eq.s32.totalorder %v517, 0
      %vm582 = vcmp.eq.s32.totalorder %v518, 0
      %vm583 = vcmp.eq.s32.totalorder %v519, 0
      %vm584 = vcmp.eq.s32.totalorder %v520, 0
      %vm585 = vcmp.eq.s32.totalorder %v521, 0
      %vm586 = vcmp.eq.s32.totalorder %v522, 0
      %vm587 = vcmp.eq.s32.totalorder %v523, 0
      %vm588 = vcmp.eq.s32.totalorder %v524, 0
      %vm589 = vcmp.eq.s32.totalorder %v525, 0
      %vm590 = vcmp.eq.s32.totalorder %v526, 0
      %vm591 = vcmp.eq.s32.totalorder %v527, 0
      %vm592 = vcmp.eq.s32.totalorder %v528, 0
      %vm593 = vcmp.eq.s32.totalorder %v529, 0
      %vm594 = vcmp.eq.s32.totalorder %v530, 0
      %v595 = vld [vmem:[%s1] sm:$0xff]
      %v596 = vld [vmem:[%s1 + $0x8] sm:$0xff]
      %v597 = vld [vmem:[%s1 + $0x10] sm:$0xff]
      %v598 = vld [vmem:[%s1 + $0x18] sm:$0xff]
      %v599 = vld [vmem:[%s1 + $0x20] sm:$0xff]
      %v600 = vld [vmem:[%s1 + $0x28] sm:$0xff]
      %v601 = vld [vmem:[%s1 + $0x30] sm:$0xff]
      %v602 = vld [vmem:[%s1 + $0x38] sm:$0xff]
      %v603 = vld [vmem:[%s1 + $0x40] sm:$0xff]
      %v604 = vld [vmem:[%s1 + $0x48] sm:$0xff]
      %v605 = vld [vmem:[%s1 + $0x50] sm:$0xff]
      %v606 = vld [vmem:[%s1 + $0x58] sm:$0xff]
      %v607 = vld [vmem:[%s1 + $0x60] sm:$0xff]
      %v608 = vld [vmem:[%s1 + $0x68] sm:$0xff]
      %v609 = vld [vmem:[%s1 + $0x70] sm:$0xff]
      %v610 = vld [vmem:[%s1 + $0x78] sm:$0xff]
      %v611 = vld [vmem:[%s1 + $0x80] sm:$0xff]
      %v612 = vld [vmem:[%s1 + $0x88] sm:$0xff]
      %v613 = vld [vmem:[%s1 + $0x90] sm:$0xff]
      %v614 = vld [vmem:[%s1 + $0x98] sm:$0xff]
      %v615 = vld [vmem:[%s1 + $0xa0] sm:$0xff]
      %v616 = vld [vmem:[%s1 + $0xa8] sm:$0xff]
      %v617 = vld [vmem:[%s1 + $0xb0] sm:$0xff]
      %v618 = vld [vmem:[%s1 + $0xb8] sm:$0xff]
      %v619 = vld [vmem:[%s1 + $0xc0] sm:$0xff]
      %v620 = vld [vmem:[%s1 + $0xc8] sm:$0xff]
      %v621 = vld [vmem:[%s1 + $0xd0] sm:$0xff]
      %v622 = vld [vmem:[%s1 + $0xd8] sm:$0xff]
      %v623 = vld [vmem:[%s1 + $0xe0] sm:$0xff]
      %v624 = vld [vmem:[%s1 + $0xe8] sm:$0xff]
      %v625 = vld [vmem:[%s1 + $0xf0] sm:$0xff]
      %v626 = vld [vmem:[%s1 + $0xf8] sm:$0xff]
      %v627 = vadd.f32 %v191, %v595
      %v628 = vadd.f32 %v192, %v596
      %v629 = vadd.f32 %v193, %v597
      %v630 = vadd.f32 %v194, %v598
      %v631 = vadd.f32 %v195, %v599
      %v632 = vadd.f32 %v196, %v600
      %v633 = vadd.f32 %v197, %v601
      %v634 = vadd.f32 %v198, %v602
      %v635 = vadd.f32 %v199, %v603
      %v636 = vadd.f32 %v200, %v604
      %v637 = vadd.f32 %v201, %v605
      %v638 = vadd.f32 %v202, %v606
      %v639 = vadd.f32 %v203, %v607
      %v640 = vadd.f32 %v204, %v608
      %v641 = vadd.f32 %v205, %v609
      %v642 = vadd.f32 %v206, %v610
      %v643 = vadd.f32 %v223, %v611
      %v644 = vadd.f32 %v224, %v612
      %v645 = vadd.f32 %v225, %v613
      %v646 = vadd.f32 %v226, %v614
      %v647 = vadd.f32 %v227, %v615
      %v648 = vadd.f32 %v228, %v616
      %v649 = vadd.f32 %v229, %v617
      %v650 = vadd.f32 %v230, %v618
      %v651 = vadd.f32 %v231, %v619
      %v652 = vadd.f32 %v232, %v620
      %v653 = vadd.f32 %v233, %v621
      %v654 = vadd.f32 %v234, %v622
      %v655 = vadd.f32 %v235, %v623
      %v656 = vadd.f32 %v236, %v624
      %v657 = vadd.f32 %v237, %v625
      %v658 = vadd.f32 %v238, %v626
      %v659 = vld [vmem:[%s2] sm:$0xff]
      %v660 = vld [vmem:[%s2 + $0x8] sm:$0xff]
      %v661 = vld [vmem:[%s2 + $0x10] sm:$0xff]
      %v662 = vld [vmem:[%s2 + $0x18] sm:$0xff]
      %v663 = vld [vmem:[%s2 + $0x20] sm:$0xff]
      %v664 = vld [vmem:[%s2 + $0x28] sm:$0xff]
      %vm665 = vcmask 130048
      %v667 = vsel %vm665, %v627, 0
      %v670 = vsel %vm665, %v628, 0
      %v673 = vsel %vm665, %v629, 0
      %v676 = vsel %vm665, %v630, 0
      %v679 = vsel %vm665, %v631, 0
      %v682 = vsel %vm665, %v632, 0
      %v685 = vsel %vm665, %v633, 0
      %v688 = vsel %vm665, %v634, 0
      %v691 = vsel %vm665, %v635, 0
      %v694 = vsel %vm665, %v636, 0
      %v697 = vsel %vm665, %v637, 0
      %v700 = vsel %vm665, %v638, 0
      %v703 = vsel %vm665, %v639, 0
      %v706 = vsel %vm665, %v640, 0
      %v709 = vsel %vm665, %v641, 0
      %v712 = vsel %vm665, %v642, 0
      %v715 = vsel %vm665, %v643, 0
      %v718 = vsel %vm665, %v644, 0
      %v721 = vsel %vm665, %v645, 0
      %v724 = vsel %vm665, %v646, 0
      %v727 = vsel %vm665, %v647, 0
      %v730 = vsel %vm665, %v648, 0
      %v733 = vsel %vm665, %v649, 0
      %v736 = vsel %vm665, %v650, 0
      %v739 = vsel %vm665, %v651, 0
      %v742 = vsel %vm665, %v652, 0
      %v745 = vsel %vm665, %v653, 0
      %v748 = vsel %vm665, %v654, 0
      %v751 = vsel %vm665, %v655, 0
      %v754 = vsel %vm665, %v656, 0
      %v757 = vsel %vm665, %v657, 0
      %v760 = vsel %vm665, %v658, 0
      %762 = vmatprep.subr.mxu0 %v660
      %763 = vmatpush1.msra.mxu0 %v659
      %764 = vmatprep.subr.mxu0 %v663
      %765 = vmatpush1.msra.mxu0 %v662
      %766 = vmatprep.subr.mxu0 0.0
      %767 = vmatpush1.msra.mxu0 0.0
      %768 = vmatprep.subr.mxu0 0.0
      %769 = vmatpush1.msra.mxu0 0.0
      %770 = vmatprep.subr.mxu0 0.0
      %771 = vmatpush1.msra.mxu0 0.0
      %772 = vmatprep.subr.mxu0 0.0
      %773 = vmatpush1.msra.mxu0 0.0
      %774 = vmatprep.subr.mxu0 0.0
      %775 = vmatpush1.msra.mxu0 0.0
      %776 = vmatprep.subr.mxu0 0.0
      %777 = vmatpush1.msra.mxu0 0.0
      %778 = vmatprep.subr.mxu0 0.0
      %779 = vmatpush1.msra.mxu0 0.0
      %780 = vmatprep.subr.mxu0 0.0
      %781 = vmatpush1.msra.mxu0 0.0
      %782 = vmatprep.subr.mxu0 0.0
      %783 = vmatpush1.msra.mxu0 0.0
      %784 = vmatprep.subr.mxu0 0.0
      %785 = vmatpush1.msra.mxu0 0.0
      %786 = vmatprep.subr.mxu0 0.0
      %787 = vmatpush1.msra.mxu0 0.0
      %788 = vmatprep.subr.mxu0 0.0
      %789 = vmatpush1.msra.mxu0 0.0
      %790 = vmatprep.subr.mxu0 0.0
      %791 = vmatpush1.msra.mxu0 0.0
      %792 = vmatprep.subr.mxu0 0.0
      %793 = vmatpush1.msra.mxu0 0.0
      %794 = vmatprep.subr.mxu0 0.0
      %795 = vmatpush1.msra.mxu0 0.0
      %796 = vmatprep.subr.mxu0 0.0
      %797 = vmatpush1.msra.mxu0 0.0
      %798 = vmatprep.subr.mxu0 0.0
      %799 = vmatpush1.msra.mxu0 0.0
      %800 = vmatprep.subr.mxu0 0.0
      %801 = vmatpush1.msra.mxu0 0.0
      %802 = vmatprep.subr.mxu0 0.0
      %803 = vmatpush1.msra.mxu0 0.0
      %804 = vmatprep.subr.mxu0 0.0
      %805 = vmatpush1.msra.mxu0 0.0
      %806 = vmatprep.subr.mxu0 0.0
      %807 = vmatpush1.msra.mxu0 0.0
      %808 = vmatprep.subr.mxu0 0.0
      %809 = vmatpush1.msra.mxu0 0.0
      %810 = vmatprep.subr.mxu0 0.0
      %811 = vmatpush1.msra.mxu0 0.0
      %812 = vmatprep.subr.mxu0 0.0
      %813 = vmatpush1.msra.mxu0 0.0
      %814 = vmatprep.subr.mxu0 0.0
      %815 = vmatpush1.msra.mxu0 0.0
      %816 = vmatprep.subr.mxu0 0.0
      %817 = vmatpush1.msra.mxu0 0.0
      %818 = vmatprep.subr.mxu0 0.0
      %819 = vmatpush1.msra.mxu0 0.0
      %820 = vmatprep.subr.mxu0 0.0
      %821 = vmatpush1.msra.mxu0 0.0
      %822 = vmatprep.subr.mxu0 0.0
      %823 = vmatpush1.msra.mxu0 0.0
      %824 = vmatprep.subr.mxu0 0.0
      %825 = vmatpush1.msra.mxu0 0.0
      %826 = vmatprep.mubr.f32.mxu0 0.0
      %827 = vmatmul.mubr.f32.gmra.mrb[0].mxu0 %v667
      %v828 = vpop.f32.mrb[0].mxu0
      %v829 = vadd.f32 0.0, %v828
      %v830 = vpop.f32.mrb[0].mxu0
      %v831 = vadd.f32 0.0, %v830
      %832 = vmatprep.mubr.f32.mxu0 0.0
      %833 = vmatmul.mubr.f32.gmra.mrb[0].mxu0 %v670
      %v834 = vpop.f32.mrb[0].mxu0
      %v835 = vadd.f32 0.0, %v834
      %v836 = vpop.f32.mrb[0].mxu0
      %v837 = vadd.f32 0.0, %v836
      %838 = vmatprep.mubr.f32.mxu0 0.0
      %839 = vmatmul.mubr.f32.gmra.mrb[0].mxu0 %v673
      %v840 = vpop.f32.mrb[0].mxu0
      %v841 = vadd.f32 0.0, %v840
      %v842 = vpop.f32.mrb[0].mxu0
      %v843 = vadd.f32 0.0, %v842
      %844 = vmatprep.mubr.f32.mxu0 0.0
      %845 = vmatmul.mubr.f32.gmra.mrb[0].mxu0 %v676
      %v846 = vpop.f32.mrb[0].mxu0
      %v847 = vadd.f32 0.0, %v846
      %v848 = vpop.f32.mrb[0].mxu0
      %v849 = vadd.f32 0.0, %v848
      %850 = vmatprep.mubr.f32.mxu0 0.0
      %851 = vmatmul.mubr.f32.gmra.mrb[0].mxu0 %v679
      %v852 = vpop.f32.mrb[0].mxu0
      %v853 = vadd.f32 0.0, %v852
      %v854 = vpop.f32.mrb[0].mxu0
      %v855 = vadd.f32 0.0, %v854
      %856 = vmatprep.mubr.f32.mxu0 0.0
      %857 = vmatmul.mubr.f32.gmra.mrb[0].mxu0 %v682
      %v858 = vpop.f32.mrb[0].mxu0
      %v859 = vadd.f32 0.0, %v858
      %v860 = vpop.f32.mrb[0].mxu0
      %v861 = vadd.f32 0.0, %v860
      %862 = vmatprep.mubr.f32.mxu0 0.0
      %863 = vmatmul.mubr.f32.gmra.mrb[0].mxu0 %v685
      %v864 = vpop.f32.mrb[0].mxu0
      %v865 = vadd.f32 0.0, %v864
      %v866 = vpop.f32.mrb[0].mxu0
      %v867 = vadd.f32 0.0, %v866
      %868 = vmatprep.mubr.f32.mxu0 0.0
      %869 = vmatmul.mubr.f32.gmra.mrb[0].mxu0 %v688
      %v870 = vpop.f32.mrb[0].mxu0
      %v871 = vadd.f32 0.0, %v870
      %v872 = vpop.f32.mrb[0].mxu0
      %v873 = vadd.f32 0.0, %v872
      %874 = vmatprep.mubr.f32.mxu0 0.0
      %875 = vmatmul.mubr.f32.gmra.mrb[0].mxu0 %v691
      %v876 = vpop.f32.mrb[0].mxu0
      %v877 = vadd.f32 0.0, %v876
      %v878 = vpop.f32.mrb[0].mxu0
      %v879 = vadd.f32 0.0, %v878
      %880 = vmatprep.mubr.f32.mxu0 0.0
      %881 = vmatmul.mubr.f32.gmra.mrb[0].mxu0 %v694
      %v882 = vpop.f32.mrb[0].mxu0
      %v883 = vadd.f32 0.0, %v882
      %v884 = vpop.f32.mrb[0].mxu0
      %v885 = vadd.f32 0.0, %v884
      %886 = vmatprep.mubr.f32.mxu0 0.0
      %887 = vmatmul.mubr.f32.gmra.mrb[0].mxu0 %v697
      %v888 = vpop.f32.mrb[0].mxu0
      %v889 = vadd.f32 0.0, %v888
      %v890 = vpop.f32.mrb[0].mxu0
      %v891 = vadd.f32 0.0, %v890
      %892 = vmatprep.mubr.f32.mxu0 0.0
      %893 = vmatmul.mubr.f32.gmra.mrb[0].mxu0 %v700
      %v894 = vpop.f32.mrb[0].mxu0
      %v895 = vadd.f32 0.0, %v894
      %v896 = vpop.f32.mrb[0].mxu0
      %v897 = vadd.f32 0.0, %v896
      %898 = vmatprep.mubr.f32.mxu0 0.0
      %899 = vmatmul.mubr.f32.gmra.mrb[0].mxu0 %v703
      %v900 = vpop.f32.mrb[0].mxu0
      %v901 = vadd.f32 0.0, %v900
      %v902 = vpop.f32.mrb[0].mxu0
      %v903 = vadd.f32 0.0, %v902
      %904 = vmatprep.mubr.f32.mxu0 0.0
      %905 = vmatmul.mubr.f32.gmra.mrb[0].mxu0 %v706
      %v906 = vpop.f32.mrb[0].mxu0
      %v907 = vadd.f32 0.0, %v906
      %v908 = vpop.f32.mrb[0].mxu0
      %v909 = vadd.f32 0.0, %v908
      %910 = vmatprep.mubr.f32.mxu0 0.0
      %911 = vmatmul.mubr.f32.gmra.mrb[0].mxu0 %v709
      %v912 = vpop.f32.mrb[0].mxu0
      %v913 = vadd.f32 0.0, %v912
      %v914 = vpop.f32.mrb[0].mxu0
      %v915 = vadd.f32 0.0, %v914
      %916 = vmatprep.mubr.f32.mxu0 0.0
      %917 = vmatmul.mubr.f32.gmra.mrb[0].mxu0 %v712
      %v918 = vpop.f32.mrb[0].mxu0
      %v919 = vadd.f32 0.0, %v918
      %v920 = vpop.f32.mrb[0].mxu0
      %v921 = vadd.f32 0.0, %v920
      %922 = vmatprep.mubr.f32.mxu0 0.0
      %923 = vmatmul.mubr.f32.gmra.mrb[0].mxu0 %v715
      %v924 = vpop.f32.mrb[0].mxu0
      %v925 = vadd.f32 0.0, %v924
      %v926 = vpop.f32.mrb[0].mxu0
      %v927 = vadd.f32 0.0, %v926
      %928 = vmatprep.mubr.f32.mxu0 0.0
      %929 = vmatmul.mubr.f32.gmra.mrb[0].mxu0 %v718
      %v930 = vpop.f32.mrb[0].mxu0
      %v931 = vadd.f32 0.0, %v930
      %v932 = vpop.f32.mrb[0].mxu0
      %v933 = vadd.f32 0.0, %v932
      %934 = vmatprep.mubr.f32.mxu0 0.0
      %935 = vmatmul.mubr.f32.gmra.mrb[0].mxu0 %v721
      %v936 = vpop.f32.mrb[0].mxu0
      %v937 = vadd.f32 0.0, %v936
      %v938 = vpop.f32.mrb[0].mxu0
      %v939 = vadd.f32 0.0, %v938
      %940 = vmatprep.mubr.f32.mxu0 0.0
      %941 = vmatmul.mubr.f32.gmra.mrb[0].mxu0 %v724
      %v942 = vpop.f32.mrb[0].mxu0
      %v943 = vadd.f32 0.0, %v942
      %v944 = vpop.f32.mrb[0].mxu0
      %v945 = vadd.f32 0.0, %v944
      %946 = vmatprep.mubr.f32.mxu0 0.0
      %947 = vmatmul.mubr.f32.gmra.mrb[0].mxu0 %v727
      %v948 = vpop.f32.mrb[0].mxu0
      %v949 = vadd.f32 0.0, %v948
      %v950 = vpop.f32.mrb[0].mxu0
      %v951 = vadd.f32 0.0, %v950
      %952 = vmatprep.mubr.f32.mxu0 0.0
      %953 = vmatmul.mubr.f32.gmra.mrb[0].mxu0 %v730
      %v954 = vpop.f32.mrb[0].mxu0
      %v955 = vadd.f32 0.0, %v954
      %v956 = vpop.f32.mrb[0].mxu0
      %v957 = vadd.f32 0.0, %v956
      %958 = vmatprep.mubr.f32.mxu0 0.0
      %959 = vmatmul.mubr.f32.gmra.mrb[0].mxu0 %v733
      %v960 = vpop.f32.mrb[0].mxu0
      %v961 = vadd.f32 0.0, %v960
      %v962 = vpop.f32.mrb[0].mxu0
      %v963 = vadd.f32 0.0, %v962
      %964 = vmatprep.mubr.f32.mxu0 0.0
      %965 = vmatmul.mubr.f32.gmra.mrb[0].mxu0 %v736
      %v966 = vpop.f32.mrb[0].mxu0
      %v967 = vadd.f32 0.0, %v966
      %v968 = vpop.f32.mrb[0].mxu0
      %v969 = vadd.f32 0.0, %v968
      %970 = vmatprep.mubr.f32.mxu0 0.0
      %971 = vmatmul.mubr.f32.gmra.mrb[0].mxu0 %v739
      %v972 = vpop.f32.mrb[0].mxu0
      %v973 = vadd.f32 0.0, %v972
      %v974 = vpop.f32.mrb[0].mxu0
      %v975 = vadd.f32 0.0, %v974
      %976 = vmatprep.mubr.f32.mxu0 0.0
      %977 = vmatmul.mubr.f32.gmra.mrb[0].mxu0 %v742
      %v978 = vpop.f32.mrb[0].mxu0
      %v979 = vadd.f32 0.0, %v978
      %v980 = vpop.f32.mrb[0].mxu0
      %v981 = vadd.f32 0.0, %v980
      %982 = vmatprep.mubr.f32.mxu0 0.0
      %983 = vmatmul.mubr.f32.gmra.mrb[0].mxu0 %v745
      %v984 = vpop.f32.mrb[0].mxu0
      %v985 = vadd.f32 0.0, %v984
      %v986 = vpop.f32.mrb[0].mxu0
      %v987 = vadd.f32 0.0, %v986
      %988 = vmatprep.mubr.f32.mxu0 0.0
      %989 = vmatmul.mubr.f32.gmra.mrb[0].mxu0 %v748
      %v990 = vpop.f32.mrb[0].mxu0
      %v991 = vadd.f32 0.0, %v990
      %v992 = vpop.f32.mrb[0].mxu0
      %v993 = vadd.f32 0.0, %v992
      %994 = vmatprep.mubr.f32.mxu0 0.0
      %995 = vmatmul.mubr.f32.gmra.mrb[0].mxu0 %v751
      %v996 = vpop.f32.mrb[0].mxu0
      %v997 = vadd.f32 0.0, %v996
      %v998 = vpop.f32.mrb[0].mxu0
      %v999 = vadd.f32 0.0, %v998
      %1000 = vmatprep.mubr.f32.mxu0 0.0
      %1001 = vmatmul.mubr.f32.gmra.mrb[0].mxu0 %v754
      %v1002 = vpop.f32.mrb[0].mxu0
      %v1003 = vadd.f32 0.0, %v1002
      %v1004 = vpop.f32.mrb[0].mxu0
      %v1005 = vadd.f32 0.0, %v1004
      %1006 = vmatprep.mubr.f32.mxu0 0.0
      %1007 = vmatmul.mubr.f32.gmra.mrb[0].mxu0 %v757
      %v1008 = vpop.f32.mrb[0].mxu0
      %v1009 = vadd.f32 0.0, %v1008
      %v1010 = vpop.f32.mrb[0].mxu0
      %v1011 = vadd.f32 0.0, %v1010
      %1012 = vmatprep.mubr.f32.mxu0 0.0
      %1013 = vmatmul.mubr.f32.gmra.mrb[0].mxu0 %v760
      %v1014 = vpop.f32.mrb[0].mxu0
      %v1015 = vadd.f32 0.0, %v1014
      %v1016 = vpop.f32.mrb[0].mxu0
      %v1017 = vadd.f32 0.0, %v1016
      %1018 = vdwg.mxu0
      %1019 = vmatprep.subr.mxu0 0.0
      %1020 = vmatpush1.msra.mxu0 %v661
      %1021 = vmatprep.subr.mxu0 0.0
      %1022 = vmatpush1.msra.mxu0 %v664
      %1023 = vmatprep.subr.mxu0 0.0
      %1024 = vmatpush1.msra.mxu0 0.0
      %1025 = vmatprep.subr.mxu0 0.0
      %1026 = vmatpush1.msra.mxu0 0.0
      %1027 = vmatprep.subr.mxu0 0.0
      %1028 = vmatpush1.msra.mxu0 0.0
      %1029 = vmatprep.subr.mxu0 0.0
      %1030 = vmatpush1.msra.mxu0 0.0
      %1031 = vmatprep.subr.mxu0 0.0
      %1032 = vmatpush1.msra.mxu0 0.0
      %1033 = vmatprep.subr.mxu0 0.0
      %1034 = vmatpush1.msra.mxu0 0.0
      %1035 = vmatprep.subr.mxu0 0.0
      %1036 = vmatpush1.msra.mxu0 0.0
      %1037 = vmatprep.subr.mxu0 0.0
      %1038 = vmatpush1.msra.mxu0 0.0
      %1039 = vmatprep.subr.mxu0 0.0
      %1040 = vmatpush1.msra.mxu0 0.0
      %1041 = vmatprep.subr.mxu0 0.0
      %1042 = vmatpush1.msra.mxu0 0.0
      %1043 = vmatprep.subr.mxu0 0.0
      %1044 = vmatpush1.msra.mxu0 0.0
      %1045 = vmatprep.subr.mxu0 0.0
      %1046 = vmatpush1.msra.mxu0 0.0
      %1047 = vmatprep.subr.mxu0 0.0
      %1048 = vmatpush1.msra.mxu0 0.0
      %1049 = vmatprep.subr.mxu0 0.0
      %1050 = vmatpush1.msra.mxu0 0.0
      %1051 = vmatprep.subr.mxu0 0.0
      %1052 = vmatpush1.msra.mxu0 0.0
      %1053 = vmatprep.subr.mxu0 0.0
      %1054 = vmatpush1.msra.mxu0 0.0
      %1055 = vmatprep.subr.mxu0 0.0
      %1056 = vmatpush1.msra.mxu0 0.0
      %1057 = vmatprep.subr.mxu0 0.0
      %1058 = vmatpush1.msra.mxu0 0.0
      %1059 = vmatprep.subr.mxu0 0.0
      %1060 = vmatpush1.msra.mxu0 0.0
      %1061 = vmatprep.subr.mxu0 0.0
      %1062 = vmatpush1.msra.mxu0 0.0
      %1063 = vmatprep.subr.mxu0 0.0
      %1064 = vmatpush1.msra.mxu0 0.0
      %1065 = vmatprep.subr.mxu0 0.0
      %1066 = vmatpush1.msra.mxu0 0.0
      %1067 = vmatprep.subr.mxu0 0.0
      %1068 = vmatpush1.msra.mxu0 0.0
      %1069 = vmatprep.subr.mxu0 0.0
      %1070 = vmatpush1.msra.mxu0 0.0
      %1071 = vmatprep.subr.mxu0 0.0
      %1072 = vmatpush1.msra.mxu0 0.0
      %1073 = vmatprep.subr.mxu0 0.0
      %1074 = vmatpush1.msra.mxu0 0.0
      %1075 = vmatprep.subr.mxu0 0.0
      %1076 = vmatpush1.msra.mxu0 0.0
      %1077 = vmatprep.subr.mxu0 0.0
      %1078 = vmatpush1.msra.mxu0 0.0
      %1079 = vmatprep.subr.mxu0 0.0
      %1080 = vmatpush1.msra.mxu0 0.0
      %1081 = vmatprep.subr.mxu0 0.0
      %1082 = vmatpush1.msra.mxu0 0.0
      %1083 = vmatprep.mubr.f32.mxu0 0.0
      %1084 = vmatmul.mubr.f32.gmra.mrb[0].mxu0 %v667
      %v1085 = vpop.f32.mrb[0].mxu0
      %v1086 = vadd.f32 0.0, %v1085
      %v1087 = vpop.f32.mrb[0].mxu0
      %1088 = vmatprep.mubr.f32.mxu0 0.0
      %1089 = vmatmul.mubr.f32.gmra.mrb[0].mxu0 %v670
      %v1090 = vpop.f32.mrb[0].mxu0
      %v1091 = vadd.f32 0.0, %v1090
      %v1092 = vpop.f32.mrb[0].mxu0
      %1093 = vmatprep.mubr.f32.mxu0 0.0
      %1094 = vmatmul.mubr.f32.gmra.mrb[0].mxu0 %v673
      %v1095 = vpop.f32.mrb[0].mxu0
      %v1096 = vadd.f32 0.0, %v1095
      %v1097 = vpop.f32.mrb[0].mxu0
      %1098 = vmatprep.mubr.f32.mxu0 0.0
      %1099 = vmatmul.mubr.f32.gmra.mrb[0].mxu0 %v676
      %v1100 = vpop.f32.mrb[0].mxu0
      %v1101 = vadd.f32 0.0, %v1100
      %v1102 = vpop.f32.mrb[0].mxu0
      %1103 = vmatprep.mubr.f32.mxu0 0.0
      %1104 = vmatmul.mubr.f32.gmra.mrb[0].mxu0 %v679
      %v1105 = vpop.f32.mrb[0].mxu0
      %v1106 = vadd.f32 0.0, %v1105
      %v1107 = vpop.f32.mrb[0].mxu0
      %1108 = vmatprep.mubr.f32.mxu0 0.0
      %1109 = vmatmul.mubr.f32.gmra.mrb[0].mxu0 %v682
      %v1110 = vpop.f32.mrb[0].mxu0
      %v1111 = vadd.f32 0.0, %v1110
      %v1112 = vpop.f32.mrb[0].mxu0
      %1113 = vmatprep.mubr.f32.mxu0 0.0
      %1114 = vmatmul.mubr.f32.gmra.mrb[0].mxu0 %v685
      %v1115 = vpop.f32.mrb[0].mxu0
      %v1116 = vadd.f32 0.0, %v1115
      %v1117 = vpop.f32.mrb[0].mxu0
      %1118 = vmatprep.mubr.f32.mxu0 0.0
      %1119 = vmatmul.mubr.f32.gmra.mrb[0].mxu0 %v688
      %v1120 = vpop.f32.mrb[0].mxu0
      %v1121 = vadd.f32 0.0, %v1120
      %v1122 = vpop.f32.mrb[0].mxu0
      %1123 = vmatprep.mubr.f32.mxu0 0.0
      %1124 = vmatmul.mubr.f32.gmra.mrb[0].mxu0 %v691
      %v1125 = vpop.f32.mrb[0].mxu0
      %v1126 = vadd.f32 0.0, %v1125
      %v1127 = vpop.f32.mrb[0].mxu0
      %1128 = vmatprep.mubr.f32.mxu0 0.0
      %1129 = vmatmul.mubr.f32.gmra.mrb[0].mxu0 %v694
      %v1130 = vpop.f32.mrb[0].mxu0
      %v1131 = vadd.f32 0.0, %v1130
      %v1132 = vpop.f32.mrb[0].mxu0
      %1133 = vmatprep.mubr.f32.mxu0 0.0
      %1134 = vmatmul.mubr.f32.gmra.mrb[0].mxu0 %v697
      %v1135 = vpop.f32.mrb[0].mxu0
      %v1136 = vadd.f32 0.0, %v1135
      %v1137 = vpop.f32.mrb[0].mxu0
      %1138 = vmatprep.mubr.f32.mxu0 0.0
      %1139 = vmatmul.mubr.f32.gmra.mrb[0].mxu0 %v700
      %v1140 = vpop.f32.mrb[0].mxu0
      %v1141 = vadd.f32 0.0, %v1140
      %v1142 = vpop.f32.mrb[0].mxu0
      %1143 = vmatprep.mubr.f32.mxu0 0.0
      %1144 = vmatmul.mubr.f32.gmra.mrb[0].mxu0 %v703
      %v1145 = vpop.f32.mrb[0].mxu0
      %v1146 = vadd.f32 0.0, %v1145
      %v1147 = vpop.f32.mrb[0].mxu0
      %1148 = vmatprep.mubr.f32.mxu0 0.0
      %1149 = vmatmul.mubr.f32.gmra.mrb[0].mxu0 %v706
      %v1150 = vpop.f32.mrb[0].mxu0
      %v1151 = vadd.f32 0.0, %v1150
      %v1152 = vpop.f32.mrb[0].mxu0
      %1153 = vmatprep.mubr.f32.mxu0 0.0
      %1154 = vmatmul.mubr.f32.gmra.mrb[0].mxu0 %v709
      %v1155 = vpop.f32.mrb[0].mxu0
      %v1156 = vadd.f32 0.0, %v1155
      %v1157 = vpop.f32.mrb[0].mxu0
      %1158 = vmatprep.mubr.f32.mxu0 0.0
      %1159 = vmatmul.mubr.f32.gmra.mrb[0].mxu0 %v712
      %v1160 = vpop.f32.mrb[0].mxu0
      %v1161 = vadd.f32 0.0, %v1160
      %v1162 = vpop.f32.mrb[0].mxu0
      %1163 = vmatprep.mubr.f32.mxu0 0.0
      %1164 = vmatmul.mubr.f32.gmra.mrb[0].mxu0 %v715
      %v1165 = vpop.f32.mrb[0].mxu0
      %v1166 = vadd.f32 0.0, %v1165
      %v1167 = vpop.f32.mrb[0].mxu0
      %1168 = vmatprep.mubr.f32.mxu0 0.0
      %1169 = vmatmul.mubr.f32.gmra.mrb[0].mxu0 %v718
      %v1170 = vpop.f32.mrb[0].mxu0
      %v1171 = vadd.f32 0.0, %v1170
      %v1172 = vpop.f32.mrb[0].mxu0
      %1173 = vmatprep.mubr.f32.mxu0 0.0
      %1174 = vmatmul.mubr.f32.gmra.mrb[0].mxu0 %v721
      %v1175 = vpop.f32.mrb[0].mxu0
      %v1176 = vadd.f32 0.0, %v1175
      %v1177 = vpop.f32.mrb[0].mxu0
      %1178 = vmatprep.mubr.f32.mxu0 0.0
      %1179 = vmatmul.mubr.f32.gmra.mrb[0].mxu0 %v724
      %v1180 = vpop.f32.mrb[0].mxu0
      %v1181 = vadd.f32 0.0, %v1180
      %v1182 = vpop.f32.mrb[0].mxu0
      %1183 = vmatprep.mubr.f32.mxu0 0.0
      %1184 = vmatmul.mubr.f32.gmra.mrb[0].mxu0 %v727
      %v1185 = vpop.f32.mrb[0].mxu0
      %v1186 = vadd.f32 0.0, %v1185
      %v1187 = vpop.f32.mrb[0].mxu0
      %1188 = vmatprep.mubr.f32.mxu0 0.0
      %1189 = vmatmul.mubr.f32.gmra.mrb[0].mxu0 %v730
      %v1190 = vpop.f32.mrb[0].mxu0
      %v1191 = vadd.f32 0.0, %v1190
      %v1192 = vpop.f32.mrb[0].mxu0
      %1193 = vmatprep.mubr.f32.mxu0 0.0
      %1194 = vmatmul.mubr.f32.gmra.mrb[0].mxu0 %v733
      %v1195 = vpop.f32.mrb[0].mxu0
      %v1196 = vadd.f32 0.0, %v1195
      %v1197 = vpop.f32.mrb[0].mxu0
      %1198 = vmatprep.mubr.f32.mxu0 0.0
      %1199 = vmatmul.mubr.f32.gmra.mrb[0].mxu0 %v736
      %v1200 = vpop.f32.mrb[0].mxu0
      %v1201 = vadd.f32 0.0, %v1200
      %v1202 = vpop.f32.mrb[0].mxu0
      %1203 = vmatprep.mubr.f32.mxu0 0.0
      %1204 = vmatmul.mubr.f32.gmra.mrb[0].mxu0 %v739
      %v1205 = vpop.f32.mrb[0].mxu0
      %v1206 = vadd.f32 0.0, %v1205
      %v1207 = vpop.f32.mrb[0].mxu0
      %1208 = vmatprep.mubr.f32.mxu0 0.0
      %1209 = vmatmul.mubr.f32.gmra.mrb[0].mxu0 %v742
      %v1210 = vpop.f32.mrb[0].mxu0
      %v1211 = vadd.f32 0.0, %v1210
      %v1212 = vpop.f32.mrb[0].mxu0
      %1213 = vmatprep.mubr.f32.mxu0 0.0
      %1214 = vmatmul.mubr.f32.gmra.mrb[0].mxu0 %v745
      %v1215 = vpop.f32.mrb[0].mxu0
      %v1216 = vadd.f32 0.0, %v1215
      %v1217 = vpop.f32.mrb[0].mxu0
      %1218 = vmatprep.mubr.f32.mxu0 0.0
      %1219 = vmatmul.mubr.f32.gmra.mrb[0].mxu0 %v748
      %v1220 = vpop.f32.mrb[0].mxu0
      %v1221 = vadd.f32 0.0, %v1220
      %v1222 = vpop.f32.mrb[0].mxu0
      %1223 = vmatprep.mubr.f32.mxu0 0.0
      %1224 = vmatmul.mubr.f32.gmra.mrb[0].mxu0 %v751
      %v1225 = vpop.f32.mrb[0].mxu0
      %v1226 = vadd.f32 0.0, %v1225
      %v1227 = vpop.f32.mrb[0].mxu0
      %1228 = vmatprep.mubr.f32.mxu0 0.0
      %1229 = vmatmul.mubr.f32.gmra.mrb[0].mxu0 %v754
      %v1230 = vpop.f32.mrb[0].mxu0
      %v1231 = vadd.f32 0.0, %v1230
      %v1232 = vpop.f32.mrb[0].mxu0
      %1233 = vmatprep.mubr.f32.mxu0 0.0
      %1234 = vmatmul.mubr.f32.gmra.mrb[0].mxu0 %v757
      %v1235 = vpop.f32.mrb[0].mxu0
      %v1236 = vadd.f32 0.0, %v1235
      %v1237 = vpop.f32.mrb[0].mxu0
      %1238 = vmatprep.mubr.f32.mxu0 0.0
      %1239 = vmatmul.mubr.f32.gmra.mrb[0].mxu0 %v760
      %v1240 = vpop.f32.mrb[0].mxu0
      %v1241 = vadd.f32 0.0, %v1240
      %v1242 = vpop.f32.mrb[0].mxu0
      %1243 = vdwg.mxu0
      %1244 = vmatprep.subr.mxu0 0.0
      %1245 = vmatpush1.xpose.msra.mxu0 %v831
      %1246 = vmatprep.subr.mxu0 0.0
      %1247 = vmatpush1.xpose.msra.mxu0 %v837
      %1248 = vmatprep.subr.mxu0 0.0
      %1249 = vmatpush1.xpose.msra.mxu0 %v843
      %1250 = vmatprep.subr.mxu0 0.0
      %1251 = vmatpush1.xpose.msra.mxu0 %v849
      %1252 = vmatprep.subr.mxu0 0.0
      %1253 = vmatpush1.xpose.msra.mxu0 %v855
      %1254 = vmatprep.subr.mxu0 0.0
      %1255 = vmatpush1.xpose.msra.mxu0 %v861
      %1256 = vmatprep.subr.mxu0 0.0
      %1257 = vmatpush1.xpose.msra.mxu0 %v867
      %1258 = vmatprep.subr.mxu0 0.0
      %1259 = vmatpush1.xpose.msra.mxu0 %v873
      %1260 = vmatprep.subr.mxu0 0.0
      %1261 = vmatpush1.xpose.msra.mxu0 %v879
      %1262 = vmatprep.subr.mxu0 0.0
      %1263 = vmatpush1.xpose.msra.mxu0 %v885
      %1264 = vmatprep.subr.mxu0 0.0
      %1265 = vmatpush1.xpose.msra.mxu0 %v891
      %1266 = vmatprep.subr.mxu0 0.0
      %1267 = vmatpush1.xpose.msra.mxu0 %v897
      %1268 = vmatprep.subr.mxu0 0.0
      %1269 = vmatpush1.xpose.msra.mxu0 %v903
      %1270 = vmatprep.subr.mxu0 0.0
      %1271 = vmatpush1.xpose.msra.mxu0 %v909
      %1272 = vmatprep.subr.mxu0 0.0
      %1273 = vmatpush1.xpose.msra.mxu0 %v915
      %1274 = vmatprep.subr.mxu0 0.0
      %1275 = vmatpush1.xpose.msra.mxu0 %v921
      %1276 = vmatprep.subr.mxu0 0.0
      %1277 = vmatpush1.xpose.msra.mxu0 %v927
      %1278 = vmatprep.subr.mxu0 0.0
      %1279 = vmatpush1.xpose.msra.mxu0 %v933
      %1280 = vmatprep.subr.mxu0 0.0
      %1281 = vmatpush1.xpose.msra.mxu0 %v939
      %1282 = vmatprep.subr.mxu0 0.0
      %1283 = vmatpush1.xpose.msra.mxu0 %v945
      %1284 = vmatprep.subr.mxu0 0.0
      %1285 = vmatpush1.xpose.msra.mxu0 %v951
      %1286 = vmatprep.subr.mxu0 0.0
      %1287 = vmatpush1.xpose.msra.mxu0 %v957
      %1288 = vmatprep.subr.mxu0 0.0
      %1289 = vmatpush1.xpose.msra.mxu0 %v963
      %1290 = vmatprep.subr.mxu0 0.0
      %1291 = vmatpush1.xpose.msra.mxu0 %v969
      %1292 = vmatprep.subr.mxu0 0.0
      %1293 = vmatpush1.xpose.msra.mxu0 %v975
      %1294 = vmatprep.subr.mxu0 0.0
      %1295 = vmatpush1.xpose.msra.mxu0 %v981
      %1296 = vmatprep.subr.mxu0 0.0
      %1297 = vmatpush1.xpose.msra.mxu0 %v987
      %1298 = vmatprep.subr.mxu0 0.0
      %1299 = vmatpush1.xpose.msra.mxu0 %v993
      %1300 = vmatprep.subr.mxu0 0.0
      %1301 = vmatpush1.xpose.msra.mxu0 %v999
      %1302 = vmatprep.subr.mxu0 0.0
      %1303 = vmatpush1.xpose.msra.mxu0 %v1005
      %1304 = vmatprep.subr.mxu0 0.0
      %1305 = vmatpush1.xpose.msra.mxu0 %v1011
      %1306 = vmatprep.subr.mxu0 0.0
      %1307 = vmatpush1.xpose.msra.mxu0 %v1017
      %1308 = vmatprep.mubr.f32.mxu0 0.0
      %1309 = vmatmul.mubr.f32.gmra.mrb[0].mxu0 %v829
      %v1310 = vpop.f32.mrb[0].mxu0
      %v1311 = vadd.f32 0.0, %v1310
      %v1312 = vpop.f32.mrb[0].mxu0
      %v1313 = vadd.f32 0.0, %v1312
      %1314 = vmatprep.mubr.f32.mxu0 0.0
      %1315 = vmatmul.mubr.f32.gmra.mrb[0].mxu0 %v835
      %v1316 = vpop.f32.mrb[0].mxu0
      %v1317 = vadd.f32 0.0, %v1316
      %v1318 = vpop.f32.mrb[0].mxu0
      %v1319 = vadd.f32 0.0, %v1318
      %1320 = vmatprep.mubr.f32.mxu0 0.0
      %1321 = vmatmul.mubr.f32.gmra.mrb[0].mxu0 %v841
      %v1322 = vpop.f32.mrb[0].mxu0
      %v1323 = vadd.f32 0.0, %v1322
      %v1324 = vpop.f32.mrb[0].mxu0
      %v1325 = vadd.f32 0.0, %v1324
      %1326 = vmatprep.mubr.f32.mxu0 0.0
      %1327 = vmatmul.mubr.f32.gmra.mrb[0].mxu0 %v847
      %v1328 = vpop.f32.mrb[0].mxu0
      %v1329 = vadd.f32 0.0, %v1328
      %v1330 = vpop.f32.mrb[0].mxu0
      %v1331 = vadd.f32 0.0, %v1330
      %1332 = vmatprep.mubr.f32.mxu0 0.0
      %1333 = vmatmul.mubr.f32.gmra.mrb[0].mxu0 %v853
      %v1334 = vpop.f32.mrb[0].mxu0
      %v1335 = vadd.f32 0.0, %v1334
      %v1336 = vpop.f32.mrb[0].mxu0
      %v1337 = vadd.f32 0.0, %v1336
      %1338 = vmatprep.mubr.f32.mxu0 0.0
      %1339 = vmatmul.mubr.f32.gmra.mrb[0].mxu0 %v859
      %v1340 = vpop.f32.mrb[0].mxu0
      %v1341 = vadd.f32 0.0, %v1340
      %v1342 = vpop.f32.mrb[0].mxu0
      %v1343 = vadd.f32 0.0, %v1342
      %1344 = vmatprep.mubr.f32.mxu0 0.0
      %1345 = vmatmul.mubr.f32.gmra.mrb[0].mxu0 %v865
      %v1346 = vpop.f32.mrb[0].mxu0
      %v1347 = vadd.f32 0.0, %v1346
      %v1348 = vpop.f32.mrb[0].mxu0
      %v1349 = vadd.f32 0.0, %v1348
      %1350 = vmatprep.mubr.f32.mxu0 0.0
      %1351 = vmatmul.mubr.f32.gmra.mrb[0].mxu0 %v871
      %v1352 = vpop.f32.mrb[0].mxu0
      %v1353 = vadd.f32 0.0, %v1352
      %v1354 = vpop.f32.mrb[0].mxu0
      %v1355 = vadd.f32 0.0, %v1354
      %1356 = vmatprep.mubr.f32.mxu0 0.0
      %1357 = vmatmul.mubr.f32.gmra.mrb[0].mxu0 %v877
      %v1358 = vpop.f32.mrb[0].mxu0
      %v1359 = vadd.f32 0.0, %v1358
      %v1360 = vpop.f32.mrb[0].mxu0
      %v1361 = vadd.f32 0.0, %v1360
      %1362 = vmatprep.mubr.f32.mxu0 0.0
      %1363 = vmatmul.mubr.f32.gmra.mrb[0].mxu0 %v883
      %v1364 = vpop.f32.mrb[0].mxu0
      %v1365 = vadd.f32 0.0, %v1364
      %v1366 = vpop.f32.mrb[0].mxu0
      %v1367 = vadd.f32 0.0, %v1366
      %1368 = vmatprep.mubr.f32.mxu0 0.0
      %1369 = vmatmul.mubr.f32.gmra.mrb[0].mxu0 %v889
      %v1370 = vpop.f32.mrb[0].mxu0
      %v1371 = vadd.f32 0.0, %v1370
      %v1372 = vpop.f32.mrb[0].mxu0
      %v1373 = vadd.f32 0.0, %v1372
      %1374 = vmatprep.mubr.f32.mxu0 0.0
      %1375 = vmatmul.mubr.f32.gmra.mrb[0].mxu0 %v895
      %v1376 = vpop.f32.mrb[0].mxu0
      %v1377 = vadd.f32 0.0, %v1376
      %v1378 = vpop.f32.mrb[0].mxu0
      %v1379 = vadd.f32 0.0, %v1378
      %1380 = vmatprep.mubr.f32.mxu0 0.0
      %1381 = vmatmul.mubr.f32.gmra.mrb[0].mxu0 %v901
      %v1382 = vpop.f32.mrb[0].mxu0
      %v1383 = vadd.f32 0.0, %v1382
      %v1384 = vpop.f32.mrb[0].mxu0
      %v1385 = vadd.f32 0.0, %v1384
      %1386 = vmatprep.mubr.f32.mxu0 0.0
      %1387 = vmatmul.mubr.f32.gmra.mrb[0].mxu0 %v907
      %v1388 = vpop.f32.mrb[0].mxu0
      %v1389 = vadd.f32 0.0, %v1388
      %v1390 = vpop.f32.mrb[0].mxu0
      %v1391 = vadd.f32 0.0, %v1390
      %1392 = vmatprep.mubr.f32.mxu0 0.0
      %1393 = vmatmul.mubr.f32.gmra.mrb[0].mxu0 %v913
      %v1394 = vpop.f32.mrb[0].mxu0
      %v1395 = vadd.f32 0.0, %v1394
      %v1396 = vpop.f32.mrb[0].mxu0
      %v1397 = vadd.f32 0.0, %v1396
      %1398 = vmatprep.mubr.f32.mxu0 0.0
      %1399 = vmatmul.mubr.f32.gmra.mrb[0].mxu0 %v919
      %v1400 = vpop.f32.mrb[0].mxu0
      %v1401 = vadd.f32 0.0, %v1400
      %v1402 = vpop.f32.mrb[0].mxu0
      %v1403 = vadd.f32 0.0, %v1402
      %1404 = vmatprep.mubr.f32.mxu0 0.0
      %1405 = vmatmul.mubr.f32.gmra.mrb[0].mxu0 %v925
      %v1406 = vpop.f32.mrb[0].mxu0
      %v1407 = vadd.f32 0.0, %v1406
      %v1408 = vpop.f32.mrb[0].mxu0
      %v1409 = vadd.f32 0.0, %v1408
      %1410 = vmatprep.mubr.f32.mxu0 0.0
      %1411 = vmatmul.mubr.f32.gmra.mrb[0].mxu0 %v931
      %v1412 = vpop.f32.mrb[0].mxu0
      %v1413 = vadd.f32 0.0, %v1412
      %v1414 = vpop.f32.mrb[0].mxu0
      %v1415 = vadd.f32 0.0, %v1414
      %1416 = vmatprep.mubr.f32.mxu0 0.0
      %1417 = vmatmul.mubr.f32.gmra.mrb[0].mxu0 %v937
      %v1418 = vpop.f32.mrb[0].mxu0
      %v1419 = vadd.f32 0.0, %v1418
      %v1420 = vpop.f32.mrb[0].mxu0
      %v1421 = vadd.f32 0.0, %v1420
      %1422 = vmatprep.mubr.f32.mxu0 0.0
      %1423 = vmatmul.mubr.f32.gmra.mrb[0].mxu0 %v943
      %v1424 = vpop.f32.mrb[0].mxu0
      %v1425 = vadd.f32 0.0, %v1424
      %v1426 = vpop.f32.mrb[0].mxu0
      %v1427 = vadd.f32 0.0, %v1426
      %1428 = vmatprep.mubr.f32.mxu0 0.0
      %1429 = vmatmul.mubr.f32.gmra.mrb[0].mxu0 %v949
      %v1430 = vpop.f32.mrb[0].mxu0
      %v1431 = vadd.f32 0.0, %v1430
      %v1432 = vpop.f32.mrb[0].mxu0
      %v1433 = vadd.f32 0.0, %v1432
      %1434 = vmatprep.mubr.f32.mxu0 0.0
      %1435 = vmatmul.mubr.f32.gmra.mrb[0].mxu0 %v955
      %v1436 = vpop.f32.mrb[0].mxu0
      %v1437 = vadd.f32 0.0, %v1436
      %v1438 = vpop.f32.mrb[0].mxu0
      %v1439 = vadd.f32 0.0, %v1438
      %1440 = vmatprep.mubr.f32.mxu0 0.0
      %1441 = vmatmul.mubr.f32.gmra.mrb[0].mxu0 %v961
      %v1442 = vpop.f32.mrb[0].mxu0
      %v1443 = vadd.f32 0.0, %v1442
      %v1444 = vpop.f32.mrb[0].mxu0
      %v1445 = vadd.f32 0.0, %v1444
      %1446 = vmatprep.mubr.f32.mxu0 0.0
      %1447 = vmatmul.mubr.f32.gmra.mrb[0].mxu0 %v967
      %v1448 = vpop.f32.mrb[0].mxu0
      %v1449 = vadd.f32 0.0, %v1448
      %v1450 = vpop.f32.mrb[0].mxu0
      %v1451 = vadd.f32 0.0, %v1450
      %1452 = vmatprep.mubr.f32.mxu0 0.0
      %1453 = vmatmul.mubr.f32.gmra.mrb[0].mxu0 %v973
      %v1454 = vpop.f32.mrb[0].mxu0
      %v1455 = vadd.f32 0.0, %v1454
      %v1456 = vpop.f32.mrb[0].mxu0
      %v1457 = vadd.f32 0.0, %v1456
      %1458 = vmatprep.mubr.f32.mxu0 0.0
      %1459 = vmatmul.mubr.f32.gmra.mrb[0].mxu0 %v979
      %v1460 = vpop.f32.mrb[0].mxu0
      %v1461 = vadd.f32 0.0, %v1460
      %v1462 = vpop.f32.mrb[0].mxu0
      %v1463 = vadd.f32 0.0, %v1462
      %1464 = vmatprep.mubr.f32.mxu0 0.0
      %1465 = vmatmul.mubr.f32.gmra.mrb[0].mxu0 %v985
      %v1466 = vpop.f32.mrb[0].mxu0
      %v1467 = vadd.f32 0.0, %v1466
      %v1468 = vpop.f32.mrb[0].mxu0
      %v1469 = vadd.f32 0.0, %v1468
      %1470 = vmatprep.mubr.f32.mxu0 0.0
      %1471 = vmatmul.mubr.f32.gmra.mrb[0].mxu0 %v991
      %v1472 = vpop.f32.mrb[0].mxu0
      %v1473 = vadd.f32 0.0, %v1472
      %v1474 = vpop.f32.mrb[0].mxu0
      %v1475 = vadd.f32 0.0, %v1474
      %1476 = vmatprep.mubr.f32.mxu0 0.0
      %1477 = vmatmul.mubr.f32.gmra.mrb[0].mxu0 %v997
      %v1478 = vpop.f32.mrb[0].mxu0
      %v1479 = vadd.f32 0.0, %v1478
      %v1480 = vpop.f32.mrb[0].mxu0
      %v1481 = vadd.f32 0.0, %v1480
      %1482 = vmatprep.mubr.f32.mxu0 0.0
      %1483 = vmatmul.mubr.f32.gmra.mrb[0].mxu0 %v1003
      %v1484 = vpop.f32.mrb[0].mxu0
      %v1485 = vadd.f32 0.0, %v1484
      %v1486 = vpop.f32.mrb[0].mxu0
      %v1487 = vadd.f32 0.0, %v1486
      %1488 = vmatprep.mubr.f32.mxu0 0.0
      %1489 = vmatmul.mubr.f32.gmra.mrb[0].mxu0 %v1009
      %v1490 = vpop.f32.mrb[0].mxu0
      %v1491 = vadd.f32 0.0, %v1490
      %v1492 = vpop.f32.mrb[0].mxu0
      %v1493 = vadd.f32 0.0, %v1492
      %1494 = vmatprep.mubr.f32.mxu0 0.0
      %1495 = vmatmul.mubr.f32.gmra.mrb[0].mxu0 %v1015
      %v1496 = vpop.f32.mrb[0].mxu0
      %v1497 = vadd.f32 0.0, %v1496
      %v1498 = vpop.f32.mrb[0].mxu0
      %v1499 = vadd.f32 0.0, %v1498
      %1500 = vdwg.mxu0
      %v1501 = vmul.f32 %v1311, 0.25
      %v1502 = vmul.f32 %v1313, 0.25
      %v1503 = vmul.f32 %v1317, 0.25
      %v1504 = vmul.f32 %v1319, 0.25
      %v1505 = vmul.f32 %v1323, 0.25
      %v1506 = vmul.f32 %v1325, 0.25
      %v1507 = vmul.f32 %v1329, 0.25
      %v1508 = vmul.f32 %v1331, 0.25
      %v1509 = vmul.f32 %v1335, 0.25
      %v1510 = vmul.f32 %v1337, 0.25
      %v1511 = vmul.f32 %v1341, 0.25
      %v1512 = vmul.f32 %v1343, 0.25
      %v1513 = vmul.f32 %v1347, 0.25
      %v1514 = vmul.f32 %v1349, 0.25
      %v1515 = vmul.f32 %v1353, 0.25
      %v1516 = vmul.f32 %v1355, 0.25
      %v1517 = vmul.f32 %v1359, 0.25
      %v1518 = vmul.f32 %v1361, 0.25
      %v1519 = vmul.f32 %v1365, 0.25
      %v1520 = vmul.f32 %v1367, 0.25
      %v1521 = vmul.f32 %v1371, 0.25
      %v1522 = vmul.f32 %v1373, 0.25
      %v1523 = vmul.f32 %v1377, 0.25
      %v1524 = vmul.f32 %v1379, 0.25
      %v1525 = vmul.f32 %v1383, 0.25
      %v1526 = vmul.f32 %v1385, 0.25
      %v1527 = vmul.f32 %v1389, 0.25
      %v1528 = vmul.f32 %v1391, 0.25
      %v1529 = vmul.f32 %v1395, 0.25
      %v1530 = vmul.f32 %v1397, 0.25
      %v1531 = vmul.f32 %v1401, 0.25
      %v1532 = vmul.f32 %v1403, 0.25
      %v1533 = vmul.f32 %v1407, 0.25
      %v1534 = vmul.f32 %v1409, 0.25
      %v1535 = vmul.f32 %v1413, 0.25
      %v1536 = vmul.f32 %v1415, 0.25
      %v1537 = vmul.f32 %v1419, 0.25
      %v1538 = vmul.f32 %v1421, 0.25
      %v1539 = vmul.f32 %v1425, 0.25
      %v1540 = vmul.f32 %v1427, 0.25
      %v1541 = vmul.f32 %v1431, 0.25
      %v1542 = vmul.f32 %v1433, 0.25
      %v1543 = vmul.f32 %v1437, 0.25
      %v1544 = vmul.f32 %v1439, 0.25
      %v1545 = vmul.f32 %v1443, 0.25
      %v1546 = vmul.f32 %v1445, 0.25
      %v1547 = vmul.f32 %v1449, 0.25
      %v1548 = vmul.f32 %v1451, 0.25
      %v1549 = vmul.f32 %v1455, 0.25
      %v1550 = vmul.f32 %v1457, 0.25
      %v1551 = vmul.f32 %v1461, 0.25
      %v1552 = vmul.f32 %v1463, 0.25
      %v1553 = vmul.f32 %v1467, 0.25
      %v1554 = vmul.f32 %v1469, 0.25
      %v1555 = vmul.f32 %v1473, 0.25
      %v1556 = vmul.f32 %v1475, 0.25
      %v1557 = vmul.f32 %v1479, 0.25
      %v1558 = vmul.f32 %v1481, 0.25
      %v1559 = vmul.f32 %v1485, 0.25
      %v1560 = vmul.f32 %v1487, 0.25
      %v1561 = vmul.f32 %v1491, 0.25
      %v1562 = vmul.f32 %v1493, 0.25
      %v1563 = vmul.f32 %v1497, 0.25
      %v1564 = vmul.f32 %v1499, 0.25
      %v1565 = vsel %vm403, %v1501, -1e+30
      %v1566 = vsel %vm404, %v1502, -1e+30
      %v1567 = vsel %vm405, %v1503, -1e+30
      %v1568 = vsel %vm406, %v1504, -1e+30
      %v1569 = vsel %vm407, %v1505, -1e+30
      %v1570 = vsel %vm408, %v1506, -1e+30
      %v1571 = vsel %vm409, %v1507, -1e+30
      %v1572 = vsel %vm410, %v1508, -1e+30
      %v1573 = vsel %vm411, %v1509, -1e+30
      %v1574 = vsel %vm412, %v1510, -1e+30
      %v1575 = vsel %vm413, %v1511, -1e+30
      %v1576 = vsel %vm414, %v1512, -1e+30
      %v1577 = vsel %vm415, %v1513, -1e+30
      %v1578 = vsel %vm416, %v1514, -1e+30
      %v1579 = vsel %vm417, %v1515, -1e+30
      %v1580 = vsel %vm418, %v1516, -1e+30
      %v1581 = vsel %vm419, %v1517, -1e+30
      %v1582 = vsel %vm420, %v1518, -1e+30
      %v1583 = vsel %vm421, %v1519, -1e+30
      %v1584 = vsel %vm422, %v1520, -1e+30
      %v1585 = vsel %vm423, %v1521, -1e+30
      %v1586 = vsel %vm424, %v1522, -1e+30
      %v1587 = vsel %vm425, %v1523, -1e+30
      %v1588 = vsel %vm426, %v1524, -1e+30
      %v1589 = vsel %vm427, %v1525, -1e+30
      %v1590 = vsel %vm428, %v1526, -1e+30
      %v1591 = vsel %vm429, %v1527, -1e+30
      %v1592 = vsel %vm430, %v1528, -1e+30
      %v1593 = vsel %vm431, %v1529, -1e+30
      %v1594 = vsel %vm432, %v1530, -1e+30
      %v1595 = vsel %vm433, %v1531, -1e+30
      %v1596 = vsel %vm434, %v1532, -1e+30
      %v1597 = vsel %vm435, %v1533, -1e+30
      %v1598 = vsel %vm436, %v1534, -1e+30
      %v1599 = vsel %vm437, %v1535, -1e+30
      %v1600 = vsel %vm438, %v1536, -1e+30
      %v1601 = vsel %vm439, %v1537, -1e+30
      %v1602 = vsel %vm440, %v1538, -1e+30
      %v1603 = vsel %vm441, %v1539, -1e+30
      %v1604 = vsel %vm442, %v1540, -1e+30
      %v1605 = vsel %vm443, %v1541, -1e+30
      %v1606 = vsel %vm444, %v1542, -1e+30
      %v1607 = vsel %vm445, %v1543, -1e+30
      %v1608 = vsel %vm446, %v1544, -1e+30
      %v1609 = vsel %vm447, %v1545, -1e+30
      %v1610 = vsel %vm448, %v1546, -1e+30
      %v1611 = vsel %vm449, %v1547, -1e+30
      %v1612 = vsel %vm450, %v1548, -1e+30
      %v1613 = vsel %vm451, %v1549, -1e+30
      %v1614 = vsel %vm452, %v1550, -1e+30
      %v1615 = vsel %vm453, %v1551, -1e+30
      %v1616 = vsel %vm454, %v1552, -1e+30
      %v1617 = vsel %vm455, %v1553, -1e+30
      %v1618 = vsel %vm456, %v1554, -1e+30
      %v1619 = vsel %vm457, %v1555, -1e+30
      %v1620 = vsel %vm458, %v1556, -1e+30
      %v1621 = vsel %vm459, %v1557, -1e+30
      %v1622 = vsel %vm460, %v1558, -1e+30
      %v1623 = vsel %vm461, %v1559, -1e+30
      %v1624 = vsel %vm462, %v1560, -1e+30
      %v1625 = vsel %vm463, %v1561, -1e+30
      %v1626 = vsel %vm464, %v1562, -1e+30
      %v1627 = vsel %vm465, %v1563, -1e+30
      %v1628 = vsel %vm466, %v1564, -1e+30
      %v1629 = vmax.f32 %v1565, %v1566
      %1630 = vmax.xlane.f32.xlu0 %v1629
      %v1631 = vpop.xlane.xlu0 %1630
      %v1632 = vmax.f32 %v1567, %v1568
      %1633 = vmax.xlane.f32.xlu0 %v1632
      %v1634 = vpop.xlane.xlu0 %1633
      %v1635 = vmax.f32 %v1569, %v1570
      %1636 = vmax.xlane.f32.xlu0 %v1635
      %v1637 = vpop.xlane.xlu0 %1636
      %v1638 = vmax.f32 %v1571, %v1572
      %1639 = vmax.xlane.f32.xlu0 %v1638
      %v1640 = vpop.xlane.xlu0 %1639
      %v1641 = vmax.f32 %v1573, %v1574
      %1642 = vmax.xlane.f32.xlu0 %v1641
      %v1643 = vpop.xlane.xlu0 %1642
      %v1644 = vmax.f32 %v1575, %v1576
      %1645 = vmax.xlane.f32.xlu0 %v1644
      %v1646 = vpop.xlane.xlu0 %1645
      %v1647 = vmax.f32 %v1577, %v1578
      %1648 = vmax.xlane.f32.xlu0 %v1647
      %v1649 = vpop.xlane.xlu0 %1648
      %v1650 = vmax.f32 %v1579, %v1580
      %1651 = vmax.xlane.f32.xlu0 %v1650
      %v1652 = vpop.xlane.xlu0 %1651
      %v1653 = vmax.f32 %v1581, %v1582
      %1654 = vmax.xlane.f32.xlu0 %v1653
      %v1655 = vpop.xlane.xlu0 %1654
      %v1656 = vmax.f32 %v1583, %v1584
      %1657 = vmax.xlane.f32.xlu0 %v1656
      %v1658 = vpop.xlane.xlu0 %1657
      %v1659 = vmax.f32 %v1585, %v1586
      %1660 = vmax.xlane.f32.xlu0 %v1659
      %v1661 = vpop.xlane.xlu0 %1660
      %v1662 = vmax.f32 %v1587, %v1588
      %1663 = vmax.xlane.f32.xlu0 %v1662
      %v1664 = vpop.xlane.xlu0 %1663
      %v1665 = vmax.f32 %v1589, %v1590
      %1666 = vmax.xlane.f32.xlu0 %v1665
      %v1667 = vpop.xlane.xlu0 %1666
      %v1668 = vmax.f32 %v1591, %v1592
      %1669 = vmax.xlane.f32.xlu0 %v1668
      %v1670 = vpop.xlane.xlu0 %1669
      %v1671 = vmax.f32 %v1593, %v1594
      %1672 = vmax.xlane.f32.xlu0 %v1671
      %v1673 = vpop.xlane.xlu0 %1672
      %v1674 = vmax.f32 %v1595, %v1596
      %1675 = vmax.xlane.f32.xlu0 %v1674
      %v1676 = vpop.xlane.xlu0 %1675
      %v1677 = vmax.f32 %v1597, %v1598
      %1678 = vmax.xlane.f32.xlu0 %v1677
      %v1679 = vpop.xlane.xlu0 %1678
      %v1680 = vmax.f32 %v1599, %v1600
      %1681 = vmax.xlane.f32.xlu0 %v1680
      %v1682 = vpop.xlane.xlu0 %1681
      %v1683 = vmax.f32 %v1601, %v1602
      %1684 = vmax.xlane.f32.xlu0 %v1683
      %v1685 = vpop.xlane.xlu0 %1684
      %v1686 = vmax.f32 %v1603, %v1604
      %1687 = vmax.xlane.f32.xlu0 %v1686
      %v1688 = vpop.xlane.xlu0 %1687
      %v1689 = vmax.f32 %v1605, %v1606
      %1690 = vmax.xlane.f32.xlu0 %v1689
      %v1691 = vpop.xlane.xlu0 %1690
      %v1692 = vmax.f32 %v1607, %v1608
      %1693 = vmax.xlane.f32.xlu0 %v1692
      %v1694 = vpop.xlane.xlu0 %1693
      %v1695 = vmax.f32 %v1609, %v1610
      %1696 = vmax.xlane.f32.xlu0 %v1695
      %v1697 = vpop.xlane.xlu0 %1696
      %v1698 = vmax.f32 %v1611, %v1612
      %1699 = vmax.xlane.f32.xlu0 %v1698
      %v1700 = vpop.xlane.xlu0 %1699
      %v1701 = vmax.f32 %v1613, %v1614
      %1702 = vmax.xlane.f32.xlu0 %v1701
      %v1703 = vpop.xlane.xlu0 %1702
      %v1704 = vmax.f32 %v1615, %v1616
      %1705 = vmax.xlane.f32.xlu0 %v1704
      %v1706 = vpop.xlane.xlu0 %1705
      %v1707 = vmax.f32 %v1617, %v1618
      %1708 = vmax.xlane.f32.xlu0 %v1707
      %v1709 = vpop.xlane.xlu0 %1708
      %v1710 = vmax.f32 %v1619, %v1620
      %1711 = vmax.xlane.f32.xlu0 %v1710
      %v1712 = vpop.xlane.xlu0 %1711
      %v1713 = vmax.f32 %v1621, %v1622
      %1714 = vmax.xlane.f32.xlu0 %v1713
      %v1715 = vpop.xlane.xlu0 %1714
      %v1716 = vmax.f32 %v1623, %v1624
      %1717 = vmax.xlane.f32.xlu0 %v1716
      %v1718 = vpop.xlane.xlu0 %1717
      %v1719 = vmax.f32 %v1625, %v1626
      %1720 = vmax.xlane.f32.xlu0 %v1719
      %v1721 = vpop.xlane.xlu0 %1720
      %v1722 = vmax.f32 %v1627, %v1628
      %1723 = vmax.xlane.f32.xlu0 %v1722
      %v1724 = vpop.xlane.xlu0 %1723
      %v1725 = vsub.f32 %v1565, %v1631
      %v1726 = vsub.f32 %v1566, %v1631
      %v1727 = vsub.f32 %v1567, %v1634
      %v1728 = vsub.f32 %v1568, %v1634
      %v1729 = vsub.f32 %v1569, %v1637
      %v1730 = vsub.f32 %v1570, %v1637
      %v1731 = vsub.f32 %v1571, %v1640
      %v1732 = vsub.f32 %v1572, %v1640
      %v1733 = vsub.f32 %v1573, %v1643
      %v1734 = vsub.f32 %v1574, %v1643
      %v1735 = vsub.f32 %v1575, %v1646
      %v1736 = vsub.f32 %v1576, %v1646
      %v1737 = vsub.f32 %v1577, %v1649
      %v1738 = vsub.f32 %v1578, %v1649
      %v1739 = vsub.f32 %v1579, %v1652
      %v1740 = vsub.f32 %v1580, %v1652
      %v1741 = vsub.f32 %v1581, %v1655
      %v1742 = vsub.f32 %v1582, %v1655
      %v1743 = vsub.f32 %v1583, %v1658
      %v1744 = vsub.f32 %v1584, %v1658
      %v1745 = vsub.f32 %v1585, %v1661
      %v1746 = vsub.f32 %v1586, %v1661
      %v1747 = vsub.f32 %v1587, %v1664
      %v1748 = vsub.f32 %v1588, %v1664
      %v1749 = vsub.f32 %v1589, %v1667
      %v1750 = vsub.f32 %v1590, %v1667
      %v1751 = vsub.f32 %v1591, %v1670
      %v1752 = vsub.f32 %v1592, %v1670
      %v1753 = vsub.f32 %v1593, %v1673
      %v1754 = vsub.f32 %v1594, %v1673
      %v1755 = vsub.f32 %v1595, %v1676
      %v1756 = vsub.f32 %v1596, %v1676
      %v1757 = vsub.f32 %v1597, %v1679
      %v1758 = vsub.f32 %v1598, %v1679
      %v1759 = vsub.f32 %v1599, %v1682
      %v1760 = vsub.f32 %v1600, %v1682
      %v1761 = vsub.f32 %v1601, %v1685
      %v1762 = vsub.f32 %v1602, %v1685
      %v1763 = vsub.f32 %v1603, %v1688
      %v1764 = vsub.f32 %v1604, %v1688
      %v1765 = vsub.f32 %v1605, %v1691
      %v1766 = vsub.f32 %v1606, %v1691
      %v1767 = vsub.f32 %v1607, %v1694
      %v1768 = vsub.f32 %v1608, %v1694
      %v1769 = vsub.f32 %v1609, %v1697
      %v1770 = vsub.f32 %v1610, %v1697
      %v1771 = vsub.f32 %v1611, %v1700
      %v1772 = vsub.f32 %v1612, %v1700
      %v1773 = vsub.f32 %v1613, %v1703
      %v1774 = vsub.f32 %v1614, %v1703
      %v1775 = vsub.f32 %v1615, %v1706
      %v1776 = vsub.f32 %v1616, %v1706
      %v1777 = vsub.f32 %v1617, %v1709
      %v1778 = vsub.f32 %v1618, %v1709
      %v1779 = vsub.f32 %v1619, %v1712
      %v1780 = vsub.f32 %v1620, %v1712
      %v1781 = vsub.f32 %v1621, %v1715
      %v1782 = vsub.f32 %v1622, %v1715
      %v1783 = vsub.f32 %v1623, %v1718
      %v1784 = vsub.f32 %v1624, %v1718
      %v1785 = vsub.f32 %v1625, %v1721
      %v1786 = vsub.f32 %v1626, %v1721
      %v1787 = vsub.f32 %v1627, %v1724
      %v1788 = vsub.f32 %v1628, %v1724
      %v1789 = vmul.f32 %v1725, 1.442695
      %v1790 = vpow.pop %v1789
      %v1791 = vmul.f32 %v1726, 1.442695
      %v1792 = vpow.pop %v1791
      %v1793 = vmul.f32 %v1727, 1.442695
      %v1794 = vpow.pop %v1793
      %v1795 = vmul.f32 %v1728, 1.442695
      %v1796 = vpow.pop %v1795
      %v1797 = vmul.f32 %v1729, 1.442695
      %v1798 = vpow.pop %v1797
      %v1799 = vmul.f32 %v1730, 1.442695
      %v1800 = vpow.pop %v1799
      %v1801 = vmul.f32 %v1731, 1.442695
      %v1802 = vpow.pop %v1801
      %v1803 = vmul.f32 %v1732, 1.442695
      %v1804 = vpow.pop %v1803
      %v1805 = vmul.f32 %v1733, 1.442695
      %v1806 = vpow.pop %v1805
      %v1807 = vmul.f32 %v1734, 1.442695
      %v1808 = vpow.pop %v1807
      %v1809 = vmul.f32 %v1735, 1.442695
      %v1810 = vpow.pop %v1809
      %v1811 = vmul.f32 %v1736, 1.442695
      %v1812 = vpow.pop %v1811
      %v1813 = vmul.f32 %v1737, 1.442695
      %v1814 = vpow.pop %v1813
      %v1815 = vmul.f32 %v1738, 1.442695
      %v1816 = vpow.pop %v1815
      %v1817 = vmul.f32 %v1739, 1.442695
      %v1818 = vpow.pop %v1817
      %v1819 = vmul.f32 %v1740, 1.442695
      %v1820 = vpow.pop %v1819
      %v1821 = vmul.f32 %v1741, 1.442695
      %v1822 = vpow.pop %v1821
      %v1823 = vmul.f32 %v1742, 1.442695
      %v1824 = vpow.pop %v1823
      %v1825 = vmul.f32 %v1743, 1.442695
      %v1826 = vpow.pop %v1825
      %v1827 = vmul.f32 %v1744, 1.442695
      %v1828 = vpow.pop %v1827
      %v1829 = vmul.f32 %v1745, 1.442695
      %v1830 = vpow.pop %v1829
      %v1831 = vmul.f32 %v1746, 1.442695
      %v1832 = vpow.pop %v1831
      %v1833 = vmul.f32 %v1747, 1.442695
      %v1834 = vpow.pop %v1833
      %v1835 = vmul.f32 %v1748, 1.442695
      %v1836 = vpow.pop %v1835
      %v1837 = vmul.f32 %v1749, 1.442695
      %v1838 = vpow.pop %v1837
      %v1839 = vmul.f32 %v1750, 1.442695
      %v1840 = vpow.pop %v1839
      %v1841 = vmul.f32 %v1751, 1.442695
      %v1842 = vpow.pop %v1841
      %v1843 = vmul.f32 %v1752, 1.442695
      %v1844 = vpow.pop %v1843
      %v1845 = vmul.f32 %v1753, 1.442695
      %v1846 = vpow.pop %v1845
      %v1847 = vmul.f32 %v1754, 1.442695
      %v1848 = vpow.pop %v1847
      %v1849 = vmul.f32 %v1755, 1.442695
      %v1850 = vpow.pop %v1849
      %v1851 = vmul.f32 %v1756, 1.442695
      %v1852 = vpow.pop %v1851
      %v1853 = vmul.f32 %v1757, 1.442695
      %v1854 = vpow.pop %v1853
      %v1855 = vmul.f32 %v1758, 1.442695
      %v1856 = vpow.pop %v1855
      %v1857 = vmul.f32 %v1759, 1.442695
      %v1858 = vpow.pop %v1857
      %v1859 = vmul.f32 %v1760, 1.442695
      %v1860 = vpow.pop %v1859
      %v1861 = vmul.f32 %v1761, 1.442695
      %v1862 = vpow.pop %v1861
      %v1863 = vmul.f32 %v1762, 1.442695
      %v1864 = vpow.pop %v1863
      %v1865 = vmul.f32 %v1763, 1.442695
      %v1866 = vpow.pop %v1865
      %v1867 = vmul.f32 %v1764, 1.442695
      %v1868 = vpow.pop %v1867
      %v1869 = vmul.f32 %v1765, 1.442695
      %v1870 = vpow.pop %v1869
      %v1871 = vmul.f32 %v1766, 1.442695
      %v1872 = vpow.pop %v1871
      %v1873 = vmul.f32 %v1767, 1.442695
      %v1874 = vpow.pop %v1873
      %v1875 = vmul.f32 %v1768, 1.442695
      %v1876 = vpow.pop %v1875
      %v1877 = vmul.f32 %v1769, 1.442695
      %v1878 = vpow.pop %v1877
      %v1879 = vmul.f32 %v1770, 1.442695
      %v1880 = vpow.pop %v1879
      %v1881 = vmul.f32 %v1771, 1.442695
      %v1882 = vpow.pop %v1881
      %v1883 = vmul.f32 %v1772, 1.442695
      %v1884 = vpow.pop %v1883
      %v1885 = vmul.f32 %v1773, 1.442695
      %v1886 = vpow.pop %v1885
      %v1887 = vmul.f32 %v1774, 1.442695
      %v1888 = vpow.pop %v1887
      %v1889 = vmul.f32 %v1775, 1.442695
      %v1890 = vpow.pop %v1889
      %v1891 = vmul.f32 %v1776, 1.442695
      %v1892 = vpow.pop %v1891
      %v1893 = vmul.f32 %v1777, 1.442695
      %v1894 = vpow.pop %v1893
      %v1895 = vmul.f32 %v1778, 1.442695
      %v1896 = vpow.pop %v1895
      %v1897 = vmul.f32 %v1779, 1.442695
      %v1898 = vpow.pop %v1897
      %v1899 = vmul.f32 %v1780, 1.442695
      %v1900 = vpow.pop %v1899
      %v1901 = vmul.f32 %v1781, 1.442695
      %v1902 = vpow.pop %v1901
      %v1903 = vmul.f32 %v1782, 1.442695
      %v1904 = vpow.pop %v1903
      %v1905 = vmul.f32 %v1783, 1.442695
      %v1906 = vpow.pop %v1905
      %v1907 = vmul.f32 %v1784, 1.442695
      %v1908 = vpow.pop %v1907
      %v1909 = vmul.f32 %v1785, 1.442695
      %v1910 = vpow.pop %v1909
      %v1911 = vmul.f32 %v1786, 1.442695
      %v1912 = vpow.pop %v1911
      %v1913 = vmul.f32 %v1787, 1.442695
      %v1914 = vpow.pop %v1913
      %v1915 = vmul.f32 %v1788, 1.442695
      %v1916 = vpow.pop %v1915
      %v1917 = vadd.f32 %v1790, %v1792
      %1918 = vadd.xlane.f32.xlu0 %v1917
      %v1919 = vpop.xlane.xlu0 %1918
      %v1920 = vadd.f32 %v1794, %v1796
      %1921 = vadd.xlane.f32.xlu0 %v1920
      %v1922 = vpop.xlane.xlu0 %1921
      %v1923 = vadd.f32 %v1798, %v1800
      %1924 = vadd.xlane.f32.xlu0 %v1923
      %v1925 = vpop.xlane.xlu0 %1924
      %v1926 = vadd.f32 %v1802, %v1804
      %1927 = vadd.xlane.f32.xlu0 %v1926
      %v1928 = vpop.xlane.xlu0 %1927
      %v1929 = vadd.f32 %v1806, %v1808
      %1930 = vadd.xlane.f32.xlu0 %v1929
      %v1931 = vpop.xlane.xlu0 %1930
      %v1932 = vadd.f32 %v1810, %v1812
      %1933 = vadd.xlane.f32.xlu0 %v1932
      %v1934 = vpop.xlane.xlu0 %1933
      %v1935 = vadd.f32 %v1814, %v1816
      %1936 = vadd.xlane.f32.xlu0 %v1935
      %v1937 = vpop.xlane.xlu0 %1936
      %v1938 = vadd.f32 %v1818, %v1820
      %1939 = vadd.xlane.f32.xlu0 %v1938
      %v1940 = vpop.xlane.xlu0 %1939
      %v1941 = vadd.f32 %v1822, %v1824
      %1942 = vadd.xlane.f32.xlu0 %v1941
      %v1943 = vpop.xlane.xlu0 %1942
      %v1944 = vadd.f32 %v1826, %v1828
      %1945 = vadd.xlane.f32.xlu0 %v1944
      %v1946 = vpop.xlane.xlu0 %1945
      %v1947 = vadd.f32 %v1830, %v1832
      %1948 = vadd.xlane.f32.xlu0 %v1947
      %v1949 = vpop.xlane.xlu0 %1948
      %v1950 = vadd.f32 %v1834, %v1836
      %1951 = vadd.xlane.f32.xlu0 %v1950
      %v1952 = vpop.xlane.xlu0 %1951
      %v1953 = vadd.f32 %v1838, %v1840
      %1954 = vadd.xlane.f32.xlu0 %v1953
      %v1955 = vpop.xlane.xlu0 %1954
      %v1956 = vadd.f32 %v1842, %v1844
      %1957 = vadd.xlane.f32.xlu0 %v1956
      %v1958 = vpop.xlane.xlu0 %1957
      %v1959 = vadd.f32 %v1846, %v1848
      %1960 = vadd.xlane.f32.xlu0 %v1959
      %v1961 = vpop.xlane.xlu0 %1960
      %v1962 = vadd.f32 %v1850, %v1852
      %1963 = vadd.xlane.f32.xlu0 %v1962
      %v1964 = vpop.xlane.xlu0 %1963
      %v1965 = vadd.f32 %v1854, %v1856
      %1966 = vadd.xlane.f32.xlu0 %v1965
      %v1967 = vpop.xlane.xlu0 %1966
      %v1968 = vadd.f32 %v1858, %v1860
      %1969 = vadd.xlane.f32.xlu0 %v1968
      %v1970 = vpop.xlane.xlu0 %1969
      %v1971 = vadd.f32 %v1862, %v1864
      %1972 = vadd.xlane.f32.xlu0 %v1971
      %v1973 = vpop.xlane.xlu0 %1972
      %v1974 = vadd.f32 %v1866, %v1868
      %1975 = vadd.xlane.f32.xlu0 %v1974
      %v1976 = vpop.xlane.xlu0 %1975
      %v1977 = vadd.f32 %v1870, %v1872
      %1978 = vadd.xlane.f32.xlu0 %v1977
      %v1979 = vpop.xlane.xlu0 %1978
      %v1980 = vadd.f32 %v1874, %v1876
      %1981 = vadd.xlane.f32.xlu0 %v1980
      %v1982 = vpop.xlane.xlu0 %1981
      %v1983 = vadd.f32 %v1878, %v1880
      %1984 = vadd.xlane.f32.xlu0 %v1983
      %v1985 = vpop.xlane.xlu0 %1984
      %v1986 = vadd.f32 %v1882, %v1884
      %1987 = vadd.xlane.f32.xlu0 %v1986
      %v1988 = vpop.xlane.xlu0 %1987
      %v1989 = vadd.f32 %v1886, %v1888
      %1990 = vadd.xlane.f32.xlu0 %v1989
      %v1991 = vpop.xlane.xlu0 %1990
      %v1992 = vadd.f32 %v1890, %v1892
      %1993 = vadd.xlane.f32.xlu0 %v1992
      %v1994 = vpop.xlane.xlu0 %1993
      %v1995 = vadd.f32 %v1894, %v1896
      %1996 = vadd.xlane.f32.xlu0 %v1995
      %v1997 = vpop.xlane.xlu0 %1996
      %v1998 = vadd.f32 %v1898, %v1900
      %1999 = vadd.xlane.f32.xlu0 %v1998
      %v2000 = vpop.xlane.xlu0 %1999
      %v2001 = vadd.f32 %v1902, %v1904
      %2002 = vadd.xlane.f32.xlu0 %v2001
      %v2003 = vpop.xlane.xlu0 %2002
      %v2004 = vadd.f32 %v1906, %v1908
      %2005 = vadd.xlane.f32.xlu0 %v2004
      %v2006 = vpop.xlane.xlu0 %2005
      %v2007 = vadd.f32 %v1910, %v1912
      %2008 = vadd.xlane.f32.xlu0 %v2007
      %v2009 = vpop.xlane.xlu0 %2008
      %v2010 = vadd.f32 %v1914, %v1916
      %2011 = vadd.xlane.f32.xlu0 %v2010
      %v2012 = vpop.xlane.xlu0 %2011
      %v2013 = vrcp.pop %v1919
      %v2014 = vrcp.pop %v1922
      %v2015 = vrcp.pop %v1925
      %v2016 = vrcp.pop %v1928
      %v2017 = vrcp.pop %v1931
      %v2018 = vrcp.pop %v1934
      %v2019 = vrcp.pop %v1937
      %v2020 = vrcp.pop %v1940
      %v2021 = vrcp.pop %v1943
      %v2022 = vrcp.pop %v1946
      %v2023 = vrcp.pop %v1949
      %v2024 = vrcp.pop %v1952
      %v2025 = vrcp.pop %v1955
      %v2026 = vrcp.pop %v1958
      %v2027 = vrcp.pop %v1961
      %v2028 = vrcp.pop %v1964
      %v2029 = vrcp.pop %v1967
      %v2030 = vrcp.pop %v1970
      %v2031 = vrcp.pop %v1973
      %v2032 = vrcp.pop %v1976
      %v2033 = vrcp.pop %v1979
      %v2034 = vrcp.pop %v1982
      %v2035 = vrcp.pop %v1985
      %v2036 = vrcp.pop %v1988
      %v2037 = vrcp.pop %v1991
      %v2038 = vrcp.pop %v1994
      %v2039 = vrcp.pop %v1997
      %v2040 = vrcp.pop %v2000
      %v2041 = vrcp.pop %v2003
      %v2042 = vrcp.pop %v2006
      %v2043 = vrcp.pop %v2009
      %v2044 = vrcp.pop %v2012
      %v2045 = vmul.f32 %v1919, %v2013
      %v2046 = vmul.f32 %v1922, %v2014
      %v2047 = vmul.f32 %v1925, %v2015
      %v2048 = vmul.f32 %v1928, %v2016
      %v2049 = vmul.f32 %v1931, %v2017
      %v2050 = vmul.f32 %v1934, %v2018
      %v2051 = vmul.f32 %v1937, %v2019
      %v2052 = vmul.f32 %v1940, %v2020
      %v2053 = vmul.f32 %v1943, %v2021
      %v2054 = vmul.f32 %v1946, %v2022
      %v2055 = vmul.f32 %v1949, %v2023
      %v2056 = vmul.f32 %v1952, %v2024
      %v2057 = vmul.f32 %v1955, %v2025
      %v2058 = vmul.f32 %v1958, %v2026
      %v2059 = vmul.f32 %v1961, %v2027
      %v2060 = vmul.f32 %v1964, %v2028
      %v2061 = vmul.f32 %v1967, %v2029
      %v2062 = vmul.f32 %v1970, %v2030
      %v2063 = vmul.f32 %v1973, %v2031
      %v2064 = vmul.f32 %v1976, %v2032
      %v2065 = vmul.f32 %v1979, %v2033
      %v2066 = vmul.f32 %v1982, %v2034
      %v2067 = vmul.f32 %v1985, %v2035
      %v2068 = vmul.f32 %v1988, %v2036
      %v2069 = vmul.f32 %v1991, %v2037
      %v2070 = vmul.f32 %v1994, %v2038
      %v2071 = vmul.f32 %v1997, %v2039
      %v2072 = vmul.f32 %v2000, %v2040
      %v2073 = vmul.f32 %v2003, %v2041
      %v2074 = vmul.f32 %v2006, %v2042
      %v2075 = vmul.f32 %v2009, %v2043
      %v2076 = vmul.f32 %v2012, %v2044
      %v2077 = vsub.f32 2.0, %v2045
      %v2078 = vsub.f32 2.0, %v2046
      %v2079 = vsub.f32 2.0, %v2047
      %v2080 = vsub.f32 2.0, %v2048
      %v2081 = vsub.f32 2.0, %v2049
      %v2082 = vsub.f32 2.0, %v2050
      %v2083 = vsub.f32 2.0, %v2051
      %v2084 = vsub.f32 2.0, %v2052
      %v2085 = vsub.f32 2.0, %v2053
      %v2086 = vsub.f32 2.0, %v2054
      %v2087 = vsub.f32 2.0, %v2055
      %v2088 = vsub.f32 2.0, %v2056
      %v2089 = vsub.f32 2.0, %v2057
      %v2090 = vsub.f32 2.0, %v2058
      %v2091 = vsub.f32 2.0, %v2059
      %v2092 = vsub.f32 2.0, %v2060
      %v2093 = vsub.f32 2.0, %v2061
      %v2094 = vsub.f32 2.0, %v2062
      %v2095 = vsub.f32 2.0, %v2063
      %v2096 = vsub.f32 2.0, %v2064
      %v2097 = vsub.f32 2.0, %v2065
      %v2098 = vsub.f32 2.0, %v2066
      %v2099 = vsub.f32 2.0, %v2067
      %v2100 = vsub.f32 2.0, %v2068
      %v2101 = vsub.f32 2.0, %v2069
      %v2102 = vsub.f32 2.0, %v2070
      %v2103 = vsub.f32 2.0, %v2071
      %v2104 = vsub.f32 2.0, %v2072
      %v2105 = vsub.f32 2.0, %v2073
      %v2106 = vsub.f32 2.0, %v2074
      %v2107 = vsub.f32 2.0, %v2075
      %v2108 = vsub.f32 2.0, %v2076
      %v2109 = vmul.f32 %v2013, %v2077
      %v2110 = vmul.f32 %v2014, %v2078
      %v2111 = vmul.f32 %v2015, %v2079
      %v2112 = vmul.f32 %v2016, %v2080
      %v2113 = vmul.f32 %v2017, %v2081
      %v2114 = vmul.f32 %v2018, %v2082
      %v2115 = vmul.f32 %v2019, %v2083
      %v2116 = vmul.f32 %v2020, %v2084
      %v2117 = vmul.f32 %v2021, %v2085
      %v2118 = vmul.f32 %v2022, %v2086
      %v2119 = vmul.f32 %v2023, %v2087
      %v2120 = vmul.f32 %v2024, %v2088
      %v2121 = vmul.f32 %v2025, %v2089
      %v2122 = vmul.f32 %v2026, %v2090
      %v2123 = vmul.f32 %v2027, %v2091
      %v2124 = vmul.f32 %v2028, %v2092
      %v2125 = vmul.f32 %v2029, %v2093
      %v2126 = vmul.f32 %v2030, %v2094
      %v2127 = vmul.f32 %v2031, %v2095
      %v2128 = vmul.f32 %v2032, %v2096
      %v2129 = vmul.f32 %v2033, %v2097
      %v2130 = vmul.f32 %v2034, %v2098
      %v2131 = vmul.f32 %v2035, %v2099
      %v2132 = vmul.f32 %v2036, %v2100
      %v2133 = vmul.f32 %v2037, %v2101
      %v2134 = vmul.f32 %v2038, %v2102
      %v2135 = vmul.f32 %v2039, %v2103
      %v2136 = vmul.f32 %v2040, %v2104
      %v2137 = vmul.f32 %v2041, %v2105
      %v2138 = vmul.f32 %v2042, %v2106
      %v2139 = vmul.f32 %v2043, %v2107
      %v2140 = vmul.f32 %v2044, %v2108
      %v2141 = vmul.f32 %v1790, %v2109
      %v2142 = vmul.f32 %v1792, %v2109
      %v2143 = vmul.f32 %v1794, %v2110
      %v2144 = vmul.f32 %v1796, %v2110
      %v2145 = vmul.f32 %v1798, %v2111
      %v2146 = vmul.f32 %v1800, %v2111
      %v2147 = vmul.f32 %v1802, %v2112
      %v2148 = vmul.f32 %v1804, %v2112
      %v2149 = vmul.f32 %v1806, %v2113
      %v2150 = vmul.f32 %v1808, %v2113
      %v2151 = vmul.f32 %v1810, %v2114
      %v2152 = vmul.f32 %v1812, %v2114
      %v2153 = vmul.f32 %v1814, %v2115
      %v2154 = vmul.f32 %v1816, %v2115
      %v2155 = vmul.f32 %v1818, %v2116
      %v2156 = vmul.f32 %v1820, %v2116
      %v2157 = vmul.f32 %v1822, %v2117
      %v2158 = vmul.f32 %v1824, %v2117
      %v2159 = vmul.f32 %v1826, %v2118
      %v2160 = vmul.f32 %v1828, %v2118
      %v2161 = vmul.f32 %v1830, %v2119
      %v2162 = vmul.f32 %v1832, %v2119
      %v2163 = vmul.f32 %v1834, %v2120
      %v2164 = vmul.f32 %v1836, %v2120
      %v2165 = vmul.f32 %v1838, %v2121
      %v2166 = vmul.f32 %v1840, %v2121
      %v2167 = vmul.f32 %v1842, %v2122
      %v2168 = vmul.f32 %v1844, %v2122
      %v2169 = vmul.f32 %v1846, %v2123
      %v2170 = vmul.f32 %v1848, %v2123
      %v2171 = vmul.f32 %v1850, %v2124
      %v2172 = vmul.f32 %v1852, %v2124
      %v2173 = vmul.f32 %v1854, %v2125
      %v2174 = vmul.f32 %v1856, %v2125
      %v2175 = vmul.f32 %v1858, %v2126
      %v2176 = vmul.f32 %v1860, %v2126
      %v2177 = vmul.f32 %v1862, %v2127
      %v2178 = vmul.f32 %v1864, %v2127
      %v2179 = vmul.f32 %v1866, %v2128
      %v2180 = vmul.f32 %v1868, %v2128
      %v2181 = vmul.f32 %v1870, %v2129
      %v2182 = vmul.f32 %v1872, %v2129
      %v2183 = vmul.f32 %v1874, %v2130
      %v2184 = vmul.f32 %v1876, %v2130
      %v2185 = vmul.f32 %v1878, %v2131
      %v2186 = vmul.f32 %v1880, %v2131
      %v2187 = vmul.f32 %v1882, %v2132
      %v2188 = vmul.f32 %v1884, %v2132
      %v2189 = vmul.f32 %v1886, %v2133
      %v2190 = vmul.f32 %v1888, %v2133
      %v2191 = vmul.f32 %v1890, %v2134
      %v2192 = vmul.f32 %v1892, %v2134
      %v2193 = vmul.f32 %v1894, %v2135
      %v2194 = vmul.f32 %v1896, %v2135
      %v2195 = vmul.f32 %v1898, %v2136
      %v2196 = vmul.f32 %v1900, %v2136
      %v2197 = vmul.f32 %v1902, %v2137
      %v2198 = vmul.f32 %v1904, %v2137
      %v2199 = vmul.f32 %v1906, %v2138
      %v2200 = vmul.f32 %v1908, %v2138
      %v2201 = vmul.f32 %v1910, %v2139
      %v2202 = vmul.f32 %v1912, %v2139
      %v2203 = vmul.f32 %v1914, %v2140
      %v2204 = vmul.f32 %v1916, %v2140
      %s2205 = scalar_lea.vmem %s1, 256
      %v2206 = vld [vmem:[%s2205] sm:$0xff]
      %v2207 = vld [vmem:[%s2205 + $0x8] sm:$0xff]
      %v2208 = vld [vmem:[%s2205 + $0x10] sm:$0xff]
      %v2209 = vld [vmem:[%s2205 + $0x18] sm:$0xff]
      %v2210 = vld [vmem:[%s2205 + $0x20] sm:$0xff]
      %v2211 = vld [vmem:[%s2205 + $0x28] sm:$0xff]
      %v2212 = vld [vmem:[%s2205 + $0x30] sm:$0xff]
      %v2213 = vld [vmem:[%s2205 + $0x38] sm:$0xff]
      %v2214 = vld [vmem:[%s2205 + $0x40] sm:$0xff]
      %v2215 = vld [vmem:[%s2205 + $0x48] sm:$0xff]
      %v2216 = vld [vmem:[%s2205 + $0x50] sm:$0xff]
      %v2217 = vld [vmem:[%s2205 + $0x58] sm:$0xff]
      %v2218 = vld [vmem:[%s2205 + $0x60] sm:$0xff]
      %v2219 = vld [vmem:[%s2205 + $0x68] sm:$0xff]
      %v2220 = vld [vmem:[%s2205 + $0x70] sm:$0xff]
      %v2221 = vld [vmem:[%s2205 + $0x78] sm:$0xff]
      %v2222 = vld [vmem:[%s2205 + $0x80] sm:$0xff]
      %v2223 = vld [vmem:[%s2205 + $0x88] sm:$0xff]
      %v2224 = vld [vmem:[%s2205 + $0x90] sm:$0xff]
      %v2225 = vld [vmem:[%s2205 + $0x98] sm:$0xff]
      %v2226 = vld [vmem:[%s2205 + $0xa0] sm:$0xff]
      %v2227 = vld [vmem:[%s2205 + $0xa8] sm:$0xff]
      %v2228 = vld [vmem:[%s2205 + $0xb0] sm:$0xff]
      %v2229 = vld [vmem:[%s2205 + $0xb8] sm:$0xff]
      %v2230 = vld [vmem:[%s2205 + $0xc0] sm:$0xff]
      %v2231 = vld [vmem:[%s2205 + $0xc8] sm:$0xff]
      %v2232 = vld [vmem:[%s2205 + $0xd0] sm:$0xff]
      %v2233 = vld [vmem:[%s2205 + $0xd8] sm:$0xff]
      %v2234 = vld [vmem:[%s2205 + $0xe0] sm:$0xff]
      %v2235 = vld [vmem:[%s2205 + $0xe8] sm:$0xff]
      %v2236 = vld [vmem:[%s2205 + $0xf0] sm:$0xff]
      %v2237 = vld [vmem:[%s2205 + $0xf8] sm:$0xff]
      %2238 = vmatprep.subr.mxu0 0.0
      %2239 = vmatpush1.msra.mxu0 %v1086
      %2240 = vmatprep.subr.mxu0 0.0
      %2241 = vmatpush1.msra.mxu0 %v1091
      %2242 = vmatprep.subr.mxu0 0.0
      %2243 = vmatpush1.msra.mxu0 %v1096
      %2244 = vmatprep.subr.mxu0 0.0
      %2245 = vmatpush1.msra.mxu0 %v1101
      %2246 = vmatprep.subr.mxu0 0.0
      %2247 = vmatpush1.msra.mxu0 %v1106
      %2248 = vmatprep.subr.mxu0 0.0
      %2249 = vmatpush1.msra.mxu0 %v1111
      %2250 = vmatprep.subr.mxu0 0.0
      %2251 = vmatpush1.msra.mxu0 %v1116
      %2252 = vmatprep.subr.mxu0 0.0
      %2253 = vmatpush1.msra.mxu0 %v1121
      %2254 = vmatprep.subr.mxu0 0.0
      %2255 = vmatpush1.msra.mxu0 %v1126
      %2256 = vmatprep.subr.mxu0 0.0
      %2257 = vmatpush1.msra.mxu0 %v1131
      %2258 = vmatprep.subr.mxu0 0.0
      %2259 = vmatpush1.msra.mxu0 %v1136
      %2260 = vmatprep.subr.mxu0 0.0
      %2261 = vmatpush1.msra.mxu0 %v1141
      %2262 = vmatprep.subr.mxu0 0.0
      %2263 = vmatpush1.msra.mxu0 %v1146
      %2264 = vmatprep.subr.mxu0 0.0
      %2265 = vmatpush1.msra.mxu0 %v1151
      %2266 = vmatprep.subr.mxu0 0.0
      %2267 = vmatpush1.msra.mxu0 %v1156
      %2268 = vmatprep.subr.mxu0 0.0
      %2269 = vmatpush1.msra.mxu0 %v1161
      %2270 = vmatprep.subr.mxu0 0.0
      %2271 = vmatpush1.msra.mxu0 %v1166
      %2272 = vmatprep.subr.mxu0 0.0
      %2273 = vmatpush1.msra.mxu0 %v1171
      %2274 = vmatprep.subr.mxu0 0.0
      %2275 = vmatpush1.msra.mxu0 %v1176
      %2276 = vmatprep.subr.mxu0 0.0
      %2277 = vmatpush1.msra.mxu0 %v1181
      %2278 = vmatprep.subr.mxu0 0.0
      %2279 = vmatpush1.msra.mxu0 %v1186
      %2280 = vmatprep.subr.mxu0 0.0
      %2281 = vmatpush1.msra.mxu0 %v1191
      %2282 = vmatprep.subr.mxu0 0.0
      %2283 = vmatpush1.msra.mxu0 %v1196
      %2284 = vmatprep.subr.mxu0 0.0
      %2285 = vmatpush1.msra.mxu0 %v1201
      %2286 = vmatprep.subr.mxu0 0.0
      %2287 = vmatpush1.msra.mxu0 %v1206
      %2288 = vmatprep.subr.mxu0 0.0
      %2289 = vmatpush1.msra.mxu0 %v1211
      %2290 = vmatprep.subr.mxu0 0.0
      %2291 = vmatpush1.msra.mxu0 %v1216
      %2292 = vmatprep.subr.mxu0 0.0
      %2293 = vmatpush1.msra.mxu0 %v1221
      %2294 = vmatprep.subr.mxu0 0.0
      %2295 = vmatpush1.msra.mxu0 %v1226
      %2296 = vmatprep.subr.mxu0 0.0
      %2297 = vmatpush1.msra.mxu0 %v1231
      %2298 = vmatprep.subr.mxu0 0.0
      %2299 = vmatpush1.msra.mxu0 %v1236
      %2300 = vmatprep.subr.mxu0 0.0
      %2301 = vmatpush1.msra.mxu0 %v1241
      %2302 = vmatprep.mubr.f32.mxu0 %v2142
      %2303 = vmatmul.mubr.f32.gmra.mrb[0].mxu0 %v2141
      %v2304 = vpop.f32.mrb[0].mxu0
      %v2305 = vadd.f32 %v2206, %v2304
      %v2306 = vpop.f32.mrb[0].mxu0
      %2307 = vmatprep.mubr.f32.mxu0 %v2144
      %2308 = vmatmul.mubr.f32.gmra.mrb[0].mxu0 %v2143
      %v2309 = vpop.f32.mrb[0].mxu0
      %v2310 = vadd.f32 %v2207, %v2309
      %v2311 = vpop.f32.mrb[0].mxu0
      %2312 = vmatprep.mubr.f32.mxu0 %v2146
      %2313 = vmatmul.mubr.f32.gmra.mrb[0].mxu0 %v2145
      %v2314 = vpop.f32.mrb[0].mxu0
      %v2315 = vadd.f32 %v2208, %v2314
      %v2316 = vpop.f32.mrb[0].mxu0
      %2317 = vmatprep.mubr.f32.mxu0 %v2148
      %2318 = vmatmul.mubr.f32.gmra.mrb[0].mxu0 %v2147
      %v2319 = vpop.f32.mrb[0].mxu0
      %v2320 = vadd.f32 %v2209, %v2319
      %v2321 = vpop.f32.mrb[0].mxu0
      %2322 = vmatprep.mubr.f32.mxu0 %v2150
      %2323 = vmatmul.mubr.f32.gmra.mrb[0].mxu0 %v2149
      %v2324 = vpop.f32.mrb[0].mxu0
      %v2325 = vadd.f32 %v2210, %v2324
      %v2326 = vpop.f32.mrb[0].mxu0
      %2327 = vmatprep.mubr.f32.mxu0 %v2152
      %2328 = vmatmul.mubr.f32.gmra.mrb[0].mxu0 %v2151
      %v2329 = vpop.f32.mrb[0].mxu0
      %v2330 = vadd.f32 %v2211, %v2329
      %v2331 = vpop.f32.mrb[0].mxu0
      %2332 = vmatprep.mubr.f32.mxu0 %v2154
      %2333 = vmatmul.mubr.f32.gmra.mrb[0].mxu0 %v2153
      %v2334 = vpop.f32.mrb[0].mxu0
      %v2335 = vadd.f32 %v2212, %v2334
      %v2336 = vpop.f32.mrb[0].mxu0
      %2337 = vmatprep.mubr.f32.mxu0 %v2156
      %2338 = vmatmul.mubr.f32.gmra.mrb[0].mxu0 %v2155
      %v2339 = vpop.f32.mrb[0].mxu0
      %v2340 = vadd.f32 %v2213, %v2339
      %v2341 = vpop.f32.mrb[0].mxu0
      %2342 = vmatprep.mubr.f32.mxu0 %v2158
      %2343 = vmatmul.mubr.f32.gmra.mrb[0].mxu0 %v2157
      %v2344 = vpop.f32.mrb[0].mxu0
      %v2345 = vadd.f32 %v2214, %v2344
      %v2346 = vpop.f32.mrb[0].mxu0
      %2347 = vmatprep.mubr.f32.mxu0 %v2160
      %2348 = vmatmul.mubr.f32.gmra.mrb[0].mxu0 %v2159
      %v2349 = vpop.f32.mrb[0].mxu0
      %v2350 = vadd.f32 %v2215, %v2349
      %v2351 = vpop.f32.mrb[0].mxu0
      %2352 = vmatprep.mubr.f32.mxu0 %v2162
      %2353 = vmatmul.mubr.f32.gmra.mrb[0].mxu0 %v2161
      %v2354 = vpop.f32.mrb[0].mxu0
      %v2355 = vadd.f32 %v2216, %v2354
      %v2356 = vpop.f32.mrb[0].mxu0
      %2357 = vmatprep.mubr.f32.mxu0 %v2164
      %2358 = vmatmul.mubr.f32.gmra.mrb[0].mxu0 %v2163
      %v2359 = vpop.f32.mrb[0].mxu0
      %v2360 = vadd.f32 %v2217, %v2359
      %v2361 = vpop.f32.mrb[0].mxu0
      %2362 = vmatprep.mubr.f32.mxu0 %v2166
      %2363 = vmatmul.mubr.f32.gmra.mrb[0].mxu0 %v2165
      %v2364 = vpop.f32.mrb[0].mxu0
      %v2365 = vadd.f32 %v2218, %v2364
      %v2366 = vpop.f32.mrb[0].mxu0
      %2367 = vmatprep.mubr.f32.mxu0 %v2168
      %2368 = vmatmul.mubr.f32.gmra.mrb[0].mxu0 %v2167
      %v2369 = vpop.f32.mrb[0].mxu0
      %v2370 = vadd.f32 %v2219, %v2369
      %v2371 = vpop.f32.mrb[0].mxu0
      %2372 = vmatprep.mubr.f32.mxu0 %v2170
      %2373 = vmatmul.mubr.f32.gmra.mrb[0].mxu0 %v2169
      %v2374 = vpop.f32.mrb[0].mxu0
      %v2375 = vadd.f32 %v2220, %v2374
      %v2376 = vpop.f32.mrb[0].mxu0
      %2377 = vmatprep.mubr.f32.mxu0 %v2172
      %2378 = vmatmul.mubr.f32.gmra.mrb[0].mxu0 %v2171
      %v2379 = vpop.f32.mrb[0].mxu0
      %v2380 = vadd.f32 %v2221, %v2379
      %v2381 = vpop.f32.mrb[0].mxu0
      %2382 = vmatprep.mubr.f32.mxu0 %v2174
      %2383 = vmatmul.mubr.f32.gmra.mrb[0].mxu0 %v2173
      %v2384 = vpop.f32.mrb[0].mxu0
      %v2385 = vadd.f32 %v2222, %v2384
      %v2386 = vpop.f32.mrb[0].mxu0
      %2387 = vmatprep.mubr.f32.mxu0 %v2176
      %2388 = vmatmul.mubr.f32.gmra.mrb[0].mxu0 %v2175
      %v2389 = vpop.f32.mrb[0].mxu0
      %v2390 = vadd.f32 %v2223, %v2389
      %v2391 = vpop.f32.mrb[0].mxu0
      %2392 = vmatprep.mubr.f32.mxu0 %v2178
      %2393 = vmatmul.mubr.f32.gmra.mrb[0].mxu0 %v2177
      %v2394 = vpop.f32.mrb[0].mxu0
      %v2395 = vadd.f32 %v2224, %v2394
      %v2396 = vpop.f32.mrb[0].mxu0
      %2397 = vmatprep.mubr.f32.mxu0 %v2180
      %2398 = vmatmul.mubr.f32.gmra.mrb[0].mxu0 %v2179
      %v2399 = vpop.f32.mrb[0].mxu0
      %v2400 = vadd.f32 %v2225, %v2399
      %v2401 = vpop.f32.mrb[0].mxu0
      %2402 = vmatprep.mubr.f32.mxu0 %v2182
      %2403 = vmatmul.mubr.f32.gmra.mrb[0].mxu0 %v2181
      %v2404 = vpop.f32.mrb[0].mxu0
      %v2405 = vadd.f32 %v2226, %v2404
      %v2406 = vpop.f32.mrb[0].mxu0
      %2407 = vmatprep.mubr.f32.mxu0 %v2184
      %2408 = vmatmul.mubr.f32.gmra.mrb[0].mxu0 %v2183
      %v2409 = vpop.f32.mrb[0].mxu0
      %v2410 = vadd.f32 %v2227, %v2409
      %v2411 = vpop.f32.mrb[0].mxu0
      %2412 = vmatprep.mubr.f32.mxu0 %v2186
      %2413 = vmatmul.mubr.f32.gmra.mrb[0].mxu0 %v2185
      %v2414 = vpop.f32.mrb[0].mxu0
      %v2415 = vadd.f32 %v2228, %v2414
      %v2416 = vpop.f32.mrb[0].mxu0
      %2417 = vmatprep.mubr.f32.mxu0 %v2188
      %2418 = vmatmul.mubr.f32.gmra.mrb[0].mxu0 %v2187
      %v2419 = vpop.f32.mrb[0].mxu0
      %v2420 = vadd.f32 %v2229, %v2419
      %v2421 = vpop.f32.mrb[0].mxu0
      %2422 = vmatprep.mubr.f32.mxu0 %v2190
      %2423 = vmatmul.mubr.f32.gmra.mrb[0].mxu0 %v2189
      %v2424 = vpop.f32.mrb[0].mxu0
      %v2425 = vadd.f32 %v2230, %v2424
      %v2426 = vpop.f32.mrb[0].mxu0
      %2427 = vmatprep.mubr.f32.mxu0 %v2192
      %2428 = vmatmul.mubr.f32.gmra.mrb[0].mxu0 %v2191
      %v2429 = vpop.f32.mrb[0].mxu0
      %v2430 = vadd.f32 %v2231, %v2429
      %v2431 = vpop.f32.mrb[0].mxu0
      %2432 = vmatprep.mubr.f32.mxu0 %v2194
      %2433 = vmatmul.mubr.f32.gmra.mrb[0].mxu0 %v2193
      %v2434 = vpop.f32.mrb[0].mxu0
      %v2435 = vadd.f32 %v2232, %v2434
      %v2436 = vpop.f32.mrb[0].mxu0
      %2437 = vmatprep.mubr.f32.mxu0 %v2196
      %2438 = vmatmul.mubr.f32.gmra.mrb[0].mxu0 %v2195
      %v2439 = vpop.f32.mrb[0].mxu0
      %v2440 = vadd.f32 %v2233, %v2439
      %v2441 = vpop.f32.mrb[0].mxu0
      %2442 = vmatprep.mubr.f32.mxu0 %v2198
      %2443 = vmatmul.mubr.f32.gmra.mrb[0].mxu0 %v2197
      %v2444 = vpop.f32.mrb[0].mxu0
      %v2445 = vadd.f32 %v2234, %v2444
      %v2446 = vpop.f32.mrb[0].mxu0
      %2447 = vmatprep.mubr.f32.mxu0 %v2200
      %2448 = vmatmul.mubr.f32.gmra.mrb[0].mxu0 %v2199
      %v2449 = vpop.f32.mrb[0].mxu0
      %v2450 = vadd.f32 %v2235, %v2449
      %v2451 = vpop.f32.mrb[0].mxu0
      %2452 = vmatprep.mubr.f32.mxu0 %v2202
      %2453 = vmatmul.mubr.f32.gmra.mrb[0].mxu0 %v2201
      %v2454 = vpop.f32.mrb[0].mxu0
      %v2455 = vadd.f32 %v2236, %v2454
      %v2456 = vpop.f32.mrb[0].mxu0
      %2457 = vmatprep.mubr.f32.mxu0 %v2204
      %2458 = vmatmul.mubr.f32.gmra.mrb[0].mxu0 %v2203
      %v2459 = vpop.f32.mrb[0].mxu0
      %v2460 = vadd.f32 %v2237, %v2459
      %v2461 = vpop.f32.mrb[0].mxu0
      %2462 = vdwg.mxu0
      %s2463 = scalar_lea.vmem %s2, 48
      %v2464 = vld [vmem:[%s2463] sm:$0xff]
      %v2465 = vld [vmem:[%s2463 + $0x8] sm:$0xff]
      %v2466 = vld [vmem:[%s2463 + $0x10] sm:$0xff]
      %v2467 = vld [vmem:[%s2463 + $0x18] sm:$0xff]
      %v2468 = vld [vmem:[%s2463 + $0x20] sm:$0xff]
      %v2469 = vld [vmem:[%s2463 + $0x28] sm:$0xff]
      %v2471 = vsel %vm665, %v2305, 0
      %v2474 = vsel %vm665, %v2310, 0
      %v2477 = vsel %vm665, %v2315, 0
      %v2480 = vsel %vm665, %v2320, 0
      %v2483 = vsel %vm665, %v2325, 0
      %v2486 = vsel %vm665, %v2330, 0
      %v2489 = vsel %vm665, %v2335, 0
      %v2492 = vsel %vm665, %v2340, 0
      %v2495 = vsel %vm665, %v2345, 0
      %v2498 = vsel %vm665, %v2350, 0
      %v2501 = vsel %vm665, %v2355, 0
      %v2504 = vsel %vm665, %v2360, 0
      %v2507 = vsel %vm665, %v2365, 0
      %v2510 = vsel %vm665, %v2370, 0
      %v2513 = vsel %vm665, %v2375, 0
      %v2516 = vsel %vm665, %v2380, 0
      %v2519 = vsel %vm665, %v2385, 0
      %v2522 = vsel %vm665, %v2390, 0
      %v2525 = vsel %vm665, %v2395, 0
      %v2528 = vsel %vm665, %v2400, 0
      %v2531 = vsel %vm665, %v2405, 0
      %v2534 = vsel %vm665, %v2410, 0
      %v2537 = vsel %vm665, %v2415, 0
      %v2540 = vsel %vm665, %v2420, 0
      %v2543 = vsel %vm665, %v2425, 0
      %v2546 = vsel %vm665, %v2430, 0
      %v2549 = vsel %vm665, %v2435, 0
      %v2552 = vsel %vm665, %v2440, 0
      %v2555 = vsel %vm665, %v2445, 0
      %v2558 = vsel %vm665, %v2450, 0
      %v2561 = vsel %vm665, %v2455, 0
      %v2564 = vsel %vm665, %v2460, 0
      %2566 = vmatprep.subr.mxu0 %v2465
      %2567 = vmatpush1.msra.mxu0 %v2464
      %2568 = vmatprep.subr.mxu0 %v2468
      %2569 = vmatpush1.msra.mxu0 %v2467
      %2570 = vmatprep.subr.mxu0 0.0
      %2571 = vmatpush1.msra.mxu0 0.0
      %2572 = vmatprep.subr.mxu0 0.0
      %2573 = vmatpush1.msra.mxu0 0.0
      %2574 = vmatprep.subr.mxu0 0.0
      %2575 = vmatpush1.msra.mxu0 0.0
      %2576 = vmatprep.subr.mxu0 0.0
      %2577 = vmatpush1.msra.mxu0 0.0
      %2578 = vmatprep.subr.mxu0 0.0
      %2579 = vmatpush1.msra.mxu0 0.0
      %2580 = vmatprep.subr.mxu0 0.0
      %2581 = vmatpush1.msra.mxu0 0.0
      %2582 = vmatprep.subr.mxu0 0.0
      %2583 = vmatpush1.msra.mxu0 0.0
      %2584 = vmatprep.subr.mxu0 0.0
      %2585 = vmatpush1.msra.mxu0 0.0
      %2586 = vmatprep.subr.mxu0 0.0
      %2587 = vmatpush1.msra.mxu0 0.0
      %2588 = vmatprep.subr.mxu0 0.0
      %2589 = vmatpush1.msra.mxu0 0.0
      %2590 = vmatprep.subr.mxu0 0.0
      %2591 = vmatpush1.msra.mxu0 0.0
      %2592 = vmatprep.subr.mxu0 0.0
      %2593 = vmatpush1.msra.mxu0 0.0
      %2594 = vmatprep.subr.mxu0 0.0
      %2595 = vmatpush1.msra.mxu0 0.0
      %2596 = vmatprep.subr.mxu0 0.0
      %2597 = vmatpush1.msra.mxu0 0.0
      %2598 = vmatprep.subr.mxu0 0.0
      %2599 = vmatpush1.msra.mxu0 0.0
      %2600 = vmatprep.subr.mxu0 0.0
      %2601 = vmatpush1.msra.mxu0 0.0
      %2602 = vmatprep.subr.mxu0 0.0
      %2603 = vmatpush1.msra.mxu0 0.0
      %2604 = vmatprep.subr.mxu0 0.0
      %2605 = vmatpush1.msra.mxu0 0.0
      %2606 = vmatprep.subr.mxu0 0.0
      %2607 = vmatpush1.msra.mxu0 0.0
      %2608 = vmatprep.subr.mxu0 0.0
      %2609 = vmatpush1.msra.mxu0 0.0
      %2610 = vmatprep.subr.mxu0 0.0
      %2611 = vmatpush1.msra.mxu0 0.0
      %2612 = vmatprep.subr.mxu0 0.0
      %2613 = vmatpush1.msra.mxu0 0.0
      %2614 = vmatprep.subr.mxu0 0.0
      %2615 = vmatpush1.msra.mxu0 0.0
      %2616 = vmatprep.subr.mxu0 0.0
      %2617 = vmatpush1.msra.mxu0 0.0
      %2618 = vmatprep.subr.mxu0 0.0
      %2619 = vmatpush1.msra.mxu0 0.0
      %2620 = vmatprep.subr.mxu0 0.0
      %2621 = vmatpush1.msra.mxu0 0.0
      %2622 = vmatprep.subr.mxu0 0.0
      %2623 = vmatpush1.msra.mxu0 0.0
      %2624 = vmatprep.subr.mxu0 0.0
      %2625 = vmatpush1.msra.mxu0 0.0
      %2626 = vmatprep.subr.mxu0 0.0
      %2627 = vmatpush1.msra.mxu0 0.0
      %2628 = vmatprep.subr.mxu0 0.0
      %2629 = vmatpush1.msra.mxu0 0.0
      %2630 = vmatprep.mubr.f32.mxu0 0.0
      %2631 = vmatmul.mubr.f32.gmra.mrb[0].mxu0 %v2471
      %v2632 = vpop.f32.mrb[0].mxu0
      %v2633 = vadd.f32 0.0, %v2632
      %v2634 = vpop.f32.mrb[0].mxu0
      %v2635 = vadd.f32 0.0, %v2634
      %2636 = vmatprep.mubr.f32.mxu0 0.0
      %2637 = vmatmul.mubr.f32.gmra.mrb[0].mxu0 %v2474
      %v2638 = vpop.f32.mrb[0].mxu0
      %v2639 = vadd.f32 0.0, %v2638
      %v2640 = vpop.f32.mrb[0].mxu0
      %v2641 = vadd.f32 0.0, %v2640
      %2642 = vmatprep.mubr.f32.mxu0 0.0
      %2643 = vmatmul.mubr.f32.gmra.mrb[0].mxu0 %v2477
      %v2644 = vpop.f32.mrb[0].mxu0
      %v2645 = vadd.f32 0.0, %v2644
      %v2646 = vpop.f32.mrb[0].mxu0
      %v2647 = vadd.f32 0.0, %v2646
      %2648 = vmatprep.mubr.f32.mxu0 0.0
      %2649 = vmatmul.mubr.f32.gmra.mrb[0].mxu0 %v2480
      %v2650 = vpop.f32.mrb[0].mxu0
      %v2651 = vadd.f32 0.0, %v2650
      %v2652 = vpop.f32.mrb[0].mxu0
      %v2653 = vadd.f32 0.0, %v2652
      %2654 = vmatprep.mubr.f32.mxu0 0.0
      %2655 = vmatmul.mubr.f32.gmra.mrb[0].mxu0 %v2483
      %v2656 = vpop.f32.mrb[0].mxu0
      %v2657 = vadd.f32 0.0, %v2656
      %v2658 = vpop.f32.mrb[0].mxu0
      %v2659 = vadd.f32 0.0, %v2658
      %2660 = vmatprep.mubr.f32.mxu0 0.0
      %2661 = vmatmul.mubr.f32.gmra.mrb[0].mxu0 %v2486
      %v2662 = vpop.f32.mrb[0].mxu0
      %v2663 = vadd.f32 0.0, %v2662
      %v2664 = vpop.f32.mrb[0].mxu0
      %v2665 = vadd.f32 0.0, %v2664
      %2666 = vmatprep.mubr.f32.mxu0 0.0
      %2667 = vmatmul.mubr.f32.gmra.mrb[0].mxu0 %v2489
      %v2668 = vpop.f32.mrb[0].mxu0
      %v2669 = vadd.f32 0.0, %v2668
      %v2670 = vpop.f32.mrb[0].mxu0
      %v2671 = vadd.f32 0.0, %v2670
      %2672 = vmatprep.mubr.f32.mxu0 0.0
      %2673 = vmatmul.mubr.f32.gmra.mrb[0].mxu0 %v2492
      %v2674 = vpop.f32.mrb[0].mxu0
      %v2675 = vadd.f32 0.0, %v2674
      %v2676 = vpop.f32.mrb[0].mxu0
      %v2677 = vadd.f32 0.0, %v2676
      %2678 = vmatprep.mubr.f32.mxu0 0.0
      %2679 = vmatmul.mubr.f32.gmra.mrb[0].mxu0 %v2495
      %v2680 = vpop.f32.mrb[0].mxu0
      %v2681 = vadd.f32 0.0, %v2680
      %v2682 = vpop.f32.mrb[0].mxu0
      %v2683 = vadd.f32 0.0, %v2682
      %2684 = vmatprep.mubr.f32.mxu0 0.0
      %2685 = vmatmul.mubr.f32.gmra.mrb[0].mxu0 %v2498
      %v2686 = vpop.f32.mrb[0].mxu0
      %v2687 = vadd.f32 0.0, %v2686
      %v2688 = vpop.f32.mrb[0].mxu0
      %v2689 = vadd.f32 0.0, %v2688
      %2690 = vmatprep.mubr.f32.mxu0 0.0
      %2691 = vmatmul.mubr.f32.gmra.mrb[0].mxu0 %v2501
      %v2692 = vpop.f32.mrb[0].mxu0
      %v2693 = vadd.f32 0.0, %v2692
      %v2694 = vpop.f32.mrb[0].mxu0
      %v2695 = vadd.f32 0.0, %v2694
      %2696 = vmatprep.mubr.f32.mxu0 0.0
      %2697 = vmatmul.mubr.f32.gmra.mrb[0].mxu0 %v2504
      %v2698 = vpop.f32.mrb[0].mxu0
      %v2699 = vadd.f32 0.0, %v2698
      %v2700 = vpop.f32.mrb[0].mxu0
      %v2701 = vadd.f32 0.0, %v2700
      %2702 = vmatprep.mubr.f32.mxu0 0.0
      %2703 = vmatmul.mubr.f32.gmra.mrb[0].mxu0 %v2507
      %v2704 = vpop.f32.mrb[0].mxu0
      %v2705 = vadd.f32 0.0, %v2704
      %v2706 = vpop.f32.mrb[0].mxu0
      %v2707 = vadd.f32 0.0, %v2706
      %2708 = vmatprep.mubr.f32.mxu0 0.0
      %2709 = vmatmul.mubr.f32.gmra.mrb[0].mxu0 %v2510
      %v2710 = vpop.f32.mrb[0].mxu0
      %v2711 = vadd.f32 0.0, %v2710
      %v2712 = vpop.f32.mrb[0].mxu0
      %v2713 = vadd.f32 0.0, %v2712
      %2714 = vmatprep.mubr.f32.mxu0 0.0
      %2715 = vmatmul.mubr.f32.gmra.mrb[0].mxu0 %v2513
      %v2716 = vpop.f32.mrb[0].mxu0
      %v2717 = vadd.f32 0.0, %v2716
      %v2718 = vpop.f32.mrb[0].mxu0
      %v2719 = vadd.f32 0.0, %v2718
      %2720 = vmatprep.mubr.f32.mxu0 0.0
      %2721 = vmatmul.mubr.f32.gmra.mrb[0].mxu0 %v2516
      %v2722 = vpop.f32.mrb[0].mxu0
      %v2723 = vadd.f32 0.0, %v2722
      %v2724 = vpop.f32.mrb[0].mxu0
      %v2725 = vadd.f32 0.0, %v2724
      %2726 = vmatprep.mubr.f32.mxu0 0.0
      %2727 = vmatmul.mubr.f32.gmra.mrb[0].mxu0 %v2519
      %v2728 = vpop.f32.mrb[0].mxu0
      %v2729 = vadd.f32 0.0, %v2728
      %v2730 = vpop.f32.mrb[0].mxu0
      %v2731 = vadd.f32 0.0, %v2730
      %2732 = vmatprep.mubr.f32.mxu0 0.0
      %2733 = vmatmul.mubr.f32.gmra.mrb[0].mxu0 %v2522
      %v2734 = vpop.f32.mrb[0].mxu0
      %v2735 = vadd.f32 0.0, %v2734
      %v2736 = vpop.f32.mrb[0].mxu0
      %v2737 = vadd.f32 0.0, %v2736
      %2738 = vmatprep.mubr.f32.mxu0 0.0
      %2739 = vmatmul.mubr.f32.gmra.mrb[0].mxu0 %v2525
      %v2740 = vpop.f32.mrb[0].mxu0
      %v2741 = vadd.f32 0.0, %v2740
      %v2742 = vpop.f32.mrb[0].mxu0
      %v2743 = vadd.f32 0.0, %v2742
      %2744 = vmatprep.mubr.f32.mxu0 0.0
      %2745 = vmatmul.mubr.f32.gmra.mrb[0].mxu0 %v2528
      %v2746 = vpop.f32.mrb[0].mxu0
      %v2747 = vadd.f32 0.0, %v2746
      %v2748 = vpop.f32.mrb[0].mxu0
      %v2749 = vadd.f32 0.0, %v2748
      %2750 = vmatprep.mubr.f32.mxu0 0.0
      %2751 = vmatmul.mubr.f32.gmra.mrb[0].mxu0 %v2531
      %v2752 = vpop.f32.mrb[0].mxu0
      %v2753 = vadd.f32 0.0, %v2752
      %v2754 = vpop.f32.mrb[0].mxu0
      %v2755 = vadd.f32 0.0, %v2754
      %2756 = vmatprep.mubr.f32.mxu0 0.0
      %2757 = vmatmul.mubr.f32.gmra.mrb[0].mxu0 %v2534
      %v2758 = vpop.f32.mrb[0].mxu0
      %v2759 = vadd.f32 0.0, %v2758
      %v2760 = vpop.f32.mrb[0].mxu0
      %v2761 = vadd.f32 0.0, %v2760
      %2762 = vmatprep.mubr.f32.mxu0 0.0
      %2763 = vmatmul.mubr.f32.gmra.mrb[0].mxu0 %v2537
      %v2764 = vpop.f32.mrb[0].mxu0
      %v2765 = vadd.f32 0.0, %v2764
      %v2766 = vpop.f32.mrb[0].mxu0
      %v2767 = vadd.f32 0.0, %v2766
      %2768 = vmatprep.mubr.f32.mxu0 0.0
      %2769 = vmatmul.mubr.f32.gmra.mrb[0].mxu0 %v2540
      %v2770 = vpop.f32.mrb[0].mxu0
      %v2771 = vadd.f32 0.0, %v2770
      %v2772 = vpop.f32.mrb[0].mxu0
      %v2773 = vadd.f32 0.0, %v2772
      %2774 = vmatprep.mubr.f32.mxu0 0.0
      %2775 = vmatmul.mubr.f32.gmra.mrb[0].mxu0 %v2543
      %v2776 = vpop.f32.mrb[0].mxu0
      %v2777 = vadd.f32 0.0, %v2776
      %v2778 = vpop.f32.mrb[0].mxu0
      %v2779 = vadd.f32 0.0, %v2778
      %2780 = vmatprep.mubr.f32.mxu0 0.0
      %2781 = vmatmul.mubr.f32.gmra.mrb[0].mxu0 %v2546
      %v2782 = vpop.f32.mrb[0].mxu0
      %v2783 = vadd.f32 0.0, %v2782
      %v2784 = vpop.f32.mrb[0].mxu0
      %v2785 = vadd.f32 0.0, %v2784
      %2786 = vmatprep.mubr.f32.mxu0 0.0
      %2787 = vmatmul.mubr.f32.gmra.mrb[0].mxu0 %v2549
      %v2788 = vpop.f32.mrb[0].mxu0
      %v2789 = vadd.f32 0.0, %v2788
      %v2790 = vpop.f32.mrb[0].mxu0
      %v2791 = vadd.f32 0.0, %v2790
      %2792 = vmatprep.mubr.f32.mxu0 0.0
      %2793 = vmatmul.mubr.f32.gmra.mrb[0].mxu0 %v2552
      %v2794 = vpop.f32.mrb[0].mxu0
      %v2795 = vadd.f32 0.0, %v2794
      %v2796 = vpop.f32.mrb[0].mxu0
      %v2797 = vadd.f32 0.0, %v2796
      %2798 = vmatprep.mubr.f32.mxu0 0.0
      %2799 = vmatmul.mubr.f32.gmra.mrb[0].mxu0 %v2555
      %v2800 = vpop.f32.mrb[0].mxu0
      %v2801 = vadd.f32 0.0, %v2800
      %v2802 = vpop.f32.mrb[0].mxu0
      %v2803 = vadd.f32 0.0, %v2802
      %2804 = vmatprep.mubr.f32.mxu0 0.0
      %2805 = vmatmul.mubr.f32.gmra.mrb[0].mxu0 %v2558
      %v2806 = vpop.f32.mrb[0].mxu0
      %v2807 = vadd.f32 0.0, %v2806
      %v2808 = vpop.f32.mrb[0].mxu0
      %v2809 = vadd.f32 0.0, %v2808
      %2810 = vmatprep.mubr.f32.mxu0 0.0
      %2811 = vmatmul.mubr.f32.gmra.mrb[0].mxu0 %v2561
      %v2812 = vpop.f32.mrb[0].mxu0
      %v2813 = vadd.f32 0.0, %v2812
      %v2814 = vpop.f32.mrb[0].mxu0
      %v2815 = vadd.f32 0.0, %v2814
      %2816 = vmatprep.mubr.f32.mxu0 0.0
      %2817 = vmatmul.mubr.f32.gmra.mrb[0].mxu0 %v2564
      %v2818 = vpop.f32.mrb[0].mxu0
      %v2819 = vadd.f32 0.0, %v2818
      %v2820 = vpop.f32.mrb[0].mxu0
      %v2821 = vadd.f32 0.0, %v2820
      %2822 = vdwg.mxu0
      %2823 = vmatprep.subr.mxu0 0.0
      %2824 = vmatpush1.msra.mxu0 %v2466
      %2825 = vmatprep.subr.mxu0 0.0
      %2826 = vmatpush1.msra.mxu0 %v2469
      %2827 = vmatprep.subr.mxu0 0.0
      %2828 = vmatpush1.msra.mxu0 0.0
      %2829 = vmatprep.subr.mxu0 0.0
      %2830 = vmatpush1.msra.mxu0 0.0
      %2831 = vmatprep.subr.mxu0 0.0
      %2832 = vmatpush1.msra.mxu0 0.0
      %2833 = vmatprep.subr.mxu0 0.0
      %2834 = vmatpush1.msra.mxu0 0.0
      %2835 = vmatprep.subr.mxu0 0.0
      %2836 = vmatpush1.msra.mxu0 0.0
      %2837 = vmatprep.subr.mxu0 0.0
      %2838 = vmatpush1.msra.mxu0 0.0
      %2839 = vmatprep.subr.mxu0 0.0
      %2840 = vmatpush1.msra.mxu0 0.0
      %2841 = vmatprep.subr.mxu0 0.0
      %2842 = vmatpush1.msra.mxu0 0.0
      %2843 = vmatprep.subr.mxu0 0.0
      %2844 = vmatpush1.msra.mxu0 0.0
      %2845 = vmatprep.subr.mxu0 0.0
      %2846 = vmatpush1.msra.mxu0 0.0
      %2847 = vmatprep.subr.mxu0 0.0
      %2848 = vmatpush1.msra.mxu0 0.0
      %2849 = vmatprep.subr.mxu0 0.0
      %2850 = vmatpush1.msra.mxu0 0.0
      %2851 = vmatprep.subr.mxu0 0.0
      %2852 = vmatpush1.msra.mxu0 0.0
      %2853 = vmatprep.subr.mxu0 0.0
      %2854 = vmatpush1.msra.mxu0 0.0
      %2855 = vmatprep.subr.mxu0 0.0
      %2856 = vmatpush1.msra.mxu0 0.0
      %2857 = vmatprep.subr.mxu0 0.0
      %2858 = vmatpush1.msra.mxu0 0.0
      %2859 = vmatprep.subr.mxu0 0.0
      %2860 = vmatpush1.msra.mxu0 0.0
      %2861 = vmatprep.subr.mxu0 0.0
      %2862 = vmatpush1.msra.mxu0 0.0
      %2863 = vmatprep.subr.mxu0 0.0
      %2864 = vmatpush1.msra.mxu0 0.0
      %2865 = vmatprep.subr.mxu0 0.0
      %2866 = vmatpush1.msra.mxu0 0.0
      %2867 = vmatprep.subr.mxu0 0.0
      %2868 = vmatpush1.msra.mxu0 0.0
      %2869 = vmatprep.subr.mxu0 0.0
      %2870 = vmatpush1.msra.mxu0 0.0
      %2871 = vmatprep.subr.mxu0 0.0
      %2872 = vmatpush1.msra.mxu0 0.0
      %2873 = vmatprep.subr.mxu0 0.0
      %2874 = vmatpush1.msra.mxu0 0.0
      %2875 = vmatprep.subr.mxu0 0.0
      %2876 = vmatpush1.msra.mxu0 0.0
      %2877 = vmatprep.subr.mxu0 0.0
      %2878 = vmatpush1.msra.mxu0 0.0
      %2879 = vmatprep.subr.mxu0 0.0
      %2880 = vmatpush1.msra.mxu0 0.0
      %2881 = vmatprep.subr.mxu0 0.0
      %2882 = vmatpush1.msra.mxu0 0.0
      %2883 = vmatprep.subr.mxu0 0.0
      %2884 = vmatpush1.msra.mxu0 0.0
      %2885 = vmatprep.subr.mxu0 0.0
      %2886 = vmatpush1.msra.mxu0 0.0
      %2887 = vmatprep.mubr.f32.mxu0 0.0
      %2888 = vmatmul.mubr.f32.gmra.mrb[0].mxu0 %v2471
      %v2889 = vpop.f32.mrb[0].mxu0
      %v2890 = vadd.f32 0.0, %v2889
      %v2891 = vpop.f32.mrb[0].mxu0
      %2892 = vmatprep.mubr.f32.mxu0 0.0
      %2893 = vmatmul.mubr.f32.gmra.mrb[0].mxu0 %v2474
      %v2894 = vpop.f32.mrb[0].mxu0
      %v2895 = vadd.f32 0.0, %v2894
      %v2896 = vpop.f32.mrb[0].mxu0
      %2897 = vmatprep.mubr.f32.mxu0 0.0
      %2898 = vmatmul.mubr.f32.gmra.mrb[0].mxu0 %v2477
      %v2899 = vpop.f32.mrb[0].mxu0
      %v2900 = vadd.f32 0.0, %v2899
      %v2901 = vpop.f32.mrb[0].mxu0
      %2902 = vmatprep.mubr.f32.mxu0 0.0
      %2903 = vmatmul.mubr.f32.gmra.mrb[0].mxu0 %v2480
      %v2904 = vpop.f32.mrb[0].mxu0
      %v2905 = vadd.f32 0.0, %v2904
      %v2906 = vpop.f32.mrb[0].mxu0
      %2907 = vmatprep.mubr.f32.mxu0 0.0
      %2908 = vmatmul.mubr.f32.gmra.mrb[0].mxu0 %v2483
      %v2909 = vpop.f32.mrb[0].mxu0
      %v2910 = vadd.f32 0.0, %v2909
      %v2911 = vpop.f32.mrb[0].mxu0
      %2912 = vmatprep.mubr.f32.mxu0 0.0
      %2913 = vmatmul.mubr.f32.gmra.mrb[0].mxu0 %v2486
      %v2914 = vpop.f32.mrb[0].mxu0
      %v2915 = vadd.f32 0.0, %v2914
      %v2916 = vpop.f32.mrb[0].mxu0
      %2917 = vmatprep.mubr.f32.mxu0 0.0
      %2918 = vmatmul.mubr.f32.gmra.mrb[0].mxu0 %v2489
      %v2919 = vpop.f32.mrb[0].mxu0
      %v2920 = vadd.f32 0.0, %v2919
      %v2921 = vpop.f32.mrb[0].mxu0
      %2922 = vmatprep.mubr.f32.mxu0 0.0
      %2923 = vmatmul.mubr.f32.gmra.mrb[0].mxu0 %v2492
      %v2924 = vpop.f32.mrb[0].mxu0
      %v2925 = vadd.f32 0.0, %v2924
      %v2926 = vpop.f32.mrb[0].mxu0
      %2927 = vmatprep.mubr.f32.mxu0 0.0
      %2928 = vmatmul.mubr.f32.gmra.mrb[0].mxu0 %v2495
      %v2929 = vpop.f32.mrb[0].mxu0
      %v2930 = vadd.f32 0.0, %v2929
      %v2931 = vpop.f32.mrb[0].mxu0
      %2932 = vmatprep.mubr.f32.mxu0 0.0
      %2933 = vmatmul.mubr.f32.gmra.mrb[0].mxu0 %v2498
      %v2934 = vpop.f32.mrb[0].mxu0
      %v2935 = vadd.f32 0.0, %v2934
      %v2936 = vpop.f32.mrb[0].mxu0
      %2937 = vmatprep.mubr.f32.mxu0 0.0
      %2938 = vmatmul.mubr.f32.gmra.mrb[0].mxu0 %v2501
      %v2939 = vpop.f32.mrb[0].mxu0
      %v2940 = vadd.f32 0.0, %v2939
      %v2941 = vpop.f32.mrb[0].mxu0
      %2942 = vmatprep.mubr.f32.mxu0 0.0
      %2943 = vmatmul.mubr.f32.gmra.mrb[0].mxu0 %v2504
      %v2944 = vpop.f32.mrb[0].mxu0
      %v2945 = vadd.f32 0.0, %v2944
      %v2946 = vpop.f32.mrb[0].mxu0
      %2947 = vmatprep.mubr.f32.mxu0 0.0
      %2948 = vmatmul.mubr.f32.gmra.mrb[0].mxu0 %v2507
      %v2949 = vpop.f32.mrb[0].mxu0
      %v2950 = vadd.f32 0.0, %v2949
      %v2951 = vpop.f32.mrb[0].mxu0
      %2952 = vmatprep.mubr.f32.mxu0 0.0
      %2953 = vmatmul.mubr.f32.gmra.mrb[0].mxu0 %v2510
      %v2954 = vpop.f32.mrb[0].mxu0
      %v2955 = vadd.f32 0.0, %v2954
      %v2956 = vpop.f32.mrb[0].mxu0
      %2957 = vmatprep.mubr.f32.mxu0 0.0
      %2958 = vmatmul.mubr.f32.gmra.mrb[0].mxu0 %v2513
      %v2959 = vpop.f32.mrb[0].mxu0
      %v2960 = vadd.f32 0.0, %v2959
      %v2961 = vpop.f32.mrb[0].mxu0
      %2962 = vmatprep.mubr.f32.mxu0 0.0
      %2963 = vmatmul.mubr.f32.gmra.mrb[0].mxu0 %v2516
      %v2964 = vpop.f32.mrb[0].mxu0
      %v2965 = vadd.f32 0.0, %v2964
      %v2966 = vpop.f32.mrb[0].mxu0
      %2967 = vmatprep.mubr.f32.mxu0 0.0
      %2968 = vmatmul.mubr.f32.gmra.mrb[0].mxu0 %v2519
      %v2969 = vpop.f32.mrb[0].mxu0
      %v2970 = vadd.f32 0.0, %v2969
      %v2971 = vpop.f32.mrb[0].mxu0
      %2972 = vmatprep.mubr.f32.mxu0 0.0
      %2973 = vmatmul.mubr.f32.gmra.mrb[0].mxu0 %v2522
      %v2974 = vpop.f32.mrb[0].mxu0
      %v2975 = vadd.f32 0.0, %v2974
      %v2976 = vpop.f32.mrb[0].mxu0
      %2977 = vmatprep.mubr.f32.mxu0 0.0
      %2978 = vmatmul.mubr.f32.gmra.mrb[0].mxu0 %v2525
      %v2979 = vpop.f32.mrb[0].mxu0
      %v2980 = vadd.f32 0.0, %v2979
      %v2981 = vpop.f32.mrb[0].mxu0
      %2982 = vmatprep.mubr.f32.mxu0 0.0
      %2983 = vmatmul.mubr.f32.gmra.mrb[0].mxu0 %v2528
      %v2984 = vpop.f32.mrb[0].mxu0
      %v2985 = vadd.f32 0.0, %v2984
      %v2986 = vpop.f32.mrb[0].mxu0
      %2987 = vmatprep.mubr.f32.mxu0 0.0
      %2988 = vmatmul.mubr.f32.gmra.mrb[0].mxu0 %v2531
      %v2989 = vpop.f32.mrb[0].mxu0
      %v2990 = vadd.f32 0.0, %v2989
      %v2991 = vpop.f32.mrb[0].mxu0
      %2992 = vmatprep.mubr.f32.mxu0 0.0
      %2993 = vmatmul.mubr.f32.gmra.mrb[0].mxu0 %v2534
      %v2994 = vpop.f32.mrb[0].mxu0
      %v2995 = vadd.f32 0.0, %v2994
      %v2996 = vpop.f32.mrb[0].mxu0
      %2997 = vmatprep.mubr.f32.mxu0 0.0
      %2998 = vmatmul.mubr.f32.gmra.mrb[0].mxu0 %v2537
      %v2999 = vpop.f32.mrb[0].mxu0
      %v3000 = vadd.f32 0.0, %v2999
      %v3001 = vpop.f32.mrb[0].mxu0
      %3002 = vmatprep.mubr.f32.mxu0 0.0
      %3003 = vmatmul.mubr.f32.gmra.mrb[0].mxu0 %v2540
      %v3004 = vpop.f32.mrb[0].mxu0
      %v3005 = vadd.f32 0.0, %v3004
      %v3006 = vpop.f32.mrb[0].mxu0
      %3007 = vmatprep.mubr.f32.mxu0 0.0
      %3008 = vmatmul.mubr.f32.gmra.mrb[0].mxu0 %v2543
      %v3009 = vpop.f32.mrb[0].mxu0
      %v3010 = vadd.f32 0.0, %v3009
      %v3011 = vpop.f32.mrb[0].mxu0
      %3012 = vmatprep.mubr.f32.mxu0 0.0
      %3013 = vmatmul.mubr.f32.gmra.mrb[0].mxu0 %v2546
      %v3014 = vpop.f32.mrb[0].mxu0
      %v3015 = vadd.f32 0.0, %v3014
      %v3016 = vpop.f32.mrb[0].mxu0
      %3017 = vmatprep.mubr.f32.mxu0 0.0
      %3018 = vmatmul.mubr.f32.gmra.mrb[0].mxu0 %v2549
      %v3019 = vpop.f32.mrb[0].mxu0
      %v3020 = vadd.f32 0.0, %v3019
      %v3021 = vpop.f32.mrb[0].mxu0
      %3022 = vmatprep.mubr.f32.mxu0 0.0
      %3023 = vmatmul.mubr.f32.gmra.mrb[0].mxu0 %v2552
      %v3024 = vpop.f32.mrb[0].mxu0
      %v3025 = vadd.f32 0.0, %v3024
      %v3026 = vpop.f32.mrb[0].mxu0
      %3027 = vmatprep.mubr.f32.mxu0 0.0
      %3028 = vmatmul.mubr.f32.gmra.mrb[0].mxu0 %v2555
      %v3029 = vpop.f32.mrb[0].mxu0
      %v3030 = vadd.f32 0.0, %v3029
      %v3031 = vpop.f32.mrb[0].mxu0
      %3032 = vmatprep.mubr.f32.mxu0 0.0
      %3033 = vmatmul.mubr.f32.gmra.mrb[0].mxu0 %v2558
      %v3034 = vpop.f32.mrb[0].mxu0
      %v3035 = vadd.f32 0.0, %v3034
      %v3036 = vpop.f32.mrb[0].mxu0
      %3037 = vmatprep.mubr.f32.mxu0 0.0
      %3038 = vmatmul.mubr.f32.gmra.mrb[0].mxu0 %v2561
      %v3039 = vpop.f32.mrb[0].mxu0
      %v3040 = vadd.f32 0.0, %v3039
      %v3041 = vpop.f32.mrb[0].mxu0
      %3042 = vmatprep.mubr.f32.mxu0 0.0
      %3043 = vmatmul.mubr.f32.gmra.mrb[0].mxu0 %v2564
      %v3044 = vpop.f32.mrb[0].mxu0
      %v3045 = vadd.f32 0.0, %v3044
      %v3046 = vpop.f32.mrb[0].mxu0
      %3047 = vdwg.mxu0
      %3048 = vmatprep.subr.mxu0 0.0
      %3049 = vmatpush1.xpose.msra.mxu0 %v2635
      %3050 = vmatprep.subr.mxu0 0.0
      %3051 = vmatpush1.xpose.msra.mxu0 %v2641
      %3052 = vmatprep.subr.mxu0 0.0
      %3053 = vmatpush1.xpose.msra.mxu0 %v2647
      %3054 = vmatprep.subr.mxu0 0.0
      %3055 = vmatpush1.xpose.msra.mxu0 %v2653
      %3056 = vmatprep.subr.mxu0 0.0
      %3057 = vmatpush1.xpose.msra.mxu0 %v2659
      %3058 = vmatprep.subr.mxu0 0.0
      %3059 = vmatpush1.xpose.msra.mxu0 %v2665
      %3060 = vmatprep.subr.mxu0 0.0
      %3061 = vmatpush1.xpose.msra.mxu0 %v2671
      %3062 = vmatprep.subr.mxu0 0.0
      %3063 = vmatpush1.xpose.msra.mxu0 %v2677
      %3064 = vmatprep.subr.mxu0 0.0
      %3065 = vmatpush1.xpose.msra.mxu0 %v2683
      %3066 = vmatprep.subr.mxu0 0.0
      %3067 = vmatpush1.xpose.msra.mxu0 %v2689
      %3068 = vmatprep.subr.mxu0 0.0
      %3069 = vmatpush1.xpose.msra.mxu0 %v2695
      %3070 = vmatprep.subr.mxu0 0.0
      %3071 = vmatpush1.xpose.msra.mxu0 %v2701
      %3072 = vmatprep.subr.mxu0 0.0
      %3073 = vmatpush1.xpose.msra.mxu0 %v2707
      %3074 = vmatprep.subr.mxu0 0.0
      %3075 = vmatpush1.xpose.msra.mxu0 %v2713
      %3076 = vmatprep.subr.mxu0 0.0
      %3077 = vmatpush1.xpose.msra.mxu0 %v2719
      %3078 = vmatprep.subr.mxu0 0.0
      %3079 = vmatpush1.xpose.msra.mxu0 %v2725
      %3080 = vmatprep.subr.mxu0 0.0
      %3081 = vmatpush1.xpose.msra.mxu0 %v2731
      %3082 = vmatprep.subr.mxu0 0.0
      %3083 = vmatpush1.xpose.msra.mxu0 %v2737
      %3084 = vmatprep.subr.mxu0 0.0
      %3085 = vmatpush1.xpose.msra.mxu0 %v2743
      %3086 = vmatprep.subr.mxu0 0.0
      %3087 = vmatpush1.xpose.msra.mxu0 %v2749
      %3088 = vmatprep.subr.mxu0 0.0
      %3089 = vmatpush1.xpose.msra.mxu0 %v2755
      %3090 = vmatprep.subr.mxu0 0.0
      %3091 = vmatpush1.xpose.msra.mxu0 %v2761
      %3092 = vmatprep.subr.mxu0 0.0
      %3093 = vmatpush1.xpose.msra.mxu0 %v2767
      %3094 = vmatprep.subr.mxu0 0.0
      %3095 = vmatpush1.xpose.msra.mxu0 %v2773
      %3096 = vmatprep.subr.mxu0 0.0
      %3097 = vmatpush1.xpose.msra.mxu0 %v2779
      %3098 = vmatprep.subr.mxu0 0.0
      %3099 = vmatpush1.xpose.msra.mxu0 %v2785
      %3100 = vmatprep.subr.mxu0 0.0
      %3101 = vmatpush1.xpose.msra.mxu0 %v2791
      %3102 = vmatprep.subr.mxu0 0.0
      %3103 = vmatpush1.xpose.msra.mxu0 %v2797
      %3104 = vmatprep.subr.mxu0 0.0
      %3105 = vmatpush1.xpose.msra.mxu0 %v2803
      %3106 = vmatprep.subr.mxu0 0.0
      %3107 = vmatpush1.xpose.msra.mxu0 %v2809
      %3108 = vmatprep.subr.mxu0 0.0
      %3109 = vmatpush1.xpose.msra.mxu0 %v2815
      %3110 = vmatprep.subr.mxu0 0.0
      %3111 = vmatpush1.xpose.msra.mxu0 %v2821
      %3112 = vmatprep.mubr.f32.mxu0 0.0
      %3113 = vmatmul.mubr.f32.gmra.mrb[0].mxu0 %v2633
      %v3114 = vpop.f32.mrb[0].mxu0
      %v3115 = vadd.f32 0.0, %v3114
      %v3116 = vpop.f32.mrb[0].mxu0
      %v3117 = vadd.f32 0.0, %v3116
      %3118 = vmatprep.mubr.f32.mxu0 0.0
      %3119 = vmatmul.mubr.f32.gmra.mrb[0].mxu0 %v2639
      %v3120 = vpop.f32.mrb[0].mxu0
      %v3121 = vadd.f32 0.0, %v3120
      %v3122 = vpop.f32.mrb[0].mxu0
      %v3123 = vadd.f32 0.0, %v3122
      %3124 = vmatprep.mubr.f32.mxu0 0.0
      %3125 = vmatmul.mubr.f32.gmra.mrb[0].mxu0 %v2645
      %v3126 = vpop.f32.mrb[0].mxu0
      %v3127 = vadd.f32 0.0, %v3126
      %v3128 = vpop.f32.mrb[0].mxu0
      %v3129 = vadd.f32 0.0, %v3128
      %3130 = vmatprep.mubr.f32.mxu0 0.0
      %3131 = vmatmul.mubr.f32.gmra.mrb[0].mxu0 %v2651
      %v3132 = vpop.f32.mrb[0].mxu0
      %v3133 = vadd.f32 0.0, %v3132
      %v3134 = vpop.f32.mrb[0].mxu0
      %v3135 = vadd.f32 0.0, %v3134
      %3136 = vmatprep.mubr.f32.mxu0 0.0
      %3137 = vmatmul.mubr.f32.gmra.mrb[0].mxu0 %v2657
      %v3138 = vpop.f32.mrb[0].mxu0
      %v3139 = vadd.f32 0.0, %v3138
      %v3140 = vpop.f32.mrb[0].mxu0
      %v3141 = vadd.f32 0.0, %v3140
      %3142 = vmatprep.mubr.f32.mxu0 0.0
      %3143 = vmatmul.mubr.f32.gmra.mrb[0].mxu0 %v2663
      %v3144 = vpop.f32.mrb[0].mxu0
      %v3145 = vadd.f32 0.0, %v3144
      %v3146 = vpop.f32.mrb[0].mxu0
      %v3147 = vadd.f32 0.0, %v3146
      %3148 = vmatprep.mubr.f32.mxu0 0.0
      %3149 = vmatmul.mubr.f32.gmra.mrb[0].mxu0 %v2669
      %v3150 = vpop.f32.mrb[0].mxu0
      %v3151 = vadd.f32 0.0, %v3150
      %v3152 = vpop.f32.mrb[0].mxu0
      %v3153 = vadd.f32 0.0, %v3152
      %3154 = vmatprep.mubr.f32.mxu0 0.0
      %3155 = vmatmul.mubr.f32.gmra.mrb[0].mxu0 %v2675
      %v3156 = vpop.f32.mrb[0].mxu0
      %v3157 = vadd.f32 0.0, %v3156
      %v3158 = vpop.f32.mrb[0].mxu0
      %v3159 = vadd.f32 0.0, %v3158
      %3160 = vmatprep.mubr.f32.mxu0 0.0
      %3161 = vmatmul.mubr.f32.gmra.mrb[0].mxu0 %v2681
      %v3162 = vpop.f32.mrb[0].mxu0
      %v3163 = vadd.f32 0.0, %v3162
      %v3164 = vpop.f32.mrb[0].mxu0
      %v3165 = vadd.f32 0.0, %v3164
      %3166 = vmatprep.mubr.f32.mxu0 0.0
      %3167 = vmatmul.mubr.f32.gmra.mrb[0].mxu0 %v2687
      %v3168 = vpop.f32.mrb[0].mxu0
      %v3169 = vadd.f32 0.0, %v3168
      %v3170 = vpop.f32.mrb[0].mxu0
      %v3171 = vadd.f32 0.0, %v3170
      %3172 = vmatprep.mubr.f32.mxu0 0.0
      %3173 = vmatmul.mubr.f32.gmra.mrb[0].mxu0 %v2693
      %v3174 = vpop.f32.mrb[0].mxu0
      %v3175 = vadd.f32 0.0, %v3174
      %v3176 = vpop.f32.mrb[0].mxu0
      %v3177 = vadd.f32 0.0, %v3176
      %3178 = vmatprep.mubr.f32.mxu0 0.0
      %3179 = vmatmul.mubr.f32.gmra.mrb[0].mxu0 %v2699
      %v3180 = vpop.f32.mrb[0].mxu0
      %v3181 = vadd.f32 0.0, %v3180
      %v3182 = vpop.f32.mrb[0].mxu0
      %v3183 = vadd.f32 0.0, %v3182
      %3184 = vmatprep.mubr.f32.mxu0 0.0
      %3185 = vmatmul.mubr.f32.gmra.mrb[0].mxu0 %v2705
      %v3186 = vpop.f32.mrb[0].mxu0
      %v3187 = vadd.f32 0.0, %v3186
      %v3188 = vpop.f32.mrb[0].mxu0
      %v3189 = vadd.f32 0.0, %v3188
      %3190 = vmatprep.mubr.f32.mxu0 0.0
      %3191 = vmatmul.mubr.f32.gmra.mrb[0].mxu0 %v2711
      %v3192 = vpop.f32.mrb[0].mxu0
      %v3193 = vadd.f32 0.0, %v3192
      %v3194 = vpop.f32.mrb[0].mxu0
      %v3195 = vadd.f32 0.0, %v3194
      %3196 = vmatprep.mubr.f32.mxu0 0.0
      %3197 = vmatmul.mubr.f32.gmra.mrb[0].mxu0 %v2717
      %v3198 = vpop.f32.mrb[0].mxu0
      %v3199 = vadd.f32 0.0, %v3198
      %v3200 = vpop.f32.mrb[0].mxu0
      %v3201 = vadd.f32 0.0, %v3200
      %3202 = vmatprep.mubr.f32.mxu0 0.0
      %3203 = vmatmul.mubr.f32.gmra.mrb[0].mxu0 %v2723
      %v3204 = vpop.f32.mrb[0].mxu0
      %v3205 = vadd.f32 0.0, %v3204
      %v3206 = vpop.f32.mrb[0].mxu0
      %v3207 = vadd.f32 0.0, %v3206
      %3208 = vmatprep.mubr.f32.mxu0 0.0
      %3209 = vmatmul.mubr.f32.gmra.mrb[0].mxu0 %v2729
      %v3210 = vpop.f32.mrb[0].mxu0
      %v3211 = vadd.f32 0.0, %v3210
      %v3212 = vpop.f32.mrb[0].mxu0
      %v3213 = vadd.f32 0.0, %v3212
      %3214 = vmatprep.mubr.f32.mxu0 0.0
      %3215 = vmatmul.mubr.f32.gmra.mrb[0].mxu0 %v2735
      %v3216 = vpop.f32.mrb[0].mxu0
      %v3217 = vadd.f32 0.0, %v3216
      %v3218 = vpop.f32.mrb[0].mxu0
      %v3219 = vadd.f32 0.0, %v3218
      %3220 = vmatprep.mubr.f32.mxu0 0.0
      %3221 = vmatmul.mubr.f32.gmra.mrb[0].mxu0 %v2741
      %v3222 = vpop.f32.mrb[0].mxu0
      %v3223 = vadd.f32 0.0, %v3222
      %v3224 = vpop.f32.mrb[0].mxu0
      %v3225 = vadd.f32 0.0, %v3224
      %3226 = vmatprep.mubr.f32.mxu0 0.0
      %3227 = vmatmul.mubr.f32.gmra.mrb[0].mxu0 %v2747
      %v3228 = vpop.f32.mrb[0].mxu0
      %v3229 = vadd.f32 0.0, %v3228
      %v3230 = vpop.f32.mrb[0].mxu0
      %v3231 = vadd.f32 0.0, %v3230
      %3232 = vmatprep.mubr.f32.mxu0 0.0
      %3233 = vmatmul.mubr.f32.gmra.mrb[0].mxu0 %v2753
      %v3234 = vpop.f32.mrb[0].mxu0
      %v3235 = vadd.f32 0.0, %v3234
      %v3236 = vpop.f32.mrb[0].mxu0
      %v3237 = vadd.f32 0.0, %v3236
      %3238 = vmatprep.mubr.f32.mxu0 0.0
      %3239 = vmatmul.mubr.f32.gmra.mrb[0].mxu0 %v2759
      %v3240 = vpop.f32.mrb[0].mxu0
      %v3241 = vadd.f32 0.0, %v3240
      %v3242 = vpop.f32.mrb[0].mxu0
      %v3243 = vadd.f32 0.0, %v3242
      %3244 = vmatprep.mubr.f32.mxu0 0.0
      %3245 = vmatmul.mubr.f32.gmra.mrb[0].mxu0 %v2765
      %v3246 = vpop.f32.mrb[0].mxu0
      %v3247 = vadd.f32 0.0, %v3246
      %v3248 = vpop.f32.mrb[0].mxu0
      %v3249 = vadd.f32 0.0, %v3248
      %3250 = vmatprep.mubr.f32.mxu0 0.0
      %3251 = vmatmul.mubr.f32.gmra.mrb[0].mxu0 %v2771
      %v3252 = vpop.f32.mrb[0].mxu0
      %v3253 = vadd.f32 0.0, %v3252
      %v3254 = vpop.f32.mrb[0].mxu0
      %v3255 = vadd.f32 0.0, %v3254
      %3256 = vmatprep.mubr.f32.mxu0 0.0
      %3257 = vmatmul.mubr.f32.gmra.mrb[0].mxu0 %v2777
      %v3258 = vpop.f32.mrb[0].mxu0
      %v3259 = vadd.f32 0.0, %v3258
      %v3260 = vpop.f32.mrb[0].mxu0
      %v3261 = vadd.f32 0.0, %v3260
      %3262 = vmatprep.mubr.f32.mxu0 0.0
      %3263 = vmatmul.mubr.f32.gmra.mrb[0].mxu0 %v2783
      %v3264 = vpop.f32.mrb[0].mxu0
      %v3265 = vadd.f32 0.0, %v3264
      %v3266 = vpop.f32.mrb[0].mxu0
      %v3267 = vadd.f32 0.0, %v3266
      %3268 = vmatprep.mubr.f32.mxu0 0.0
      %3269 = vmatmul.mubr.f32.gmra.mrb[0].mxu0 %v2789
      %v3270 = vpop.f32.mrb[0].mxu0
      %v3271 = vadd.f32 0.0, %v3270
      %v3272 = vpop.f32.mrb[0].mxu0
      %v3273 = vadd.f32 0.0, %v3272
      %3274 = vmatprep.mubr.f32.mxu0 0.0
      %3275 = vmatmul.mubr.f32.gmra.mrb[0].mxu0 %v2795
      %v3276 = vpop.f32.mrb[0].mxu0
      %v3277 = vadd.f32 0.0, %v3276
      %v3278 = vpop.f32.mrb[0].mxu0
      %v3279 = vadd.f32 0.0, %v3278
      %3280 = vmatprep.mubr.f32.mxu0 0.0
      %3281 = vmatmul.mubr.f32.gmra.mrb[0].mxu0 %v2801
      %v3282 = vpop.f32.mrb[0].mxu0
      %v3283 = vadd.f32 0.0, %v3282
      %v3284 = vpop.f32.mrb[0].mxu0
      %v3285 = vadd.f32 0.0, %v3284
      %3286 = vmatprep.mubr.f32.mxu0 0.0
      %3287 = vmatmul.mubr.f32.gmra.mrb[0].mxu0 %v2807
      %v3288 = vpop.f32.mrb[0].mxu0
      %v3289 = vadd.f32 0.0, %v3288
      %v3290 = vpop.f32.mrb[0].mxu0
      %v3291 = vadd.f32 0.0, %v3290
      %3292 = vmatprep.mubr.f32.mxu0 0.0
      %3293 = vmatmul.mubr.f32.gmra.mrb[0].mxu0 %v2813
      %v3294 = vpop.f32.mrb[0].mxu0
      %v3295 = vadd.f32 0.0, %v3294
      %v3296 = vpop.f32.mrb[0].mxu0
      %v3297 = vadd.f32 0.0, %v3296
      %3298 = vmatprep.mubr.f32.mxu0 0.0
      %3299 = vmatmul.mubr.f32.gmra.mrb[0].mxu0 %v2819
      %v3300 = vpop.f32.mrb[0].mxu0
      %v3301 = vadd.f32 0.0, %v3300
      %v3302 = vpop.f32.mrb[0].mxu0
      %v3303 = vadd.f32 0.0, %v3302
      %3304 = vdwg.mxu0
      %v3305 = vmul.f32 %v3115, 0.25
      %v3306 = vmul.f32 %v3117, 0.25
      %v3307 = vmul.f32 %v3121, 0.25
      %v3308 = vmul.f32 %v3123, 0.25
      %v3309 = vmul.f32 %v3127, 0.25
      %v3310 = vmul.f32 %v3129, 0.25
      %v3311 = vmul.f32 %v3133, 0.25
      %v3312 = vmul.f32 %v3135, 0.25
      %v3313 = vmul.f32 %v3139, 0.25
      %v3314 = vmul.f32 %v3141, 0.25
      %v3315 = vmul.f32 %v3145, 0.25
      %v3316 = vmul.f32 %v3147, 0.25
      %v3317 = vmul.f32 %v3151, 0.25
      %v3318 = vmul.f32 %v3153, 0.25
      %v3319 = vmul.f32 %v3157, 0.25
      %v3320 = vmul.f32 %v3159, 0.25
      %v3321 = vmul.f32 %v3163, 0.25
      %v3322 = vmul.f32 %v3165, 0.25
      %v3323 = vmul.f32 %v3169, 0.25
      %v3324 = vmul.f32 %v3171, 0.25
      %v3325 = vmul.f32 %v3175, 0.25
      %v3326 = vmul.f32 %v3177, 0.25
      %v3327 = vmul.f32 %v3181, 0.25
      %v3328 = vmul.f32 %v3183, 0.25
      %v3329 = vmul.f32 %v3187, 0.25
      %v3330 = vmul.f32 %v3189, 0.25
      %v3331 = vmul.f32 %v3193, 0.25
      %v3332 = vmul.f32 %v3195, 0.25
      %v3333 = vmul.f32 %v3199, 0.25
      %v3334 = vmul.f32 %v3201, 0.25
      %v3335 = vmul.f32 %v3205, 0.25
      %v3336 = vmul.f32 %v3207, 0.25
      %v3337 = vmul.f32 %v3211, 0.25
      %v3338 = vmul.f32 %v3213, 0.25
      %v3339 = vmul.f32 %v3217, 0.25
      %v3340 = vmul.f32 %v3219, 0.25
      %v3341 = vmul.f32 %v3223, 0.25
      %v3342 = vmul.f32 %v3225, 0.25
      %v3343 = vmul.f32 %v3229, 0.25
      %v3344 = vmul.f32 %v3231, 0.25
      %v3345 = vmul.f32 %v3235, 0.25
      %v3346 = vmul.f32 %v3237, 0.25
      %v3347 = vmul.f32 %v3241, 0.25
      %v3348 = vmul.f32 %v3243, 0.25
      %v3349 = vmul.f32 %v3247, 0.25
      %v3350 = vmul.f32 %v3249, 0.25
      %v3351 = vmul.f32 %v3253, 0.25
      %v3352 = vmul.f32 %v3255, 0.25
      %v3353 = vmul.f32 %v3259, 0.25
      %v3354 = vmul.f32 %v3261, 0.25
      %v3355 = vmul.f32 %v3265, 0.25
      %v3356 = vmul.f32 %v3267, 0.25
      %v3357 = vmul.f32 %v3271, 0.25
      %v3358 = vmul.f32 %v3273, 0.25
      %v3359 = vmul.f32 %v3277, 0.25
      %v3360 = vmul.f32 %v3279, 0.25
      %v3361 = vmul.f32 %v3283, 0.25
      %v3362 = vmul.f32 %v3285, 0.25
      %v3363 = vmul.f32 %v3289, 0.25
      %v3364 = vmul.f32 %v3291, 0.25
      %v3365 = vmul.f32 %v3295, 0.25
      %v3366 = vmul.f32 %v3297, 0.25
      %v3367 = vmul.f32 %v3301, 0.25
      %v3368 = vmul.f32 %v3303, 0.25
      %v3369 = vsel %vm531, %v3305, -1e+30
      %v3370 = vsel %vm532, %v3306, -1e+30
      %v3371 = vsel %vm533, %v3307, -1e+30
      %v3372 = vsel %vm534, %v3308, -1e+30
      %v3373 = vsel %vm535, %v3309, -1e+30
      %v3374 = vsel %vm536, %v3310, -1e+30
      %v3375 = vsel %vm537, %v3311, -1e+30
      %v3376 = vsel %vm538, %v3312, -1e+30
      %v3377 = vsel %vm539, %v3313, -1e+30
      %v3378 = vsel %vm540, %v3314, -1e+30
      %v3379 = vsel %vm541, %v3315, -1e+30
      %v3380 = vsel %vm542, %v3316, -1e+30
      %v3381 = vsel %vm543, %v3317, -1e+30
      %v3382 = vsel %vm544, %v3318, -1e+30
      %v3383 = vsel %vm545, %v3319, -1e+30
      %v3384 = vsel %vm546, %v3320, -1e+30
      %v3385 = vsel %vm547, %v3321, -1e+30
      %v3386 = vsel %vm548, %v3322, -1e+30
      %v3387 = vsel %vm549, %v3323, -1e+30
      %v3388 = vsel %vm550, %v3324, -1e+30
      %v3389 = vsel %vm551, %v3325, -1e+30
      %v3390 = vsel %vm552, %v3326, -1e+30
      %v3391 = vsel %vm553, %v3327, -1e+30
      %v3392 = vsel %vm554, %v3328, -1e+30
      %v3393 = vsel %vm555, %v3329, -1e+30
      %v3394 = vsel %vm556, %v3330, -1e+30
      %v3395 = vsel %vm557, %v3331, -1e+30
      %v3396 = vsel %vm558, %v3332, -1e+30
      %v3397 = vsel %vm559, %v3333, -1e+30
      %v3398 = vsel %vm560, %v3334, -1e+30
      %v3399 = vsel %vm561, %v3335, -1e+30
      %v3400 = vsel %vm562, %v3336, -1e+30
      %v3401 = vsel %vm563, %v3337, -1e+30
      %v3402 = vsel %vm564, %v3338, -1e+30
      %v3403 = vsel %vm565, %v3339, -1e+30
      %v3404 = vsel %vm566, %v3340, -1e+30
      %v3405 = vsel %vm567, %v3341, -1e+30
      %v3406 = vsel %vm568, %v3342, -1e+30
      %v3407 = vsel %vm569, %v3343, -1e+30
      %v3408 = vsel %vm570, %v3344, -1e+30
      %v3409 = vsel %vm571, %v3345, -1e+30
      %v3410 = vsel %vm572, %v3346, -1e+30
      %v3411 = vsel %vm573, %v3347, -1e+30
      %v3412 = vsel %vm574, %v3348, -1e+30
      %v3413 = vsel %vm575, %v3349, -1e+30
      %v3414 = vsel %vm576, %v3350, -1e+30
      %v3415 = vsel %vm577, %v3351, -1e+30
      %v3416 = vsel %vm578, %v3352, -1e+30
      %v3417 = vsel %vm579, %v3353, -1e+30
      %v3418 = vsel %vm580, %v3354, -1e+30
      %v3419 = vsel %vm581, %v3355, -1e+30
      %v3420 = vsel %vm582, %v3356, -1e+30
      %v3421 = vsel %vm583, %v3357, -1e+30
      %v3422 = vsel %vm584, %v3358, -1e+30
      %v3423 = vsel %vm585, %v3359, -1e+30
      %v3424 = vsel %vm586, %v3360, -1e+30
      %v3425 = vsel %vm587, %v3361, -1e+30
      %v3426 = vsel %vm588, %v3362, -1e+30
      %v3427 = vsel %vm589, %v3363, -1e+30
      %v3428 = vsel %vm590, %v3364, -1e+30
      %v3429 = vsel %vm591, %v3365, -1e+30
      %v3430 = vsel %vm592, %v3366, -1e+30
      %v3431 = vsel %vm593, %v3367, -1e+30
      %v3432 = vsel %vm594, %v3368, -1e+30
      %v3433 = vmax.f32 %v3369, %v3370
      %3434 = vmax.xlane.f32.xlu0 %v3433
      %v3435 = vpop.xlane.xlu0 %3434
      %v3436 = vmax.f32 %v3371, %v3372
      %3437 = vmax.xlane.f32.xlu0 %v3436
      %v3438 = vpop.xlane.xlu0 %3437
      %v3439 = vmax.f32 %v3373, %v3374
      %3440 = vmax.xlane.f32.xlu0 %v3439
      %v3441 = vpop.xlane.xlu0 %3440
      %v3442 = vmax.f32 %v3375, %v3376
      %3443 = vmax.xlane.f32.xlu0 %v3442
      %v3444 = vpop.xlane.xlu0 %3443
      %v3445 = vmax.f32 %v3377, %v3378
      %3446 = vmax.xlane.f32.xlu0 %v3445
      %v3447 = vpop.xlane.xlu0 %3446
      %v3448 = vmax.f32 %v3379, %v3380
      %3449 = vmax.xlane.f32.xlu0 %v3448
      %v3450 = vpop.xlane.xlu0 %3449
      %v3451 = vmax.f32 %v3381, %v3382
      %3452 = vmax.xlane.f32.xlu0 %v3451
      %v3453 = vpop.xlane.xlu0 %3452
      %v3454 = vmax.f32 %v3383, %v3384
      %3455 = vmax.xlane.f32.xlu0 %v3454
      %v3456 = vpop.xlane.xlu0 %3455
      %v3457 = vmax.f32 %v3385, %v3386
      %3458 = vmax.xlane.f32.xlu0 %v3457
      %v3459 = vpop.xlane.xlu0 %3458
      %v3460 = vmax.f32 %v3387, %v3388
      %3461 = vmax.xlane.f32.xlu0 %v3460
      %v3462 = vpop.xlane.xlu0 %3461
      %v3463 = vmax.f32 %v3389, %v3390
      %3464 = vmax.xlane.f32.xlu0 %v3463
      %v3465 = vpop.xlane.xlu0 %3464
      %v3466 = vmax.f32 %v3391, %v3392
      %3467 = vmax.xlane.f32.xlu0 %v3466
      %v3468 = vpop.xlane.xlu0 %3467
      %v3469 = vmax.f32 %v3393, %v3394
      %3470 = vmax.xlane.f32.xlu0 %v3469
      %v3471 = vpop.xlane.xlu0 %3470
      %v3472 = vmax.f32 %v3395, %v3396
      %3473 = vmax.xlane.f32.xlu0 %v3472
      %v3474 = vpop.xlane.xlu0 %3473
      %v3475 = vmax.f32 %v3397, %v3398
      %3476 = vmax.xlane.f32.xlu0 %v3475
      %v3477 = vpop.xlane.xlu0 %3476
      %v3478 = vmax.f32 %v3399, %v3400
      %3479 = vmax.xlane.f32.xlu0 %v3478
      %v3480 = vpop.xlane.xlu0 %3479
      %v3481 = vmax.f32 %v3401, %v3402
      %3482 = vmax.xlane.f32.xlu0 %v3481
      %v3483 = vpop.xlane.xlu0 %3482
      %v3484 = vmax.f32 %v3403, %v3404
      %3485 = vmax.xlane.f32.xlu0 %v3484
      %v3486 = vpop.xlane.xlu0 %3485
      %v3487 = vmax.f32 %v3405, %v3406
      %3488 = vmax.xlane.f32.xlu0 %v3487
      %v3489 = vpop.xlane.xlu0 %3488
      %v3490 = vmax.f32 %v3407, %v3408
      %3491 = vmax.xlane.f32.xlu0 %v3490
      %v3492 = vpop.xlane.xlu0 %3491
      %v3493 = vmax.f32 %v3409, %v3410
      %3494 = vmax.xlane.f32.xlu0 %v3493
      %v3495 = vpop.xlane.xlu0 %3494
      %v3496 = vmax.f32 %v3411, %v3412
      %3497 = vmax.xlane.f32.xlu0 %v3496
      %v3498 = vpop.xlane.xlu0 %3497
      %v3499 = vmax.f32 %v3413, %v3414
      %3500 = vmax.xlane.f32.xlu0 %v3499
      %v3501 = vpop.xlane.xlu0 %3500
      %v3502 = vmax.f32 %v3415, %v3416
      %3503 = vmax.xlane.f32.xlu0 %v3502
      %v3504 = vpop.xlane.xlu0 %3503
      %v3505 = vmax.f32 %v3417, %v3418
      %3506 = vmax.xlane.f32.xlu0 %v3505
      %v3507 = vpop.xlane.xlu0 %3506
      %v3508 = vmax.f32 %v3419, %v3420
      %3509 = vmax.xlane.f32.xlu0 %v3508
      %v3510 = vpop.xlane.xlu0 %3509
      %v3511 = vmax.f32 %v3421, %v3422
      %3512 = vmax.xlane.f32.xlu0 %v3511
      %v3513 = vpop.xlane.xlu0 %3512
      %v3514 = vmax.f32 %v3423, %v3424
      %3515 = vmax.xlane.f32.xlu0 %v3514
      %v3516 = vpop.xlane.xlu0 %3515
      %v3517 = vmax.f32 %v3425, %v3426
      %3518 = vmax.xlane.f32.xlu0 %v3517
      %v3519 = vpop.xlane.xlu0 %3518
      %v3520 = vmax.f32 %v3427, %v3428
      %3521 = vmax.xlane.f32.xlu0 %v3520
      %v3522 = vpop.xlane.xlu0 %3521
      %v3523 = vmax.f32 %v3429, %v3430
      %3524 = vmax.xlane.f32.xlu0 %v3523
      %v3525 = vpop.xlane.xlu0 %3524
      %v3526 = vmax.f32 %v3431, %v3432
      %3527 = vmax.xlane.f32.xlu0 %v3526
      %v3528 = vpop.xlane.xlu0 %3527
      %v3529 = vsub.f32 %v3369, %v3435
      %v3530 = vsub.f32 %v3370, %v3435
      %v3531 = vsub.f32 %v3371, %v3438
      %v3532 = vsub.f32 %v3372, %v3438
      %v3533 = vsub.f32 %v3373, %v3441
      %v3534 = vsub.f32 %v3374, %v3441
      %v3535 = vsub.f32 %v3375, %v3444
      %v3536 = vsub.f32 %v3376, %v3444
      %v3537 = vsub.f32 %v3377, %v3447
      %v3538 = vsub.f32 %v3378, %v3447
      %v3539 = vsub.f32 %v3379, %v3450
      %v3540 = vsub.f32 %v3380, %v3450
      %v3541 = vsub.f32 %v3381, %v3453
      %v3542 = vsub.f32 %v3382, %v3453
      %v3543 = vsub.f32 %v3383, %v3456
      %v3544 = vsub.f32 %v3384, %v3456
      %v3545 = vsub.f32 %v3385, %v3459
      %v3546 = vsub.f32 %v3386, %v3459
      %v3547 = vsub.f32 %v3387, %v3462
      %v3548 = vsub.f32 %v3388, %v3462
      %v3549 = vsub.f32 %v3389, %v3465
      %v3550 = vsub.f32 %v3390, %v3465
      %v3551 = vsub.f32 %v3391, %v3468
      %v3552 = vsub.f32 %v3392, %v3468
      %v3553 = vsub.f32 %v3393, %v3471
      %v3554 = vsub.f32 %v3394, %v3471
      %v3555 = vsub.f32 %v3395, %v3474
      %v3556 = vsub.f32 %v3396, %v3474
      %v3557 = vsub.f32 %v3397, %v3477
      %v3558 = vsub.f32 %v3398, %v3477
      %v3559 = vsub.f32 %v3399, %v3480
      %v3560 = vsub.f32 %v3400, %v3480
      %v3561 = vsub.f32 %v3401, %v3483
      %v3562 = vsub.f32 %v3402, %v3483
      %v3563 = vsub.f32 %v3403, %v3486
      %v3564 = vsub.f32 %v3404, %v3486
      %v3565 = vsub.f32 %v3405, %v3489
      %v3566 = vsub.f32 %v3406, %v3489
      %v3567 = vsub.f32 %v3407, %v3492
      %v3568 = vsub.f32 %v3408, %v3492
      %v3569 = vsub.f32 %v3409, %v3495
      %v3570 = vsub.f32 %v3410, %v3495
      %v3571 = vsub.f32 %v3411, %v3498
      %v3572 = vsub.f32 %v3412, %v3498
      %v3573 = vsub.f32 %v3413, %v3501
      %v3574 = vsub.f32 %v3414, %v3501
      %v3575 = vsub.f32 %v3415, %v3504
      %v3576 = vsub.f32 %v3416, %v3504
      %v3577 = vsub.f32 %v3417, %v3507
      %v3578 = vsub.f32 %v3418, %v3507
      %v3579 = vsub.f32 %v3419, %v3510
      %v3580 = vsub.f32 %v3420, %v3510
      %v3581 = vsub.f32 %v3421, %v3513
      %v3582 = vsub.f32 %v3422, %v3513
      %v3583 = vsub.f32 %v3423, %v3516
      %v3584 = vsub.f32 %v3424, %v3516
      %v3585 = vsub.f32 %v3425, %v3519
      %v3586 = vsub.f32 %v3426, %v3519
      %v3587 = vsub.f32 %v3427, %v3522
      %v3588 = vsub.f32 %v3428, %v3522
      %v3589 = vsub.f32 %v3429, %v3525
      %v3590 = vsub.f32 %v3430, %v3525
      %v3591 = vsub.f32 %v3431, %v3528
      %v3592 = vsub.f32 %v3432, %v3528
      %v3593 = vmul.f32 %v3529, 1.442695
      %v3594 = vpow.pop %v3593
      %v3595 = vmul.f32 %v3530, 1.442695
      %v3596 = vpow.pop %v3595
      %v3597 = vmul.f32 %v3531, 1.442695
      %v3598 = vpow.pop %v3597
      %v3599 = vmul.f32 %v3532, 1.442695
      %v3600 = vpow.pop %v3599
      %v3601 = vmul.f32 %v3533, 1.442695
      %v3602 = vpow.pop %v3601
      %v3603 = vmul.f32 %v3534, 1.442695
      %v3604 = vpow.pop %v3603
      %v3605 = vmul.f32 %v3535, 1.442695
      %v3606 = vpow.pop %v3605
      %v3607 = vmul.f32 %v3536, 1.442695
      %v3608 = vpow.pop %v3607
      %v3609 = vmul.f32 %v3537, 1.442695
      %v3610 = vpow.pop %v3609
      %v3611 = vmul.f32 %v3538, 1.442695
      %v3612 = vpow.pop %v3611
      %v3613 = vmul.f32 %v3539, 1.442695
      %v3614 = vpow.pop %v3613
      %v3615 = vmul.f32 %v3540, 1.442695
      %v3616 = vpow.pop %v3615
      %v3617 = vmul.f32 %v3541, 1.442695
      %v3618 = vpow.pop %v3617
      %v3619 = vmul.f32 %v3542, 1.442695
      %v3620 = vpow.pop %v3619
      %v3621 = vmul.f32 %v3543, 1.442695
      %v3622 = vpow.pop %v3621
      %v3623 = vmul.f32 %v3544, 1.442695
      %v3624 = vpow.pop %v3623
      %v3625 = vmul.f32 %v3545, 1.442695
      %v3626 = vpow.pop %v3625
      %v3627 = vmul.f32 %v3546, 1.442695
      %v3628 = vpow.pop %v3627
      %v3629 = vmul.f32 %v3547, 1.442695
      %v3630 = vpow.pop %v3629
      %v3631 = vmul.f32 %v3548, 1.442695
      %v3632 = vpow.pop %v3631
      %v3633 = vmul.f32 %v3549, 1.442695
      %v3634 = vpow.pop %v3633
      %v3635 = vmul.f32 %v3550, 1.442695
      %v3636 = vpow.pop %v3635
      %v3637 = vmul.f32 %v3551, 1.442695
      %v3638 = vpow.pop %v3637
      %v3639 = vmul.f32 %v3552, 1.442695
      %v3640 = vpow.pop %v3639
      %v3641 = vmul.f32 %v3553, 1.442695
      %v3642 = vpow.pop %v3641
      %v3643 = vmul.f32 %v3554, 1.442695
      %v3644 = vpow.pop %v3643
      %v3645 = vmul.f32 %v3555, 1.442695
      %v3646 = vpow.pop %v3645
      %v3647 = vmul.f32 %v3556, 1.442695
      %v3648 = vpow.pop %v3647
      %v3649 = vmul.f32 %v3557, 1.442695
      %v3650 = vpow.pop %v3649
      %v3651 = vmul.f32 %v3558, 1.442695
      %v3652 = vpow.pop %v3651
      %v3653 = vmul.f32 %v3559, 1.442695
      %v3654 = vpow.pop %v3653
      %v3655 = vmul.f32 %v3560, 1.442695
      %v3656 = vpow.pop %v3655
      %v3657 = vmul.f32 %v3561, 1.442695
      %v3658 = vpow.pop %v3657
      %v3659 = vmul.f32 %v3562, 1.442695
      %v3660 = vpow.pop %v3659
      %v3661 = vmul.f32 %v3563, 1.442695
      %v3662 = vpow.pop %v3661
      %v3663 = vmul.f32 %v3564, 1.442695
      %v3664 = vpow.pop %v3663
      %v3665 = vmul.f32 %v3565, 1.442695
      %v3666 = vpow.pop %v3665
      %v3667 = vmul.f32 %v3566, 1.442695
      %v3668 = vpow.pop %v3667
      %v3669 = vmul.f32 %v3567, 1.442695
      %v3670 = vpow.pop %v3669
      %v3671 = vmul.f32 %v3568, 1.442695
      %v3672 = vpow.pop %v3671
      %v3673 = vmul.f32 %v3569, 1.442695
      %v3674 = vpow.pop %v3673
      %v3675 = vmul.f32 %v3570, 1.442695
      %v3676 = vpow.pop %v3675
      %v3677 = vmul.f32 %v3571, 1.442695
      %v3678 = vpow.pop %v3677
      %v3679 = vmul.f32 %v3572, 1.442695
      %v3680 = vpow.pop %v3679
      %v3681 = vmul.f32 %v3573, 1.442695
      %v3682 = vpow.pop %v3681
      %v3683 = vmul.f32 %v3574, 1.442695
      %v3684 = vpow.pop %v3683
      %v3685 = vmul.f32 %v3575, 1.442695
      %v3686 = vpow.pop %v3685
      %v3687 = vmul.f32 %v3576, 1.442695
      %v3688 = vpow.pop %v3687
      %v3689 = vmul.f32 %v3577, 1.442695
      %v3690 = vpow.pop %v3689
      %v3691 = vmul.f32 %v3578, 1.442695
      %v3692 = vpow.pop %v3691
      %v3693 = vmul.f32 %v3579, 1.442695
      %v3694 = vpow.pop %v3693
      %v3695 = vmul.f32 %v3580, 1.442695
      %v3696 = vpow.pop %v3695
      %v3697 = vmul.f32 %v3581, 1.442695
      %v3698 = vpow.pop %v3697
      %v3699 = vmul.f32 %v3582, 1.442695
      %v3700 = vpow.pop %v3699
      %v3701 = vmul.f32 %v3583, 1.442695
      %v3702 = vpow.pop %v3701
      %v3703 = vmul.f32 %v3584, 1.442695
      %v3704 = vpow.pop %v3703
      %v3705 = vmul.f32 %v3585, 1.442695
      %v3706 = vpow.pop %v3705
      %v3707 = vmul.f32 %v3586, 1.442695
      %v3708 = vpow.pop %v3707
      %v3709 = vmul.f32 %v3587, 1.442695
      %v3710 = vpow.pop %v3709
      %v3711 = vmul.f32 %v3588, 1.442695
      %v3712 = vpow.pop %v3711
      %v3713 = vmul.f32 %v3589, 1.442695
      %v3714 = vpow.pop %v3713
      %v3715 = vmul.f32 %v3590, 1.442695
      %v3716 = vpow.pop %v3715
      %v3717 = vmul.f32 %v3591, 1.442695
      %v3718 = vpow.pop %v3717
      %v3719 = vmul.f32 %v3592, 1.442695
      %v3720 = vpow.pop %v3719
      %v3721 = vadd.f32 %v3594, %v3596
      %3722 = vadd.xlane.f32.xlu0 %v3721
      %v3723 = vpop.xlane.xlu0 %3722
      %v3724 = vadd.f32 %v3598, %v3600
      %3725 = vadd.xlane.f32.xlu0 %v3724
      %v3726 = vpop.xlane.xlu0 %3725
      %v3727 = vadd.f32 %v3602, %v3604
      %3728 = vadd.xlane.f32.xlu0 %v3727
      %v3729 = vpop.xlane.xlu0 %3728
      %v3730 = vadd.f32 %v3606, %v3608
      %3731 = vadd.xlane.f32.xlu0 %v3730
      %v3732 = vpop.xlane.xlu0 %3731
      %v3733 = vadd.f32 %v3610, %v3612
      %3734 = vadd.xlane.f32.xlu0 %v3733
      %v3735 = vpop.xlane.xlu0 %3734
      %v3736 = vadd.f32 %v3614, %v3616
      %3737 = vadd.xlane.f32.xlu0 %v3736
      %v3738 = vpop.xlane.xlu0 %3737
      %v3739 = vadd.f32 %v3618, %v3620
      %3740 = vadd.xlane.f32.xlu0 %v3739
      %v3741 = vpop.xlane.xlu0 %3740
      %v3742 = vadd.f32 %v3622, %v3624
      %3743 = vadd.xlane.f32.xlu0 %v3742
      %v3744 = vpop.xlane.xlu0 %3743
      %v3745 = vadd.f32 %v3626, %v3628
      %3746 = vadd.xlane.f32.xlu0 %v3745
      %v3747 = vpop.xlane.xlu0 %3746
      %v3748 = vadd.f32 %v3630, %v3632
      %3749 = vadd.xlane.f32.xlu0 %v3748
      %v3750 = vpop.xlane.xlu0 %3749
      %v3751 = vadd.f32 %v3634, %v3636
      %3752 = vadd.xlane.f32.xlu0 %v3751
      %v3753 = vpop.xlane.xlu0 %3752
      %v3754 = vadd.f32 %v3638, %v3640
      %3755 = vadd.xlane.f32.xlu0 %v3754
      %v3756 = vpop.xlane.xlu0 %3755
      %v3757 = vadd.f32 %v3642, %v3644
      %3758 = vadd.xlane.f32.xlu0 %v3757
      %v3759 = vpop.xlane.xlu0 %3758
      %v3760 = vadd.f32 %v3646, %v3648
      %3761 = vadd.xlane.f32.xlu0 %v3760
      %v3762 = vpop.xlane.xlu0 %3761
      %v3763 = vadd.f32 %v3650, %v3652
      %3764 = vadd.xlane.f32.xlu0 %v3763
      %v3765 = vpop.xlane.xlu0 %3764
      %v3766 = vadd.f32 %v3654, %v3656
      %3767 = vadd.xlane.f32.xlu0 %v3766
      %v3768 = vpop.xlane.xlu0 %3767
      %v3769 = vadd.f32 %v3658, %v3660
      %3770 = vadd.xlane.f32.xlu0 %v3769
      %v3771 = vpop.xlane.xlu0 %3770
      %v3772 = vadd.f32 %v3662, %v3664
      %3773 = vadd.xlane.f32.xlu0 %v3772
      %v3774 = vpop.xlane.xlu0 %3773
      %v3775 = vadd.f32 %v3666, %v3668
      %3776 = vadd.xlane.f32.xlu0 %v3775
      %v3777 = vpop.xlane.xlu0 %3776
      %v3778 = vadd.f32 %v3670, %v3672
      %3779 = vadd.xlane.f32.xlu0 %v3778
      %v3780 = vpop.xlane.xlu0 %3779
      %v3781 = vadd.f32 %v3674, %v3676
      %3782 = vadd.xlane.f32.xlu0 %v3781
      %v3783 = vpop.xlane.xlu0 %3782
      %v3784 = vadd.f32 %v3678, %v3680
      %3785 = vadd.xlane.f32.xlu0 %v3784
      %v3786 = vpop.xlane.xlu0 %3785
      %v3787 = vadd.f32 %v3682, %v3684
      %3788 = vadd.xlane.f32.xlu0 %v3787
      %v3789 = vpop.xlane.xlu0 %3788
      %v3790 = vadd.f32 %v3686, %v3688
      %3791 = vadd.xlane.f32.xlu0 %v3790
      %v3792 = vpop.xlane.xlu0 %3791
      %v3793 = vadd.f32 %v3690, %v3692
      %3794 = vadd.xlane.f32.xlu0 %v3793
      %v3795 = vpop.xlane.xlu0 %3794
      %v3796 = vadd.f32 %v3694, %v3696
      %3797 = vadd.xlane.f32.xlu0 %v3796
      %v3798 = vpop.xlane.xlu0 %3797
      %v3799 = vadd.f32 %v3698, %v3700
      %3800 = vadd.xlane.f32.xlu0 %v3799
      %v3801 = vpop.xlane.xlu0 %3800
      %v3802 = vadd.f32 %v3702, %v3704
      %3803 = vadd.xlane.f32.xlu0 %v3802
      %v3804 = vpop.xlane.xlu0 %3803
      %v3805 = vadd.f32 %v3706, %v3708
      %3806 = vadd.xlane.f32.xlu0 %v3805
      %v3807 = vpop.xlane.xlu0 %3806
      %v3808 = vadd.f32 %v3710, %v3712
      %3809 = vadd.xlane.f32.xlu0 %v3808
      %v3810 = vpop.xlane.xlu0 %3809
      %v3811 = vadd.f32 %v3714, %v3716
      %3812 = vadd.xlane.f32.xlu0 %v3811
      %v3813 = vpop.xlane.xlu0 %3812
      %v3814 = vadd.f32 %v3718, %v3720
      %3815 = vadd.xlane.f32.xlu0 %v3814
      %v3816 = vpop.xlane.xlu0 %3815
      %v3817 = vrcp.pop %v3723
      %v3818 = vrcp.pop %v3726
      %v3819 = vrcp.pop %v3729
      %v3820 = vrcp.pop %v3732
      %v3821 = vrcp.pop %v3735
      %v3822 = vrcp.pop %v3738
      %v3823 = vrcp.pop %v3741
      %v3824 = vrcp.pop %v3744
      %v3825 = vrcp.pop %v3747
      %v3826 = vrcp.pop %v3750
      %v3827 = vrcp.pop %v3753
      %v3828 = vrcp.pop %v3756
      %v3829 = vrcp.pop %v3759
      %v3830 = vrcp.pop %v3762
      %v3831 = vrcp.pop %v3765
      %v3832 = vrcp.pop %v3768
      %v3833 = vrcp.pop %v3771
      %v3834 = vrcp.pop %v3774
      %v3835 = vrcp.pop %v3777
      %v3836 = vrcp.pop %v3780
      %v3837 = vrcp.pop %v3783
      %v3838 = vrcp.pop %v3786
      %v3839 = vrcp.pop %v3789
      %v3840 = vrcp.pop %v3792
      %v3841 = vrcp.pop %v3795
      %v3842 = vrcp.pop %v3798
      %v3843 = vrcp.pop %v3801
      %v3844 = vrcp.pop %v3804
      %v3845 = vrcp.pop %v3807
      %v3846 = vrcp.pop %v3810
      %v3847 = vrcp.pop %v3813
      %v3848 = vrcp.pop %v3816
      %v3849 = vmul.f32 %v3723, %v3817
      %v3850 = vmul.f32 %v3726, %v3818
      %v3851 = vmul.f32 %v3729, %v3819
      %v3852 = vmul.f32 %v3732, %v3820
      %v3853 = vmul.f32 %v3735, %v3821
      %v3854 = vmul.f32 %v3738, %v3822
      %v3855 = vmul.f32 %v3741, %v3823
      %v3856 = vmul.f32 %v3744, %v3824
      %v3857 = vmul.f32 %v3747, %v3825
      %v3858 = vmul.f32 %v3750, %v3826
      %v3859 = vmul.f32 %v3753, %v3827
      %v3860 = vmul.f32 %v3756, %v3828
      %v3861 = vmul.f32 %v3759, %v3829
      %v3862 = vmul.f32 %v3762, %v3830
      %v3863 = vmul.f32 %v3765, %v3831
      %v3864 = vmul.f32 %v3768, %v3832
      %v3865 = vmul.f32 %v3771, %v3833
      %v3866 = vmul.f32 %v3774, %v3834
      %v3867 = vmul.f32 %v3777, %v3835
      %v3868 = vmul.f32 %v3780, %v3836
      %v3869 = vmul.f32 %v3783, %v3837
      %v3870 = vmul.f32 %v3786, %v3838
      %v3871 = vmul.f32 %v3789, %v3839
      %v3872 = vmul.f32 %v3792, %v3840
      %v3873 = vmul.f32 %v3795, %v3841
      %v3874 = vmul.f32 %v3798, %v3842
      %v3875 = vmul.f32 %v3801, %v3843
      %v3876 = vmul.f32 %v3804, %v3844
      %v3877 = vmul.f32 %v3807, %v3845
      %v3878 = vmul.f32 %v3810, %v3846
      %v3879 = vmul.f32 %v3813, %v3847
      %v3880 = vmul.f32 %v3816, %v3848
      %v3881 = vsub.f32 2.0, %v3849
      %v3882 = vsub.f32 2.0, %v3850
      %v3883 = vsub.f32 2.0, %v3851
      %v3884 = vsub.f32 2.0, %v3852
      %v3885 = vsub.f32 2.0, %v3853
      %v3886 = vsub.f32 2.0, %v3854
      %v3887 = vsub.f32 2.0, %v3855
      %v3888 = vsub.f32 2.0, %v3856
      %v3889 = vsub.f32 2.0, %v3857
      %v3890 = vsub.f32 2.0, %v3858
      %v3891 = vsub.f32 2.0, %v3859
      %v3892 = vsub.f32 2.0, %v3860
      %v3893 = vsub.f32 2.0, %v3861
      %v3894 = vsub.f32 2.0, %v3862
      %v3895 = vsub.f32 2.0, %v3863
      %v3896 = vsub.f32 2.0, %v3864
      %v3897 = vsub.f32 2.0, %v3865
      %v3898 = vsub.f32 2.0, %v3866
      %v3899 = vsub.f32 2.0, %v3867
      %v3900 = vsub.f32 2.0, %v3868
      %v3901 = vsub.f32 2.0, %v3869
      %v3902 = vsub.f32 2.0, %v3870
      %v3903 = vsub.f32 2.0, %v3871
      %v3904 = vsub.f32 2.0, %v3872
      %v3905 = vsub.f32 2.0, %v3873
      %v3906 = vsub.f32 2.0, %v3874
      %v3907 = vsub.f32 2.0, %v3875
      %v3908 = vsub.f32 2.0, %v3876
      %v3909 = vsub.f32 2.0, %v3877
      %v3910 = vsub.f32 2.0, %v3878
      %v3911 = vsub.f32 2.0, %v3879
      %v3912 = vsub.f32 2.0, %v3880
      %v3913 = vmul.f32 %v3817, %v3881
      %v3914 = vmul.f32 %v3818, %v3882
      %v3915 = vmul.f32 %v3819, %v3883
      %v3916 = vmul.f32 %v3820, %v3884
      %v3917 = vmul.f32 %v3821, %v3885
      %v3918 = vmul.f32 %v3822, %v3886
      %v3919 = vmul.f32 %v3823, %v3887
      %v3920 = vmul.f32 %v3824, %v3888
      %v3921 = vmul.f32 %v3825, %v3889
      %v3922 = vmul.f32 %v3826, %v3890
      %v3923 = vmul.f32 %v3827, %v3891
      %v3924 = vmul.f32 %v3828, %v3892
      %v3925 = vmul.f32 %v3829, %v3893
      %v3926 = vmul.f32 %v3830, %v3894
      %v3927 = vmul.f32 %v3831, %v3895
      %v3928 = vmul.f32 %v3832, %v3896
      %v3929 = vmul.f32 %v3833, %v3897
      %v3930 = vmul.f32 %v3834, %v3898
      %v3931 = vmul.f32 %v3835, %v3899
      %v3932 = vmul.f32 %v3836, %v3900
      %v3933 = vmul.f32 %v3837, %v3901
      %v3934 = vmul.f32 %v3838, %v3902
      %v3935 = vmul.f32 %v3839, %v3903
      %v3936 = vmul.f32 %v3840, %v3904
      %v3937 = vmul.f32 %v3841, %v3905
      %v3938 = vmul.f32 %v3842, %v3906
      %v3939 = vmul.f32 %v3843, %v3907
      %v3940 = vmul.f32 %v3844, %v3908
      %v3941 = vmul.f32 %v3845, %v3909
      %v3942 = vmul.f32 %v3846, %v3910
      %v3943 = vmul.f32 %v3847, %v3911
      %v3944 = vmul.f32 %v3848, %v3912
      %v3945 = vmul.f32 %v3594, %v3913
      %v3946 = vmul.f32 %v3596, %v3913
      %v3947 = vmul.f32 %v3598, %v3914
      %v3948 = vmul.f32 %v3600, %v3914
      %v3949 = vmul.f32 %v3602, %v3915
      %v3950 = vmul.f32 %v3604, %v3915
      %v3951 = vmul.f32 %v3606, %v3916
      %v3952 = vmul.f32 %v3608, %v3916
      %v3953 = vmul.f32 %v3610, %v3917
      %v3954 = vmul.f32 %v3612, %v3917
      %v3955 = vmul.f32 %v3614, %v3918
      %v3956 = vmul.f32 %v3616, %v3918
      %v3957 = vmul.f32 %v3618, %v3919
      %v3958 = vmul.f32 %v3620, %v3919
      %v3959 = vmul.f32 %v3622, %v3920
      %v3960 = vmul.f32 %v3624, %v3920
      %v3961 = vmul.f32 %v3626, %v3921
      %v3962 = vmul.f32 %v3628, %v3921
      %v3963 = vmul.f32 %v3630, %v3922
      %v3964 = vmul.f32 %v3632, %v3922
      %v3965 = vmul.f32 %v3634, %v3923
      %v3966 = vmul.f32 %v3636, %v3923
      %v3967 = vmul.f32 %v3638, %v3924
      %v3968 = vmul.f32 %v3640, %v3924
      %v3969 = vmul.f32 %v3642, %v3925
      %v3970 = vmul.f32 %v3644, %v3925
      %v3971 = vmul.f32 %v3646, %v3926
      %v3972 = vmul.f32 %v3648, %v3926
      %v3973 = vmul.f32 %v3650, %v3927
      %v3974 = vmul.f32 %v3652, %v3927
      %v3975 = vmul.f32 %v3654, %v3928
      %v3976 = vmul.f32 %v3656, %v3928
      %v3977 = vmul.f32 %v3658, %v3929
      %v3978 = vmul.f32 %v3660, %v3929
      %v3979 = vmul.f32 %v3662, %v3930
      %v3980 = vmul.f32 %v3664, %v3930
      %v3981 = vmul.f32 %v3666, %v3931
      %v3982 = vmul.f32 %v3668, %v3931
      %v3983 = vmul.f32 %v3670, %v3932
      %v3984 = vmul.f32 %v3672, %v3932
      %v3985 = vmul.f32 %v3674, %v3933
      %v3986 = vmul.f32 %v3676, %v3933
      %v3987 = vmul.f32 %v3678, %v3934
      %v3988 = vmul.f32 %v3680, %v3934
      %v3989 = vmul.f32 %v3682, %v3935
      %v3990 = vmul.f32 %v3684, %v3935
      %v3991 = vmul.f32 %v3686, %v3936
      %v3992 = vmul.f32 %v3688, %v3936
      %v3993 = vmul.f32 %v3690, %v3937
      %v3994 = vmul.f32 %v3692, %v3937
      %v3995 = vmul.f32 %v3694, %v3938
      %v3996 = vmul.f32 %v3696, %v3938
      %v3997 = vmul.f32 %v3698, %v3939
      %v3998 = vmul.f32 %v3700, %v3939
      %v3999 = vmul.f32 %v3702, %v3940
      %v4000 = vmul.f32 %v3704, %v3940
      %v4001 = vmul.f32 %v3706, %v3941
      %v4002 = vmul.f32 %v3708, %v3941
      %v4003 = vmul.f32 %v3710, %v3942
      %v4004 = vmul.f32 %v3712, %v3942
      %v4005 = vmul.f32 %v3714, %v3943
      %v4006 = vmul.f32 %v3716, %v3943
      %v4007 = vmul.f32 %v3718, %v3944
      %v4008 = vmul.f32 %v3720, %v3944
      %4009 = vmatprep.subr.mxu0 0.0
      %4010 = vmatpush1.msra.mxu0 %v2890
      %4011 = vmatprep.subr.mxu0 0.0
      %4012 = vmatpush1.msra.mxu0 %v2895
      %4013 = vmatprep.subr.mxu0 0.0
      %4014 = vmatpush1.msra.mxu0 %v2900
      %4015 = vmatprep.subr.mxu0 0.0
      %4016 = vmatpush1.msra.mxu0 %v2905
      %4017 = vmatprep.subr.mxu0 0.0
      %4018 = vmatpush1.msra.mxu0 %v2910
      %4019 = vmatprep.subr.mxu0 0.0
      %4020 = vmatpush1.msra.mxu0 %v2915
      %4021 = vmatprep.subr.mxu0 0.0
      %4022 = vmatpush1.msra.mxu0 %v2920
      %4023 = vmatprep.subr.mxu0 0.0
      %4024 = vmatpush1.msra.mxu0 %v2925
      %4025 = vmatprep.subr.mxu0 0.0
      %4026 = vmatpush1.msra.mxu0 %v2930
      %4027 = vmatprep.subr.mxu0 0.0
      %4028 = vmatpush1.msra.mxu0 %v2935
      %4029 = vmatprep.subr.mxu0 0.0
      %4030 = vmatpush1.msra.mxu0 %v2940
      %4031 = vmatprep.subr.mxu0 0.0
      %4032 = vmatpush1.msra.mxu0 %v2945
      %4033 = vmatprep.subr.mxu0 0.0
      %4034 = vmatpush1.msra.mxu0 %v2950
      %4035 = vmatprep.subr.mxu0 0.0
      %4036 = vmatpush1.msra.mxu0 %v2955
      %4037 = vmatprep.subr.mxu0 0.0
      %4038 = vmatpush1.msra.mxu0 %v2960
      %4039 = vmatprep.subr.mxu0 0.0
      %4040 = vmatpush1.msra.mxu0 %v2965
      %4041 = vmatprep.subr.mxu0 0.0
      %4042 = vmatpush1.msra.mxu0 %v2970
      %4043 = vmatprep.subr.mxu0 0.0
      %4044 = vmatpush1.msra.mxu0 %v2975
      %4045 = vmatprep.subr.mxu0 0.0
      %4046 = vmatpush1.msra.mxu0 %v2980
      %4047 = vmatprep.subr.mxu0 0.0
      %4048 = vmatpush1.msra.mxu0 %v2985
      %4049 = vmatprep.subr.mxu0 0.0
      %4050 = vmatpush1.msra.mxu0 %v2990
      %4051 = vmatprep.subr.mxu0 0.0
      %4052 = vmatpush1.msra.mxu0 %v2995
      %4053 = vmatprep.subr.mxu0 0.0
      %4054 = vmatpush1.msra.mxu0 %v3000
      %4055 = vmatprep.subr.mxu0 0.0
      %4056 = vmatpush1.msra.mxu0 %v3005
      %4057 = vmatprep.subr.mxu0 0.0
      %4058 = vmatpush1.msra.mxu0 %v3010
      %4059 = vmatprep.subr.mxu0 0.0
      %4060 = vmatpush1.msra.mxu0 %v3015
      %4061 = vmatprep.subr.mxu0 0.0
      %4062 = vmatpush1.msra.mxu0 %v3020
      %4063 = vmatprep.subr.mxu0 0.0
      %4064 = vmatpush1.msra.mxu0 %v3025
      %4065 = vmatprep.subr.mxu0 0.0
      %4066 = vmatpush1.msra.mxu0 %v3030
      %4067 = vmatprep.subr.mxu0 0.0
      %4068 = vmatpush1.msra.mxu0 %v3035
      %4069 = vmatprep.subr.mxu0 0.0
      %4070 = vmatpush1.msra.mxu0 %v3040
      %4071 = vmatprep.subr.mxu0 0.0
      %4072 = vmatpush1.msra.mxu0 %v3045
      %4073 = vmatprep.mubr.f32.mxu0 %v3946
      %4074 = vmatmul.mubr.f32.gmra.mrb[0].mxu0 %v3945
      %v4075 = vpop.f32.mrb[0].mxu0
      %v4076 = vadd.f32 0.0, %v4075
      %v4077 = vpop.f32.mrb[0].mxu0
      %4078 = vmatprep.mubr.f32.mxu0 %v3948
      %4079 = vmatmul.mubr.f32.gmra.mrb[0].mxu0 %v3947
      %v4080 = vpop.f32.mrb[0].mxu0
      %v4081 = vadd.f32 0.0, %v4080
      %v4082 = vpop.f32.mrb[0].mxu0
      %4083 = vmatprep.mubr.f32.mxu0 %v3950
      %4084 = vmatmul.mubr.f32.gmra.mrb[0].mxu0 %v3949
      %v4085 = vpop.f32.mrb[0].mxu0
      %v4086 = vadd.f32 0.0, %v4085
      %v4087 = vpop.f32.mrb[0].mxu0
      %4088 = vmatprep.mubr.f32.mxu0 %v3952
      %4089 = vmatmul.mubr.f32.gmra.mrb[0].mxu0 %v3951
      %v4090 = vpop.f32.mrb[0].mxu0
      %v4091 = vadd.f32 0.0, %v4090
      %v4092 = vpop.f32.mrb[0].mxu0
      %4093 = vmatprep.mubr.f32.mxu0 %v3954
      %4094 = vmatmul.mubr.f32.gmra.mrb[0].mxu0 %v3953
      %v4095 = vpop.f32.mrb[0].mxu0
      %v4096 = vadd.f32 0.0, %v4095
      %v4097 = vpop.f32.mrb[0].mxu0
      %4098 = vmatprep.mubr.f32.mxu0 %v3956
      %4099 = vmatmul.mubr.f32.gmra.mrb[0].mxu0 %v3955
      %v4100 = vpop.f32.mrb[0].mxu0
      %v4101 = vadd.f32 0.0, %v4100
      %v4102 = vpop.f32.mrb[0].mxu0
      %4103 = vmatprep.mubr.f32.mxu0 %v3958
      %4104 = vmatmul.mubr.f32.gmra.mrb[0].mxu0 %v3957
      %v4105 = vpop.f32.mrb[0].mxu0
      %v4106 = vadd.f32 0.0, %v4105
      %v4107 = vpop.f32.mrb[0].mxu0
      %4108 = vmatprep.mubr.f32.mxu0 %v3960
      %4109 = vmatmul.mubr.f32.gmra.mrb[0].mxu0 %v3959
      %v4110 = vpop.f32.mrb[0].mxu0
      %v4111 = vadd.f32 0.0, %v4110
      %v4112 = vpop.f32.mrb[0].mxu0
      %4113 = vmatprep.mubr.f32.mxu0 %v3962
      %4114 = vmatmul.mubr.f32.gmra.mrb[0].mxu0 %v3961
      %v4115 = vpop.f32.mrb[0].mxu0
      %v4116 = vadd.f32 0.0, %v4115
      %v4117 = vpop.f32.mrb[0].mxu0
      %4118 = vmatprep.mubr.f32.mxu0 %v3964
      %4119 = vmatmul.mubr.f32.gmra.mrb[0].mxu0 %v3963
      %v4120 = vpop.f32.mrb[0].mxu0
      %v4121 = vadd.f32 0.0, %v4120
      %v4122 = vpop.f32.mrb[0].mxu0
      %4123 = vmatprep.mubr.f32.mxu0 %v3966
      %4124 = vmatmul.mubr.f32.gmra.mrb[0].mxu0 %v3965
      %v4125 = vpop.f32.mrb[0].mxu0
      %v4126 = vadd.f32 0.0, %v4125
      %v4127 = vpop.f32.mrb[0].mxu0
      %4128 = vmatprep.mubr.f32.mxu0 %v3968
      %4129 = vmatmul.mubr.f32.gmra.mrb[0].mxu0 %v3967
      %v4130 = vpop.f32.mrb[0].mxu0
      %v4131 = vadd.f32 0.0, %v4130
      %v4132 = vpop.f32.mrb[0].mxu0
      %4133 = vmatprep.mubr.f32.mxu0 %v3970
      %4134 = vmatmul.mubr.f32.gmra.mrb[0].mxu0 %v3969
      %v4135 = vpop.f32.mrb[0].mxu0
      %v4136 = vadd.f32 0.0, %v4135
      %v4137 = vpop.f32.mrb[0].mxu0
      %4138 = vmatprep.mubr.f32.mxu0 %v3972
      %4139 = vmatmul.mubr.f32.gmra.mrb[0].mxu0 %v3971
      %v4140 = vpop.f32.mrb[0].mxu0
      %v4141 = vadd.f32 0.0, %v4140
      %v4142 = vpop.f32.mrb[0].mxu0
      %4143 = vmatprep.mubr.f32.mxu0 %v3974
      %4144 = vmatmul.mubr.f32.gmra.mrb[0].mxu0 %v3973
      %v4145 = vpop.f32.mrb[0].mxu0
      %v4146 = vadd.f32 0.0, %v4145
      %v4147 = vpop.f32.mrb[0].mxu0
      %4148 = vmatprep.mubr.f32.mxu0 %v3976
      %4149 = vmatmul.mubr.f32.gmra.mrb[0].mxu0 %v3975
      %v4150 = vpop.f32.mrb[0].mxu0
      %v4151 = vadd.f32 0.0, %v4150
      %v4152 = vpop.f32.mrb[0].mxu0
      %4153 = vmatprep.mubr.f32.mxu0 %v3978
      %4154 = vmatmul.mubr.f32.gmra.mrb[0].mxu0 %v3977
      %v4155 = vpop.f32.mrb[0].mxu0
      %v4156 = vadd.f32 0.0, %v4155
      %v4157 = vpop.f32.mrb[0].mxu0
      %4158 = vmatprep.mubr.f32.mxu0 %v3980
      %4159 = vmatmul.mubr.f32.gmra.mrb[0].mxu0 %v3979
      %v4160 = vpop.f32.mrb[0].mxu0
      %v4161 = vadd.f32 0.0, %v4160
      %v4162 = vpop.f32.mrb[0].mxu0
      %4163 = vmatprep.mubr.f32.mxu0 %v3982
      %4164 = vmatmul.mubr.f32.gmra.mrb[0].mxu0 %v3981
      %v4165 = vpop.f32.mrb[0].mxu0
      %v4166 = vadd.f32 0.0, %v4165
      %v4167 = vpop.f32.mrb[0].mxu0
      %4168 = vmatprep.mubr.f32.mxu0 %v3984
      %4169 = vmatmul.mubr.f32.gmra.mrb[0].mxu0 %v3983
      %v4170 = vpop.f32.mrb[0].mxu0
      %v4171 = vadd.f32 0.0, %v4170
      %v4172 = vpop.f32.mrb[0].mxu0
      %4173 = vmatprep.mubr.f32.mxu0 %v3986
      %4174 = vmatmul.mubr.f32.gmra.mrb[0].mxu0 %v3985
      %v4175 = vpop.f32.mrb[0].mxu0
      %v4176 = vadd.f32 0.0, %v4175
      %v4177 = vpop.f32.mrb[0].mxu0
      %4178 = vmatprep.mubr.f32.mxu0 %v3988
      %4179 = vmatmul.mubr.f32.gmra.mrb[0].mxu0 %v3987
      %v4180 = vpop.f32.mrb[0].mxu0
      %v4181 = vadd.f32 0.0, %v4180
      %v4182 = vpop.f32.mrb[0].mxu0
      %4183 = vmatprep.mubr.f32.mxu0 %v3990
      %4184 = vmatmul.mubr.f32.gmra.mrb[0].mxu0 %v3989
      %v4185 = vpop.f32.mrb[0].mxu0
      %v4186 = vadd.f32 0.0, %v4185
      %v4187 = vpop.f32.mrb[0].mxu0
      %4188 = vmatprep.mubr.f32.mxu0 %v3992
      %4189 = vmatmul.mubr.f32.gmra.mrb[0].mxu0 %v3991
      %v4190 = vpop.f32.mrb[0].mxu0
      %v4191 = vadd.f32 0.0, %v4190
      %v4192 = vpop.f32.mrb[0].mxu0
      %4193 = vmatprep.mubr.f32.mxu0 %v3994
      %4194 = vmatmul.mubr.f32.gmra.mrb[0].mxu0 %v3993
      %v4195 = vpop.f32.mrb[0].mxu0
      %v4196 = vadd.f32 0.0, %v4195
      %v4197 = vpop.f32.mrb[0].mxu0
      %4198 = vmatprep.mubr.f32.mxu0 %v3996
      %4199 = vmatmul.mubr.f32.gmra.mrb[0].mxu0 %v3995
      %v4200 = vpop.f32.mrb[0].mxu0
      %v4201 = vadd.f32 0.0, %v4200
      %v4202 = vpop.f32.mrb[0].mxu0
      %4203 = vmatprep.mubr.f32.mxu0 %v3998
      %4204 = vmatmul.mubr.f32.gmra.mrb[0].mxu0 %v3997
      %v4205 = vpop.f32.mrb[0].mxu0
      %v4206 = vadd.f32 0.0, %v4205
      %v4207 = vpop.f32.mrb[0].mxu0
      %4208 = vmatprep.mubr.f32.mxu0 %v4000
      %4209 = vmatmul.mubr.f32.gmra.mrb[0].mxu0 %v3999
      %v4210 = vpop.f32.mrb[0].mxu0
      %v4211 = vadd.f32 0.0, %v4210
      %v4212 = vpop.f32.mrb[0].mxu0
      %4213 = vmatprep.mubr.f32.mxu0 %v4002
      %4214 = vmatmul.mubr.f32.gmra.mrb[0].mxu0 %v4001
      %v4215 = vpop.f32.mrb[0].mxu0
      %v4216 = vadd.f32 0.0, %v4215
      %v4217 = vpop.f32.mrb[0].mxu0
      %4218 = vmatprep.mubr.f32.mxu0 %v4004
      %4219 = vmatmul.mubr.f32.gmra.mrb[0].mxu0 %v4003
      %v4220 = vpop.f32.mrb[0].mxu0
      %v4221 = vadd.f32 0.0, %v4220
      %v4222 = vpop.f32.mrb[0].mxu0
      %4223 = vmatprep.mubr.f32.mxu0 %v4006
      %4224 = vmatmul.mubr.f32.gmra.mrb[0].mxu0 %v4005
      %v4225 = vpop.f32.mrb[0].mxu0
      %v4226 = vadd.f32 0.0, %v4225
      %v4227 = vpop.f32.mrb[0].mxu0
      %4228 = vmatprep.mubr.f32.mxu0 %v4008
      %4229 = vmatmul.mubr.f32.gmra.mrb[0].mxu0 %v4007
      %v4230 = vpop.f32.mrb[0].mxu0
      %v4231 = vadd.f32 0.0, %v4230
      %v4232 = vpop.f32.mrb[0].mxu0
      %4233 = vdwg.mxu0
      %4234 = vxpose.xlu0.b32.start [1/16] %v4076, 128
      %4235 = vxpose.xlu0.b32.cont [2/16] %v4081, 128
      %4236 = vxpose.xlu0.b32.cont [3/16] %v4086, 128
      %4237 = vxpose.xlu0.b32.cont [4/16] %v4091, 128
      %4238 = vxpose.xlu0.b32.cont [5/16] %v4096, 128
      %4239 = vxpose.xlu0.b32.cont [6/16] %v4101, 128
      %4240 = vxpose.xlu0.b32.cont [7/16] %v4106, 128
      %4241 = vxpose.xlu0.b32.cont [8/16] %v4111, 128
      %4242 = vxpose.xlu0.b32.cont [9/16] %v4116, 128
      %4243 = vxpose.xlu0.b32.cont [10/16] %v4121, 128
      %4244 = vxpose.xlu0.b32.cont [11/16] %v4126, 128
      %4245 = vxpose.xlu0.b32.cont [12/16] %v4131, 128
      %4246 = vxpose.xlu0.b32.cont [13/16] %v4136, 128
      %4247 = vxpose.xlu0.b32.cont [14/16] %v4141, 128
      %4248 = vxpose.xlu0.b32.cont [15/16] %v4146, 128
      %4249 = vxpose.xlu0.b32.end [16/16] %v4151, 128
      %v4250 = vpop.trf.xlu0
      %v4251 = vpop.trf.xlu0
      %v4252 = vpop.trf.xlu0
      %v4253 = vpop.trf.xlu0
      %v4254 = vpop.trf.xlu0
      %v4255 = vpop.trf.xlu0
      %v4256 = vpop.trf.xlu0
      %v4257 = vpop.trf.xlu0
      %v4258 = vpop.trf.xlu0
      %v4259 = vpop.trf.xlu0
      %v4260 = vpop.trf.xlu0
      %v4261 = vpop.trf.xlu0
      %v4262 = vpop.trf.xlu0
      %v4263 = vpop.trf.xlu0
      %v4264 = vpop.trf.xlu0
      %v4265 = vpop.trf.xlu0
      %4266 = vxpose.xlu0.b32.start [1/16] %v4156, 128
      %4267 = vxpose.xlu0.b32.cont [2/16] %v4161, 128
      %4268 = vxpose.xlu0.b32.cont [3/16] %v4166, 128
      %4269 = vxpose.xlu0.b32.cont [4/16] %v4171, 128
      %4270 = vxpose.xlu0.b32.cont [5/16] %v4176, 128
      %4271 = vxpose.xlu0.b32.cont [6/16] %v4181, 128
      %4272 = vxpose.xlu0.b32.cont [7/16] %v4186, 128
      %4273 = vxpose.xlu0.b32.cont [8/16] %v4191, 128
      %4274 = vxpose.xlu0.b32.cont [9/16] %v4196, 128
      %4275 = vxpose.xlu0.b32.cont [10/16] %v4201, 128
      %4276 = vxpose.xlu0.b32.cont [11/16] %v4206, 128
      %4277 = vxpose.xlu0.b32.cont [12/16] %v4211, 128
      %4278 = vxpose.xlu0.b32.cont [13/16] %v4216, 128
      %4279 = vxpose.xlu0.b32.cont [14/16] %v4221, 128
      %4280 = vxpose.xlu0.b32.cont [15/16] %v4226, 128
      %4281 = vxpose.xlu0.b32.end [16/16] %v4231, 128
      %v4282 = vpop.trf.xlu0
      %v4283 = vpop.trf.xlu0
      %v4284 = vpop.trf.xlu0
      %v4285 = vpop.trf.xlu0
      %v4286 = vpop.trf.xlu0
      %v4287 = vpop.trf.xlu0
      %v4288 = vpop.trf.xlu0
      %v4289 = vpop.trf.xlu0
      %v4290 = vpop.trf.xlu0
      %v4291 = vpop.trf.xlu0
      %v4292 = vpop.trf.xlu0
      %v4293 = vpop.trf.xlu0
      %v4294 = vpop.trf.xlu0
      %v4295 = vpop.trf.xlu0
      %v4296 = vpop.trf.xlu0
      %v4297 = vpop.trf.xlu0
      %4298 = vst [vmem:[%s170] sm:$0xff] %v4250
      %4299 = vst [vmem:[%s170 + $0x8] sm:$0xff] %v4282
      %4300 = vst [vmem:[%s170 + $0x10] sm:$0xff] %v4251
      %4301 = vst [vmem:[%s170 + $0x18] sm:$0xff] %v4283
      %p4302 = scmp.lt.s32.totalorder %s14, 1
      %s4303 = scalar_select %p4302, %s14, 1
      %s4304 = smul.addr %s4303, 4
      %s4305 = smul.addr %s4304, 8
      %s4306 = scalar_lea.vmem %s3, %s4305
      // Predicated region
      $region33: #{local_utrans_axial_attention.1} parent=31 // pred_check
        %p4307 = pneg %p100
      $region34: #{local_utrans_axial_attention.1} parent=31 // pred_check_branch
        %4309 = sbr.rel (%p4307) target = $region36
      $region35: #{local_utrans_axial_attention.1} parent=31 // pred_region
        _
      $region36: #{local_utrans_axial_attention.1} parent=31 // pred_fallthru
        _
    $region32: #{local_utrans_axial_attention.1} parent=5 // pred_fallthru
      _
    %p4310 = scmp.le.s32.totalorder 2, %s9
    // Predicated region
    $region37: #{local_utrans_axial_attention.1} parent=5 // pred_check
      %p4311 = pneg %p4310
    $region38: #{local_utrans_axial_attention.1} parent=5 // pred_check_branch
      %4313 = sbr.rel (%p4311) target = $region40
    $region39: #{local_utrans_axial_attention.1} parent=5 // pred_region
      %s4314 = ssub.s32 %s9, 2
      // Predicated region
      $region41: #{local_utrans_axial_attention.1} parent=39 // pred_check
        %p4315 = pneg %p106
      $region42: #{local_utrans_axial_attention.1} parent=39 // pred_check_branch
        %4317 = sbr.rel (%p4315) target = $region44
      $region43: #{local_utrans_axial_attention.1} parent=39 // pred_region
        %p4318 = scmp.lt.s32.totalorder %s15, 1
        %s4319 = scalar_select %p4318, %s15, 1
        %s4320 = smul.addr %s4319, 4
        %s4321 = smul.addr %s4320, 8
        %s4322 = scalar_lea.vmem %s3, %s4321
      $region44: #{local_utrans_axial_attention.1} parent=39 // pred_fallthru
        _
    $region40: #{local_utrans_axial_attention.1} parent=5 // pred_fallthru
      _
  $region6: #{local_utrans_axial_attention.1} parent=0 // loop_footer
    %s13 = sadd.s32 1, %s9
  $region7: #{local_utrans_axial_attention.1} parent=0 // loop_footer_branch
    %8 = sbr.rel target = $region3
  $region8: #{local_utrans_axial_attention.1} parent=0 // loop_exit
    _

</llo_original>
